<compile_context>
chip_gen: v7x
topology: tpu7x:2x2x1
jax: 0.10.0
libtpu: 0.0.40
codegen_flags: <defaults>
</compile_context>

<pallas_src>
import functools

import jax
import jax.numpy as jnp
from jax.experimental import pallas as pl
from jax.experimental.pallas import tpu as pltpu


LANE = 128   # TPU lane width; channel dims are zero-padded to multiples of this


def _round_up(x, m):
    return ((x + m - 1) // m) * m


def _pad_to(a, shape):
    return jnp.pad(a, [(0, t - s) for s, t in zip(a.shape, shape)])


# ----------------------------- fused Pallas kernel --------------------------

def _bottleneck_kernel(x_ref, w1_ref, b1_ref, w2_ref, b2_ref, w3_ref, b3_ref,
                       *rest, h, w, proj):
    """Whole Bottleneck block for one batch image (NHWC, channels lane-padded).

    x_ref : (1, H, W, Cin)      bf16 input image
    w1/w3/ws : (Cin, Cout)      bf16, BN scale pre-folded
    w2    : (3, 3, C1, C1)      bf16, BN scale pre-folded
    b*    : (1, Cout)           f32 folded BN bias
    o_ref : (1, H, W, Cexp)     f32 output image
    """
    if proj:
        ws_ref, bs_ref, o_ref = rest
    else:
        (o_ref,) = rest

    cin = x_ref.shape[-1]
    c1 = w1_ref.shape[-1]
    c3 = w3_ref.shape[-1]
    hw = h * w

    x2d = x_ref[...].reshape(hw, cin)                       # (H*W, Cin) bf16

    # ---- conv1 (1x1) + bn1 + relu ------------------------------------------
    y1 = jnp.dot(x2d, w1_ref[...], preferred_element_type=jnp.float32)
    y1 = jnp.maximum(y1 + b1_ref[...], 0.0).astype(jnp.bfloat16)

    # ---- conv2 (3x3, pad=1) + bn2 + relu -----------------------------------
    img = y1.reshape(h, w, c1)
    zrow = jnp.zeros((1, w, c1), jnp.bfloat16)
    img = jnp.concatenate([zrow, img, zrow], axis=0)        # (H+2, W,   C1)
    zcol = jnp.zeros((h + 2, 1, c1), jnp.bfloat16)
    img = jnp.concatenate([zcol, img, zcol], axis=1)        # (H+2, W+2, C1)

    acc = jnp.zeros((hw, c1), jnp.float32)
    for dh in range(3):                                     # statically unrolled
        for dw in range(3):
            tap = img[dh:dh + h, dw:dw + w, :].reshape(hw, c1)
            acc = acc + jnp.dot(tap, w2_ref[dh, dw],
                                preferred_element_type=jnp.float32)
    y2 = jnp.maximum(acc + b2_ref[...], 0.0).astype(jnp.bfloat16)

    # ---- conv3 (1x1) + bn3 --------------------------------------------------
    y3 = jnp.dot(y2, w3_ref[...], preferred_element_type=jnp.float32)
    y3 = y3 + b3_ref[...]

    # ---- shortcut + residual add + relu ------------------------------------
    if proj:
        sc = jnp.dot(x2d, ws_ref[...], preferred_element_type=jnp.float32)
        sc = sc + bs_ref[...]
    else:
        sc = x2d.astype(jnp.float32)                        # Cin_p == Cexp_p here

    y = jnp.maximum(y3 + sc, 0.0)
    o_ref[...] = y.reshape(1, h, w, c3).astype(o_ref.dtype)


# ------------------------------ parameter prep ------------------------------

def fold_bn(gamma, beta, mean, var, eps=1e-5):
    scale = gamma / jnp.sqrt(var + eps)
    bias = beta - mean * scale
    return scale, bias


def init_params(key, in_planes, planes, stride, expansion=4):
    cexp = expansion * planes
    keys = jax.random.split(key, 8)

    def bn_params(k, c):
        k1, k2, k3, k4 = jax.random.split(k, 4)
        gamma = 1.0 + 0.1 * jax.random.normal(k1, (c,), jnp.float32)
        beta = 0.1 * jax.random.normal(k2, (c,), jnp.float32)
        mean = 0.1 * jax.random.normal(k3, (c,), jnp.float32)
        var = jnp.abs(1.0 + 0.1 * jax.random.normal(k4, (c,), jnp.float32))
        return fold_bn(gamma, beta, mean, var)

    p = {}
    p['w1'] = 0.2 * jax.random.normal(keys[0], (in_planes, planes), jnp.float32)
    p['s1'], p['b1'] = bn_params(keys[1], planes)
    p['w2'] = 0.2 * jax.random.normal(keys[2], (3, 3, planes, planes), jnp.float32)
    p['s2'], p['b2'] = bn_params(keys[3], planes)
    p['w3'] = 0.2 * jax.random.normal(keys[4], (planes, cexp), jnp.float32)
    p['s3'], p['b3'] = bn_params(keys[5], cexp)
    if stride != 1 or in_planes != cexp:
        p['ws'] = 0.2 * jax.random.normal(keys[6], (in_planes, cexp), jnp.float32)
        p['ss'], p['bs'] = bn_params(keys[7], cexp)
    return p


def _prep_pointwise(w, scale, bias, cin_p, cout_p):
    wf = _pad_to(w * scale[None, :], (cin_p, cout_p)).astype(jnp.bfloat16)
    bf = _pad_to(bias.reshape(1, -1), (1, cout_p)).astype(jnp.float32)
    return wf, bf


def _prep_conv3x3(w, scale, bias, cin_p, cout_p):
    wf = _pad_to(w * scale[None, None, None, :],
                 (3, 3, cin_p, cout_p)).astype(jnp.bfloat16)
    bf = _pad_to(bias.reshape(1, -1), (1, cout_p)).astype(jnp.float32)
    return wf, bf


# ------------------------------ Bottleneck wrapper --------------------------

def bottleneck_forward(x_nchw, params, *, stride=1):
    if stride != 1:
        # The original module strides both conv1 and conv2 while the shortcut
        # strides once, so its residual add only works for stride == 1.
        raise ValueError("Bottleneck residual add is only shape-consistent "
                         "for stride == 1 (as in the original module)")

    x = jnp.transpose(x_nchw, (0, 2, 3, 1)).astype(jnp.float32)   # NCHW -> NHWC
    n, h, wd, cin = x.shape
    planes = params['w1'].shape[1]
    cexp = params['w3'].shape[1]
    cin_p = _round_up(cin, LANE)
    c1_p = _round_up(planes, LANE)
    c3_p = _round_up(cexp, LANE)
    proj = 'ws' in params

    # channel-pad to lane width; bf16 for the matmul path
    xp = _pad_to(x, (n, h, wd, cin_p)).astype(jnp.bfloat16)

    w1p, b1p = _prep_pointwise(params['w1'], params['s1'], params['b1'], cin_p, c1_p)
    w2p, b2p = _prep_conv3x3(params['w2'], params['s2'], params['b2'], c1_p, c1_p)
    w3p, b3p = _prep_pointwise(params['w3'], params['s3'], params['b3'], c1_p, c3_p)

    in_specs = [
        pl.BlockSpec((1, h, wd, cin_p), lambda i: (i, 0, 0, 0)),   # x (streamed)
        pl.BlockSpec((cin_p, c1_p), lambda i: (0, 0)),             # w1 (resident)
        pl.BlockSpec((1, c1_p), lambda i: (0, 0)),                 # b1
        pl.BlockSpec((3, 3, c1_p, c1_p), lambda i: (0, 0, 0, 0)),  # w2
        pl.BlockSpec((1, c1_p), lambda i: (0, 0)),                 # b2
        pl.BlockSpec((c1_p, c3_p), lambda i: (0, 0)),              # w3
        pl.BlockSpec((1, c3_p), lambda i: (0, 0)),                 # b3
    ]
    args = [xp, w1p, b1p, w2p, b2p, w3p, b3p]
    if proj:
        wsp, bsp = _prep_pointwise(params['ws'], params['ss'], params['bs'],
                                   cin_p, c3_p)
        in_specs += [pl.BlockSpec((cin_p, c3_p), lambda i: (0, 0)),
                     pl.BlockSpec((1, c3_p), lambda i: (0, 0))]
        args += [wsp, bsp]

    kernel = functools.partial(_bottleneck_kernel, h=h, w=wd, proj=proj)
    out = pl.pallas_call(
        kernel,
        out_shape=jax.ShapeDtypeStruct((n, h, wd, c3_p), jnp.float32),
        grid=(n,),
        in_specs=in_specs,
        out_specs=pl.BlockSpec((1, h, wd, c3_p), lambda i: (i, 0, 0, 0)),
        compiler_params=pltpu.CompilerParams(
            dimension_semantics=("parallel",),
            vmem_limit_bytes=32 * 1024 * 1024),
    )(*args)

    y = out[..., :cexp]
    return jnp.transpose(y, (0, 3, 1, 2))                          # NHWC -> NCHW


# ----------------------------- pure-JAX reference ---------------------------

def _conv_nhwc(x, w_hwio, stride, padding):
    return jax.lax.conv_general_dilated(
        x, w_hwio, (stride, stride), padding,
        dimension_numbers=('NHWC', 'HWIO', 'NHWC'))


def bottleneck_reference(x_nchw, params, *, stride=1):
    x = jnp.transpose(x_nchw, (0, 2, 3, 1)).astype(jnp.float32)
    planes = params['w1'].shape[1]
    cexp = params['w3'].shape[1]
    cin = x.shape[-1]

    out = _conv_nhwc(x, params['w1'].reshape(1, 1, cin, planes), stride, 'VALID')
    out = jnp.maximum(out * params['s1'] + params['b1'], 0.0)
    out = _conv_nhwc(out, params['w2'], stride, ((1, 1), (1, 1)))
    out = jnp.maximum(out * params['s2'] + params['b2'], 0.0)
    out = _conv_nhwc(out, params['w3'].reshape(1, 1, planes, cexp), 1, 'VALID')
    out = out * params['s3'] + params['b3']
    if 'ws' in params:
        sc = _conv_nhwc(x, params['ws'].reshape(1, 1, cin, cexp), stride, 'VALID')
        sc = sc * params['ss'] + params['bs']
    else:
        sc = x
    out = jnp.maximum(out + sc, 0.0)
    return jnp.transpose(out, (0, 3, 1, 2))


# --------------------------------- main -------------------------------------

if __name__ == "__main__":
    key = jax.random.PRNGKey(0)
    configs = [
        # (batch, in_planes, planes, spatial, stride)
        (2, 4, 4, 16, 1),    # projection shortcut (in_planes != 4*planes)
        (2, 16, 4, 16, 1),   # identity shortcut   (in_planes == 4*planes)
    ]
    for batch, in_planes, planes, spatial, stride in configs:
        key, k_x, k_p = jax.random.split(key, 3)
        x = jax.random.normal(k_x, (batch, in_planes, spatial, spatial),
                              jnp.float32)
        params = init_params(k_p, in_planes, planes, stride)

        out = jax.block_until_ready(bottleneck_forward(x, params, stride=stride))
        ref = jax.block_until_ready(bottleneck_reference(x, params, stride=stride))

        assert out.shape == (batch, 4 * planes, spatial, spatial), out.shape
        max_err = float(jnp.max(jnp.abs(out - ref)))
        # bf16 matmul inputs (f32 accumulation) -> loosened tolerance vs f32 ref
        assert jnp.allclose(out, ref, atol=5e-2, rtol=5e-2), max_err

    print("KERNEL_OK")
</pallas_src>

<mosaic_0001>
module attributes {stable_mosaic.version = 11 : i64} {
  func.func @_bottleneck_kernel(%arg0: i32, %arg1: memref<1x16x16x128xbf16, #tpu.memory_space<vmem>>, %arg2: memref<128x128xbf16, #tpu.memory_space<vmem>>, %arg3: memref<1x128xf32, #tpu.memory_space<vmem>>, %arg4: memref<3x3x128x128xbf16, #tpu.memory_space<vmem>>, %arg5: memref<1x128xf32, #tpu.memory_space<vmem>>, %arg6: memref<128x128xbf16, #tpu.memory_space<vmem>>, %arg7: memref<1x128xf32, #tpu.memory_space<vmem>>, %arg8: memref<128x128xbf16, #tpu.memory_space<vmem>>, %arg9: memref<1x128xf32, #tpu.memory_space<vmem>>, %arg10: memref<1x16x16x128xf32, #tpu.memory_space<vmem>>) attributes {dimension_semantics = [#tpu.dimension_semantics<parallel>], iteration_bounds = array<i64: 2>, scalar_prefetch = 0 : i64, scratch_operands = 0 : i64, tpu.core_type = #tpu.core_type<tc>, window_params = [{transform_indices = @transform_0, window_bounds = array<i64: 1, 16, 16, 128>}, {pipeline_mode = #tpu.pipeline_mode<synchronous>, transform_indices = @transform_1, window_bounds = array<i64: 128, 128>}, {pipeline_mode = #tpu.pipeline_mode<synchronous>, transform_indices = @transform_2, window_bounds = array<i64: 1, 128>}, {pipeline_mode = #tpu.pipeline_mode<synchronous>, transform_indices = @transform_3, window_bounds = array<i64: 3, 3, 128, 128>}, {pipeline_mode = #tpu.pipeline_mode<synchronous>, transform_indices = @transform_4, window_bounds = array<i64: 1, 128>}, {pipeline_mode = #tpu.pipeline_mode<synchronous>, transform_indices = @transform_5, window_bounds = array<i64: 128, 128>}, {pipeline_mode = #tpu.pipeline_mode<synchronous>, transform_indices = @transform_6, window_bounds = array<i64: 1, 128>}, {pipeline_mode = #tpu.pipeline_mode<synchronous>, transform_indices = @transform_7, window_bounds = array<i64: 128, 128>}, {pipeline_mode = #tpu.pipeline_mode<synchronous>, transform_indices = @transform_8, window_bounds = array<i64: 1, 128>}, {transform_indices = @transform_9, window_bounds = array<i64: 1, 16, 16, 128>}]} {
    %c0 = arith.constant 0 : index
    %c0_0 = arith.constant 0 : index
    %c0_1 = arith.constant 0 : index
    %c0_2 = arith.constant 0 : index
    %0 = vector.load %arg1[%c0, %c0_0, %c0_1, %c0_2] : memref<1x16x16x128xbf16, #tpu.memory_space<vmem>>, vector<1x16x16x128xbf16>
    %1 = vector.shape_cast %0 : vector<1x16x16x128xbf16> to vector<256x128xbf16>
    %c0_3 = arith.constant 0 : index
    %c0_4 = arith.constant 0 : index
    %2 = vector.load %arg2[%c0_3, %c0_4] : memref<128x128xbf16, #tpu.memory_space<vmem>>, vector<128x128xbf16>
    %cst = arith.constant dense<0.000000e+00> : vector<256x128xf32>
    %3 = tpu.matmul %1, %2, %cst {dimension_numbers = #tpu.dot_dimension_numbers<[1], [0], [0], [1], [0, 0, 1, 1], [], []>} : vector<256x128xbf16>, vector<128x128xbf16>, vector<256x128xf32> -> vector<256x128xf32>
    %c0_5 = arith.constant 0 : index
    %c0_6 = arith.constant 0 : index
    %4 = vector.load %arg3[%c0_5, %c0_6] : memref<1x128xf32, #tpu.memory_space<vmem>>, vector<1x128xf32>
    %5 = vector.broadcast %4 : vector<1x128xf32> to vector<256x128xf32>
    %6 = arith.addf %3, %5 : vector<256x128xf32>
    %cst_7 = arith.constant 0.000000e+00 : f32
    %7 = vector.broadcast %cst_7 : f32 to vector<256x128xf32>
    %8 = arith.maximumf %6, %7 : vector<256x128xf32>
    %9 = arith.truncf %8 : vector<256x128xf32> to vector<256x128xbf16>
    %10 = vector.shape_cast %9 : vector<256x128xbf16> to vector<16x16x128xbf16>
    %cst_8 = arith.constant 0.000000e+00 : bf16
    %11 = vector.broadcast %cst_8 : bf16 to vector<1x16x128xbf16>
    %12 = tpu.concatenate %11, %10, %11 in 0 : vector<1x16x128xbf16>, vector<16x16x128xbf16>, vector<1x16x128xbf16> -> vector<18x16x128xbf16>
    %cst_9 = arith.constant 0.000000e+00 : bf16
    %13 = vector.broadcast %cst_9 : bf16 to vector<18x1x128xbf16>
    %14 = tpu.concatenate %13, %12, %13 in 1 : vector<18x1x128xbf16>, vector<18x16x128xbf16>, vector<18x1x128xbf16> -> vector<18x18x128xbf16>
    %cst_10 = arith.constant 0.000000e+00 : f32
    %15 = vector.broadcast %cst_10 : f32 to vector<256x128xf32>
    %16 = vector.extract_strided_slice %14 {offsets = [0, 0, 0], sizes = [16, 16, 128], strides = [1, 1, 1]} : vector<18x18x128xbf16> to vector<16x16x128xbf16>
    %17 = vector.shape_cast %16 : vector<16x16x128xbf16> to vector<256x128xbf16>
    %c0_11 = arith.constant 0 : index
    %c0_12 = arith.constant 0 : index
    %c0_13 = arith.constant 0 : index
    %c0_14 = arith.constant 0 : index
    %18 = vector.load %arg4[%c0_11, %c0_12, %c0_13, %c0_14] : memref<3x3x128x128xbf16, #tpu.memory_space<vmem>>, vector<1x1x128x128xbf16>
    %19 = vector.shape_cast %18 : vector<1x1x128x128xbf16> to vector<128x128xbf16>
    %cst_15 = arith.constant dense<0.000000e+00> : vector<256x128xf32>
    %20 = tpu.matmul %17, %19, %cst_15 {dimension_numbers = #tpu.dot_dimension_numbers<[1], [0], [0], [1], [0, 0, 1, 1], [], []>} : vector<256x128xbf16>, vector<128x128xbf16>, vector<256x128xf32> -> vector<256x128xf32>
    %21 = arith.addf %15, %20 : vector<256x128xf32>
    %22 = vector.extract_strided_slice %14 {offsets = [0, 1, 0], sizes = [16, 16, 128], strides = [1, 1, 1]} : vector<18x18x128xbf16> to vector<16x16x128xbf16>
    %23 = vector.shape_cast %22 : vector<16x16x128xbf16> to vector<256x128xbf16>
    %c0_16 = arith.constant 0 : index
    %c1 = arith.constant 1 : index
    %c0_17 = arith.constant 0 : index
    %c0_18 = arith.constant 0 : index
    %24 = vector.load %arg4[%c0_16, %c1, %c0_17, %c0_18] : memref<3x3x128x128xbf16, #tpu.memory_space<vmem>>, vector<1x1x128x128xbf16>
    %25 = vector.shape_cast %24 : vector<1x1x128x128xbf16> to vector<128x128xbf16>
    %cst_19 = arith.constant dense<0.000000e+00> : vector<256x128xf32>
    %26 = tpu.matmul %23, %25, %cst_19 {dimension_numbers = #tpu.dot_dimension_numbers<[1], [0], [0], [1], [0, 0, 1, 1], [], []>} : vector<256x128xbf16>, vector<128x128xbf16>, vector<256x128xf32> -> vector<256x128xf32>
    %27 = arith.addf %21, %26 : vector<256x128xf32>
    %28 = vector.extract_strided_slice %14 {offsets = [0, 2, 0], sizes = [16, 16, 128], strides = [1, 1, 1]} : vector<18x18x128xbf16> to vector<16x16x128xbf16>
    %29 = vector.shape_cast %28 : vector<16x16x128xbf16> to vector<256x128xbf16>
    %c0_20 = arith.constant 0 : index
    %c2 = arith.constant 2 : index
    %c0_21 = arith.constant 0 : index
    %c0_22 = arith.constant 0 : index
    %30 = vector.load %arg4[%c0_20, %c2, %c0_21, %c0_22] : memref<3x3x128x128xbf16, #tpu.memory_space<vmem>>, vector<1x1x128x128xbf16>
    %31 = vector.shape_cast %30 : vector<1x1x128x128xbf16> to vector<128x128xbf16>
    %cst_23 = arith.constant dense<0.000000e+00> : vector<256x128xf32>
    %32 = tpu.matmul %29, %31, %cst_23 {dimension_numbers = #tpu.dot_dimension_numbers<[1], [0], [0], [1], [0, 0, 1, 1], [], []>} : vector<256x128xbf16>, vector<128x128xbf16>, vector<256x128xf32> -> vector<256x128xf32>
    %33 = arith.addf %27, %32 : vector<256x128xf32>
    %34 = vector.extract_strided_slice %14 {offsets = [1, 0, 0], sizes = [16, 16, 128], strides = [1, 1, 1]} : vector<18x18x128xbf16> to vector<16x16x128xbf16>
    %35 = vector.shape_cast %34 : vector<16x16x128xbf16> to vector<256x128xbf16>
    %c1_24 = arith.constant 1 : index
    %c0_25 = arith.constant 0 : index
    %c0_26 = arith.constant 0 : index
    %c0_27 = arith.constant 0 : index
    %36 = vector.load %arg4[%c1_24, %c0_25, %c0_26, %c0_27] : memref<3x3x128x128xbf16, #tpu.memory_space<vmem>>, vector<1x1x128x128xbf16>
    %37 = vector.shape_cast %36 : vector<1x1x128x128xbf16> to vector<128x128xbf16>
    %cst_28 = arith.constant dense<0.000000e+00> : vector<256x128xf32>
    %38 = tpu.matmul %35, %37, %cst_28 {dimension_numbers = #tpu.dot_dimension_numbers<[1], [0], [0], [1], [0, 0, 1, 1], [], []>} : vector<256x128xbf16>, vector<128x128xbf16>, vector<256x128xf32> -> vector<256x128xf32>
    %39 = arith.addf %33, %38 : vector<256x128xf32>
    %40 = vector.extract_strided_slice %14 {offsets = [1, 1, 0], sizes = [16, 16, 128], strides = [1, 1, 1]} : vector<18x18x128xbf16> to vector<16x16x128xbf16>
    %41 = vector.shape_cast %40 : vector<16x16x128xbf16> to vector<256x128xbf16>
    %c1_29 = arith.constant 1 : index
    %c1_30 = arith.constant 1 : index
    %c0_31 = arith.constant 0 : index
    %c0_32 = arith.constant 0 : index
    %42 = vector.load %arg4[%c1_29, %c1_30, %c0_31, %c0_32] : memref<3x3x128x128xbf16, #tpu.memory_space<vmem>>, vector<1x1x128x128xbf16>
    %43 = vector.shape_cast %42 : vector<1x1x128x128xbf16> to vector<128x128xbf16>
    %cst_33 = arith.constant dense<0.000000e+00> : vector<256x128xf32>
    %44 = tpu.matmul %41, %43, %cst_33 {dimension_numbers = #tpu.dot_dimension_numbers<[1], [0], [0], [1], [0, 0, 1, 1], [], []>} : vector<256x128xbf16>, vector<128x128xbf16>, vector<256x128xf32> -> vector<256x128xf32>
    %45 = arith.addf %39, %44 : vector<256x128xf32>
    %46 = vector.extract_strided_slice %14 {offsets = [1, 2, 0], sizes = [16, 16, 128], strides = [1, 1, 1]} : vector<18x18x128xbf16> to vector<16x16x128xbf16>
    %47 = vector.shape_cast %46 : vector<16x16x128xbf16> to vector<256x128xbf16>
    %c1_34 = arith.constant 1 : index
    %c2_35 = arith.constant 2 : index
    %c0_36 = arith.constant 0 : index
    %c0_37 = arith.constant 0 : index
    %48 = vector.load %arg4[%c1_34, %c2_35, %c0_36, %c0_37] : memref<3x3x128x128xbf16, #tpu.memory_space<vmem>>, vector<1x1x128x128xbf16>
    %49 = vector.shape_cast %48 : vector<1x1x128x128xbf16> to vector<128x128xbf16>
    %cst_38 = arith.constant dense<0.000000e+00> : vector<256x128xf32>
    %50 = tpu.matmul %47, %49, %cst_38 {dimension_numbers = #tpu.dot_dimension_numbers<[1], [0], [0], [1], [0, 0, 1, 1], [], []>} : vector<256x128xbf16>, vector<128x128xbf16>, vector<256x128xf32> -> vector<256x128xf32>
    %51 = arith.addf %45, %50 : vector<256x128xf32>
    %52 = vector.extract_strided_slice %14 {offsets = [2, 0, 0], sizes = [16, 16, 128], strides = [1, 1, 1]} : vector<18x18x128xbf16> to vector<16x16x128xbf16>
    %53 = vector.shape_cast %52 : vector<16x16x128xbf16> to vector<256x128xbf16>
    %c2_39 = arith.constant 2 : index
    %c0_40 = arith.constant 0 : index
    %c0_41 = arith.constant 0 : index
    %c0_42 = arith.constant 0 : index
    %54 = vector.load %arg4[%c2_39, %c0_40, %c0_41, %c0_42] : memref<3x3x128x128xbf16, #tpu.memory_space<vmem>>, vector<1x1x128x128xbf16>
    %55 = vector.shape_cast %54 : vector<1x1x128x128xbf16> to vector<128x128xbf16>
    %cst_43 = arith.constant dense<0.000000e+00> : vector<256x128xf32>
    %56 = tpu.matmul %53, %55, %cst_43 {dimension_numbers = #tpu.dot_dimension_numbers<[1], [0], [0], [1], [0, 0, 1, 1], [], []>} : vector<256x128xbf16>, vector<128x128xbf16>, vector<256x128xf32> -> vector<256x128xf32>
    %57 = arith.addf %51, %56 : vector<256x128xf32>
    %58 = vector.extract_strided_slice %14 {offsets = [2, 1, 0], sizes = [16, 16, 128], strides = [1, 1, 1]} : vector<18x18x128xbf16> to vector<16x16x128xbf16>
    %59 = vector.shape_cast %58 : vector<16x16x128xbf16> to vector<256x128xbf16>
    %c2_44 = arith.constant 2 : index
    %c1_45 = arith.constant 1 : index
    %c0_46 = arith.constant 0 : index
    %c0_47 = arith.constant 0 : index
    %60 = vector.load %arg4[%c2_44, %c1_45, %c0_46, %c0_47] : memref<3x3x128x128xbf16, #tpu.memory_space<vmem>>, vector<1x1x128x128xbf16>
    %61 = vector.shape_cast %60 : vector<1x1x128x128xbf16> to vector<128x128xbf16>
    %cst_48 = arith.constant dense<0.000000e+00> : vector<256x128xf32>
    %62 = tpu.matmul %59, %61, %cst_48 {dimension_numbers = #tpu.dot_dimension_numbers<[1], [0], [0], [1], [0, 0, 1, 1], [], []>} : vector<256x128xbf16>, vector<128x128xbf16>, vector<256x128xf32> -> vector<256x128xf32>
    %63 = arith.addf %57, %62 : vector<256x128xf32>
    %64 = vector.extract_strided_slice %14 {offsets = [2, 2, 0], sizes = [16, 16, 128], strides = [1, 1, 1]} : vector<18x18x128xbf16> to vector<16x16x128xbf16>
    %65 = vector.shape_cast %64 : vector<16x16x128xbf16> to vector<256x128xbf16>
    %c2_49 = arith.constant 2 : index
    %c2_50 = arith.constant 2 : index
    %c0_51 = arith.constant 0 : index
    %c0_52 = arith.constant 0 : index
    %66 = vector.load %arg4[%c2_49, %c2_50, %c0_51, %c0_52] : memref<3x3x128x128xbf16, #tpu.memory_space<vmem>>, vector<1x1x128x128xbf16>
    %67 = vector.shape_cast %66 : vector<1x1x128x128xbf16> to vector<128x128xbf16>
    %cst_53 = arith.constant dense<0.000000e+00> : vector<256x128xf32>
    %68 = tpu.matmul %65, %67, %cst_53 {dimension_numbers = #tpu.dot_dimension_numbers<[1], [0], [0], [1], [0, 0, 1, 1], [], []>} : vector<256x128xbf16>, vector<128x128xbf16>, vector<256x128xf32> -> vector<256x128xf32>
    %69 = arith.addf %63, %68 : vector<256x128xf32>
    %c0_54 = arith.constant 0 : index
    %c0_55 = arith.constant 0 : index
    %70 = vector.load %arg5[%c0_54, %c0_55] : memref<1x128xf32, #tpu.memory_space<vmem>>, vector<1x128xf32>
    %71 = vector.broadcast %70 : vector<1x128xf32> to vector<256x128xf32>
    %72 = arith.addf %69, %71 : vector<256x128xf32>
    %cst_56 = arith.constant 0.000000e+00 : f32
    %73 = vector.broadcast %cst_56 : f32 to vector<256x128xf32>
    %74 = arith.maximumf %72, %73 : vector<256x128xf32>
    %75 = arith.truncf %74 : vector<256x128xf32> to vector<256x128xbf16>
    %c0_57 = arith.constant 0 : index
    %c0_58 = arith.constant 0 : index
    %76 = vector.load %arg6[%c0_57, %c0_58] : memref<128x128xbf16, #tpu.memory_space<vmem>>, vector<128x128xbf16>
    %cst_59 = arith.constant dense<0.000000e+00> : vector<256x128xf32>
    %77 = tpu.matmul %75, %76, %cst_59 {dimension_numbers = #tpu.dot_dimension_numbers<[1], [0], [0], [1], [0, 0, 1, 1], [], []>} : vector<256x128xbf16>, vector<128x128xbf16>, vector<256x128xf32> -> vector<256x128xf32>
    %c0_60 = arith.constant 0 : index
    %c0_61 = arith.constant 0 : index
    %78 = vector.load %arg7[%c0_60, %c0_61] : memref<1x128xf32, #tpu.memory_space<vmem>>, vector<1x128xf32>
    %79 = vector.broadcast %78 : vector<1x128xf32> to vector<256x128xf32>
    %80 = arith.addf %77, %79 : vector<256x128xf32>
    %c0_62 = arith.constant 0 : index
    %c0_63 = arith.constant 0 : index
    %81 = vector.load %arg8[%c0_62, %c0_63] : memref<128x128xbf16, #tpu.memory_space<vmem>>, vector<128x128xbf16>
    %cst_64 = arith.constant dense<0.000000e+00> : vector<256x128xf32>
    %82 = tpu.matmul %1, %81, %cst_64 {dimension_numbers = #tpu.dot_dimension_numbers<[1], [0], [0], [1], [0, 0, 1, 1], [], []>} : vector<256x128xbf16>, vector<128x128xbf16>, vector<256x128xf32> -> vector<256x128xf32>
    %c0_65 = arith.constant 0 : index
    %c0_66 = arith.constant 0 : index
    %83 = vector.load %arg9[%c0_65, %c0_66] : memref<1x128xf32, #tpu.memory_space<vmem>>, vector<1x128xf32>
    %84 = vector.broadcast %83 : vector<1x128xf32> to vector<256x128xf32>
    %85 = arith.addf %82, %84 : vector<256x128xf32>
    %86 = arith.addf %80, %85 : vector<256x128xf32>
    %cst_67 = arith.constant 0.000000e+00 : f32
    %87 = vector.broadcast %cst_67 : f32 to vector<256x128xf32>
    %88 = arith.maximumf %86, %87 : vector<256x128xf32>
    %89 = vector.shape_cast %88 : vector<256x128xf32> to vector<1x16x16x128xf32>
    %c0_68 = arith.constant 0 : index
    %c0_69 = arith.constant 0 : index
    %c0_70 = arith.constant 0 : index
    %c0_71 = arith.constant 0 : index
    %90 = vector.load %arg10[%c0_68, %c0_69, %c0_70, %c0_71] : memref<1x16x16x128xf32, #tpu.memory_space<vmem>>, vector<1x16x16x128xf32>
    tpu.vector_store %arg10[%c0_68, %c0_69, %c0_70, %c0_71], %89 {strides = array<i32>} : memref<1x16x16x128xf32, #tpu.memory_space<vmem>>, vector<1x16x16x128xf32>,
    return
  }
  func.func @transform_0(%arg0: i32) -> (i32, i32, i32, i32) {
    %c0_i32 = arith.constant 0 : i32
    %c0_i32_0 = arith.constant 0 : i32
    %c0_i32_1 = arith.constant 0 : i32
    %c0_i32_2 = arith.constant 0 : i32
    return %arg0, %c0_i32, %c0_i32_0, %c0_i32_1 : i32, i32, i32, i32
  }
  func.func @transform_1(%arg0: i32) -> (i32, i32) {
    %c0_i32 = arith.constant 0 : i32
    %c0_i32_0 = arith.constant 0 : i32
    %c0_i32_1 = arith.constant 0 : i32
    return %c0_i32, %c0_i32_0 : i32, i32
  }
  func.func @transform_2(%arg0: i32) -> (i32, i32) {
    %c0_i32 = arith.constant 0 : i32
    %c0_i32_0 = arith.constant 0 : i32
    %c0_i32_1 = arith.constant 0 : i32
    return %c0_i32, %c0_i32_0 : i32, i32
  }
  func.func @transform_3(%arg0: i32) -> (i32, i32, i32, i32) {
    %c0_i32 = arith.constant 0 : i32
    %c0_i32_0 = arith.constant 0 : i32
    %c0_i32_1 = arith.constant 0 : i32
    %c0_i32_2 = arith.constant 0 : i32
    %c0_i32_3 = arith.constant 0 : i32
    return %c0_i32, %c0_i32_0, %c0_i32_1, %c0_i32_2 : i32, i32, i32, i32
  }
  func.func @transform_4(%arg0: i32) -> (i32, i32) {
    %c0_i32 = arith.constant 0 : i32
    %c0_i32_0 = arith.constant 0 : i32
    %c0_i32_1 = arith.constant 0 : i32
    return %c0_i32, %c0_i32_0 : i32, i32
  }
  func.func @transform_5(%arg0: i32) -> (i32, i32) {
    %c0_i32 = arith.constant 0 : i32
    %c0_i32_0 = arith.constant 0 : i32
    %c0_i32_1 = arith.constant 0 : i32
    return %c0_i32, %c0_i32_0 : i32, i32
  }
  func.func @transform_6(%arg0: i32) -> (i32, i32) {
    %c0_i32 = arith.constant 0 : i32
    %c0_i32_0 = arith.constant 0 : i32
    %c0_i32_1 = arith.constant 0 : i32
    return %c0_i32, %c0_i32_0 : i32, i32
  }
  func.func @transform_7(%arg0: i32) -> (i32, i32) {
    %c0_i32 = arith.constant 0 : i32
    %c0_i32_0 = arith.constant 0 : i32
    %c0_i32_1 = arith.constant 0 : i32
    return %c0_i32, %c0_i32_0 : i32, i32
  }
  func.func @transform_8(%arg0: i32) -> (i32, i32) {
    %c0_i32 = arith.constant 0 : i32
    %c0_i32_0 = arith.constant 0 : i32
    %c0_i32_1 = arith.constant 0 : i32
    return %c0_i32, %c0_i32_0 : i32, i32
  }
  func.func @transform_9(%arg0: i32) -> (i32, i32, i32, i32) {
    %c0_i32 = arith.constant 0 : i32
    %c0_i32_0 = arith.constant 0 : i32
    %c0_i32_1 = arith.constant 0 : i32
    %c0_i32_2 = arith.constant 0 : i32
    return %arg0, %c0_i32, %c0_i32_0, %c0_i32_1 : i32, i32, i32, i32
  }
}

</mosaic_0001>

<llo_original>
// kernel: tpu_custom_call.1
$region0: #{tpu_custom_call.1}
  #allocation0 [shape = 'u32[]', space=smem, size = 0x4, offset = 0x4, fixed_abs, tag = 'smem constant byte address 0x4 - core index']
  #allocation1 [shape = 'u32[144,128]{1,0:T(1,128)}', space=vmem, size = 0x12000, scoped, tag = 'internal scratch']
  %s0 = inlined_call_operand.hbm [shape: bf16[2,16,16,128], index: 0, kind: input, shape index: {}]
  %s1 = inlined_call_operand.hbm [shape: bf16[128,128], index: 1, kind: input, shape index: {}]
  %s2 = inlined_call_operand.vmem [shape: f32[1,128], index: 2, kind: input, shape index: {}]
  %s3 = inlined_call_operand.hbm [shape: bf16[3,3,128,128], index: 3, kind: input, shape index: {}]
  %s4 = inlined_call_operand.vmem [shape: f32[1,128], index: 4, kind: input, shape index: {}]
  %s5 = inlined_call_operand.hbm [shape: bf16[128,128], index: 5, kind: input, shape index: {}]
  %s6 = inlined_call_operand.vmem [shape: f32[1,128], index: 6, kind: input, shape index: {}]
  %s7 = inlined_call_operand.hbm [shape: bf16[128,128], index: 7, kind: input, shape index: {}]
  %s8 = inlined_call_operand.vmem [shape: f32[1,128], index: 8, kind: input, shape index: {}]
  %s9 = inlined_call_operand.hbm [shape: f32[2,16,16,128], index: 9, kind: output, shape index: {}]
  %s10 = sld [smem:[#allocation0]]
  $region89: #{tpu_custom_call.1} parent=0
    _
  %s12 = ssub.s32 1, %s10
  %s13 = scalar_select 0, %s12, %s10
  $region1: #{tpu_custom_call.1} parent=0
    #allocation2 [shape = 'u8[131072]{0}', space=vmem, size = 0x20000, scoped, tag = 'input window, operand 0']
    #allocation3 [shape = 's32[2]{0}', space=sflag, size = 0x8, scoped, tag = 'scoped memory for tpu_custom_call.1']
    #allocation4 [shape = 's32[2]{0}', space=sflag, size = 0x8, scoped, tag = 'scoped memory for tpu_custom_call.1']
    #allocation5 [shape = 'u8[32768]{0}', space=vmem, size = 0x8000, scoped, tag = 'input window, operand 1, single buffered']
    #allocation6 [shape = 's32[1]{0}', space=sflag, size = 0x4, scoped, tag = 'scoped memory for tpu_custom_call.1']
    #allocation7 [shape = 'u8[294912]{0}', space=vmem, size = 0x48000, scoped, tag = 'input window, operand 3, single buffered']
    #allocation8 [shape = 'u8[32768]{0}', space=vmem, size = 0x8000, scoped, tag = 'input window, operand 5, single buffered']
    #allocation9 [shape = 's32[1]{0}', space=sflag, size = 0x4, scoped, tag = 'scoped memory for tpu_custom_call.1']
    #allocation10 [shape = 'u8[32768]{0}', space=vmem, size = 0x8000, scoped, tag = 'input window, operand 7, single buffered']
    #allocation11 [shape = 'u8[262144]{0}', space=vmem, size = 0x40000, scoped, tag = 'output window, operand 0']
    %14 = vsyncpa [#allocation3], 0
    %s15 = scalar_lea.sflag [#allocation3], 1
    %16 = vsyncpa %s15, 0
    %17 = vsyncpa [#allocation6], 0
    %18 = vsyncpa [#allocation9], 0
    %19 = vsyncpa [#allocation4], 0
    %s20 = scalar_lea.sflag [#allocation4], 1
    %21 = vsyncpa %s20, 0
    loop: start=0, step=1, limit=4
    $region2: #{tpu_custom_call.1} parent=1 // loop_pre_header
      _
    $region3: #{tpu_custom_call.1} parent=1 // loop_header
      %s23 = sphi 0, %s27
      %p24 = scmp.ge.s32.totalorder %s23, 4
      %s33 = sphi 0, %s35
      %s36 = sphi 0, %s33
      %s37 = sphi 0, %s36
      %s53 = sphi 0, %s37
      %s57 = sphi 0, %s57
      %s59 = sphi 0, %s57
      %s60 = sphi 0, %s59
      %s74 = sphi 0, %s60
      %s78 = sphi 0, %s78
      %s80 = sphi 0, %s78
      %s81 = sphi 0, %s80
      %s95 = sphi 0, %s81
      %s99 = sphi 0, %s99
      %s101 = sphi 0, %s99
      %s102 = sphi 0, %s101
      %s116 = sphi 0, %s102
      %s120 = sphi 0, %s120
      %s122 = sphi 0, %s120
      %s123 = sphi 0, %s122
      %s137 = sphi 0, %s123
      %s141 = sphi 0, %s141
      %s143 = sphi 0, %s141
      %s144 = sphi 0, %s143
      %s158 = sphi 0, %s144
      %s162 = sphi 0, %s162
      %s164 = sphi 0, %s162
      %s165 = sphi 0, %s164
      %s179 = sphi 0, %s165
      %s183 = sphi 0, %s183
      %s185 = sphi 0, %s183
      %s186 = sphi 0, %s185
      %s200 = sphi 0, %s186
      %s204 = sphi 0, %s204
      %s206 = sphi 0, %s204
      %s207 = sphi 0, %s206
      %s221 = sphi 0, %s207
      %s227 = sphi 0, %s229
      %s230 = sphi 0, %s227
      %s231 = sphi 0, %s230
      %s247 = sphi 0, %s231
    $region4: #{tpu_custom_call.1} parent=1 // loop_header_branch
      %26 = sbr.rel (%p24) target = $region8
    $region5: #{tpu_custom_call.1} parent=1 // loop_body
      %s28 = ssub.s32 %s23, 1
      %s29 = ssub.s32 %s23, 2
      %s30 = sadd.s32 %s23, 1
      %s31 = ssub.s32 %s23, %s30
      %p32 = scmp.eq.s32.totalorder %s31, 0
      %s34 = sadd.s32 %s33, 1
      %s35 = scalar_select %p32, %s33, %s34
      %p38 = pneg %p32
      %p39 = scmp.eq.s32.totalorder %s23, 1
      %p40 = por %p38, %p39
      %p41 = scmp.ne.s32.totalorder %s33, %s36
      %p42 = scmp.eq.s32.totalorder %s23, 0
      %p43 = por %p41, %p42
      %p44 = scmp.ne.s32.totalorder %s33, %s36
      %p45 = scmp.eq.s32.totalorder %s28, 1
      %p46 = por %p44, %p45
      %p47 = scmp.ne.s32.totalorder %s36, %s37
      %p48 = scmp.eq.s32.totalorder %s28, 0
      %p49 = por %p47, %p48
      %p50 = scmp.ne.s32.totalorder %s36, %s37
      %p51 = scmp.eq.s32.totalorder %s29, 1
      %p52 = por %p50, %p51
      %p54 = scmp.ne.s32.totalorder %s37, %s53
      %p55 = scmp.eq.s32.totalorder %s29, 0
      %p56 = por %p54, %p55
      %s58 = sadd.s32 %s57, 1
      %p61 = scmp.eq.s32.totalorder %s23, 1
      %p62 = scmp.ne.s32.totalorder %s57, %s59
      %p63 = scmp.eq.s32.totalorder %s23, 0
      %p64 = por %p62, %p63
      %p65 = scmp.ne.s32.totalorder %s57, %s59
      %p66 = scmp.eq.s32.totalorder %s28, 1
      %p67 = por %p65, %p66
      %p68 = scmp.ne.s32.totalorder %s59, %s60
      %p69 = scmp.eq.s32.totalorder %s28, 0
      %p70 = por %p68, %p69
      %p71 = scmp.ne.s32.totalorder %s59, %s60
      %p72 = scmp.eq.s32.totalorder %s29, 1
      %p73 = por %p71, %p72
      %p75 = scmp.ne.s32.totalorder %s60, %s74
      %p76 = scmp.eq.s32.totalorder %s29, 0
      %p77 = por %p75, %p76
      %s79 = sadd.s32 %s78, 1
      %p82 = scmp.eq.s32.totalorder %s23, 1
      %p83 = scmp.ne.s32.totalorder %s78, %s80
      %p84 = scmp.eq.s32.totalorder %s23, 0
      %p85 = por %p83, %p84
      %p86 = scmp.ne.s32.totalorder %s78, %s80
      %p87 = scmp.eq.s32.totalorder %s28, 1
      %p88 = por %p86, %p87
      %p89 = scmp.ne.s32.totalorder %s80, %s81
      %p90 = scmp.eq.s32.totalorder %s28, 0
      %p91 = por %p89, %p90
      %p92 = scmp.ne.s32.totalorder %s80, %s81
      %p93 = scmp.eq.s32.totalorder %s29, 1
      %p94 = por %p92, %p93
      %p96 = scmp.ne.s32.totalorder %s81, %s95
      %p97 = scmp.eq.s32.totalorder %s29, 0
      %p98 = por %p96, %p97
      %s100 = sadd.s32 %s99, 1
      %p103 = scmp.eq.s32.totalorder %s23, 1
      %p104 = scmp.ne.s32.totalorder %s99, %s101
      %p105 = scmp.eq.s32.totalorder %s23, 0
      %p106 = por %p104, %p105
      %p107 = scmp.ne.s32.totalorder %s99, %s101
      %p108 = scmp.eq.s32.totalorder %s28, 1
      %p109 = por %p107, %p108
      %p110 = scmp.ne.s32.totalorder %s101, %s102
      %p111 = scmp.eq.s32.totalorder %s28, 0
      %p112 = por %p110, %p111
      %p113 = scmp.ne.s32.totalorder %s101, %s102
      %p114 = scmp.eq.s32.totalorder %s29, 1
      %p115 = por %p113, %p114
      %p117 = scmp.ne.s32.totalorder %s102, %s116
      %p118 = scmp.eq.s32.totalorder %s29, 0
      %p119 = por %p117, %p118
      %s121 = sadd.s32 %s120, 1
      %p124 = scmp.eq.s32.totalorder %s23, 1
      %p125 = scmp.ne.s32.totalorder %s120, %s122
      %p126 = scmp.eq.s32.totalorder %s23, 0
      %p127 = por %p125, %p126
      %p128 = scmp.ne.s32.totalorder %s120, %s122
      %p129 = scmp.eq.s32.totalorder %s28, 1
      %p130 = por %p128, %p129
      %p131 = scmp.ne.s32.totalorder %s122, %s123
      %p132 = scmp.eq.s32.totalorder %s28, 0
      %p133 = por %p131, %p132
      %p134 = scmp.ne.s32.totalorder %s122, %s123
      %p135 = scmp.eq.s32.totalorder %s29, 1
      %p136 = por %p134, %p135
      %p138 = scmp.ne.s32.totalorder %s123, %s137
      %p139 = scmp.eq.s32.totalorder %s29, 0
      %p140 = por %p138, %p139
      %s142 = sadd.s32 %s141, 1
      %p145 = scmp.eq.s32.totalorder %s23, 1
      %p146 = scmp.ne.s32.totalorder %s141, %s143
      %p147 = scmp.eq.s32.totalorder %s23, 0
      %p148 = por %p146, %p147
      %p149 = scmp.ne.s32.totalorder %s141, %s143
      %p150 = scmp.eq.s32.totalorder %s28, 1
      %p151 = por %p149, %p150
      %p152 = scmp.ne.s32.totalorder %s143, %s144
      %p153 = scmp.eq.s32.totalorder %s28, 0
      %p154 = por %p152, %p153
      %p155 = scmp.ne.s32.totalorder %s143, %s144
      %p156 = scmp.eq.s32.totalorder %s29, 1
      %p157 = por %p155, %p156
      %p159 = scmp.ne.s32.totalorder %s144, %s158
      %p160 = scmp.eq.s32.totalorder %s29, 0
      %p161 = por %p159, %p160
      %s163 = sadd.s32 %s162, 1
      %p166 = scmp.eq.s32.totalorder %s23, 1
      %p167 = scmp.ne.s32.totalorder %s162, %s164
      %p168 = scmp.eq.s32.totalorder %s23, 0
      %p169 = por %p167, %p168
      %p170 = scmp.ne.s32.totalorder %s162, %s164
      %p171 = scmp.eq.s32.totalorder %s28, 1
      %p172 = por %p170, %p171
      %p173 = scmp.ne.s32.totalorder %s164, %s165
      %p174 = scmp.eq.s32.totalorder %s28, 0
      %p175 = por %p173, %p174
      %p176 = scmp.ne.s32.totalorder %s164, %s165
      %p177 = scmp.eq.s32.totalorder %s29, 1
      %p178 = por %p176, %p177
      %p180 = scmp.ne.s32.totalorder %s165, %s179
      %p181 = scmp.eq.s32.totalorder %s29, 0
      %p182 = por %p180, %p181
      %s184 = sadd.s32 %s183, 1
      %p187 = scmp.eq.s32.totalorder %s23, 1
      %p188 = scmp.ne.s32.totalorder %s183, %s185
      %p189 = scmp.eq.s32.totalorder %s23, 0
      %p190 = por %p188, %p189
      %p191 = scmp.ne.s32.totalorder %s183, %s185
      %p192 = scmp.eq.s32.totalorder %s28, 1
      %p193 = por %p191, %p192
      %p194 = scmp.ne.s32.totalorder %s185, %s186
      %p195 = scmp.eq.s32.totalorder %s28, 0
      %p196 = por %p194, %p195
      %p197 = scmp.ne.s32.totalorder %s185, %s186
      %p198 = scmp.eq.s32.totalorder %s29, 1
      %p199 = por %p197, %p198
      %p201 = scmp.ne.s32.totalorder %s186, %s200
      %p202 = scmp.eq.s32.totalorder %s29, 0
      %p203 = por %p201, %p202
      %s205 = sadd.s32 %s204, 1
      %p208 = scmp.eq.s32.totalorder %s23, 1
      %p209 = scmp.ne.s32.totalorder %s204, %s206
      %p210 = scmp.eq.s32.totalorder %s23, 0
      %p211 = por %p209, %p210
      %p212 = scmp.ne.s32.totalorder %s204, %s206
      %p213 = scmp.eq.s32.totalorder %s28, 1
      %p214 = por %p212, %p213
      %p215 = scmp.ne.s32.totalorder %s206, %s207
      %p216 = scmp.eq.s32.totalorder %s28, 0
      %p217 = por %p215, %p216
      %p218 = scmp.ne.s32.totalorder %s206, %s207
      %p219 = scmp.eq.s32.totalorder %s29, 1
      %p220 = por %p218, %p219
      %p222 = scmp.ne.s32.totalorder %s207, %s221
      %p223 = scmp.eq.s32.totalorder %s29, 0
      %p224 = por %p222, %p223
      %s225 = ssub.s32 %s23, %s30
      %p226 = scmp.eq.s32.totalorder %s225, 0
      %s228 = sadd.s32 %s227, 1
      %s229 = scalar_select %p226, %s227, %s228
      %p232 = pneg %p226
      %p233 = scmp.eq.s32.totalorder %s23, 1
      %p234 = por %p232, %p233
      %p235 = scmp.ne.s32.totalorder %s227, %s230
      %p236 = scmp.eq.s32.totalorder %s23, 0
      %p237 = por %p235, %p236
      %p238 = scmp.ne.s32.totalorder %s227, %s230
      %p239 = scmp.eq.s32.totalorder %s28, 1
      %p240 = por %p238, %p239
      %p241 = scmp.ne.s32.totalorder %s230, %s231
      %p242 = scmp.eq.s32.totalorder %s28, 0
      %p243 = por %p241, %p242
      %p244 = scmp.ne.s32.totalorder %s230, %s231
      %p245 = scmp.eq.s32.totalorder %s29, 1
      %p246 = por %p244, %p245
      %p248 = scmp.ne.s32.totalorder %s231, %s247
      %p249 = scmp.eq.s32.totalorder %s29, 0
      %p250 = por %p248, %p249
      %p251 = scmp.le.s32.totalorder 1, %s23
      %p252 = scmp.lt.s32.totalorder %s23, 3
      %p253 = pnand %p251, %p252
      %p254 = pneg %p253
      // Predicated region
      $region9: #{tpu_custom_call.1} parent=5 // pred_check
        _
      $region10: #{tpu_custom_call.1} parent=5 // pred_check_branch
        %256 = sbr.rel (%p253) target = $region12
      $region11: #{tpu_custom_call.1} parent=5 // pred_region
        %s257 = ssub.s32 %s23, 1
        // Predicated region
        $region13: #{tpu_custom_call.1} parent=11 // pred_check
          %p258 = pneg %p70
        $region14: #{tpu_custom_call.1} parent=11 // pred_check_branch
          %260 = sbr.rel (%p258) target = $region16
        $region15: #{tpu_custom_call.1} parent=11 // pred_region
          %s262 = ssub.s32 1024, 1024
          %263 = vsyncadd [#allocation6], %s262
          %s264 = sshll.u32 [#allocation5], 4
          %s265 = int_to_ptr.vmem [resolvable:$true] %s264
          %270 = dma.hbm_to_vmem [thread:$0]  %s1, 1024, %s265, [#allocation6], 64, 64, 4
        $region16: #{tpu_custom_call.1} parent=11 // pred_fallthru
          _
        // Predicated region
        $region17: #{tpu_custom_call.1} parent=11 // pred_check
          %p271 = pneg %p91
        $region18: #{tpu_custom_call.1} parent=11 // pred_check_branch
          %273 = sbr.rel (%p271) target = $region20
        $region19: #{tpu_custom_call.1} parent=11 // pred_region
          _
        $region20: #{tpu_custom_call.1} parent=11 // pred_fallthru
          _
        // Predicated region
        $region21: #{tpu_custom_call.1} parent=11 // pred_check
          %p274 = pneg %p112
        $region22: #{tpu_custom_call.1} parent=11 // pred_check_branch
          %276 = sbr.rel (%p274) target = $region24
        $region23: #{tpu_custom_call.1} parent=11 // pred_region
          %s278 = ssub.s32 9216, 9216
          %279 = vsyncadd [#allocation6], %s278
          %s280 = sshll.u32 [#allocation7], 4
          %s281 = int_to_ptr.vmem [resolvable:$true] %s280
          %286 = dma.hbm_to_vmem [thread:$0]  %s3, 9216, %s281, [#allocation6], 64, 64, 4
        $region24: #{tpu_custom_call.1} parent=11 // pred_fallthru
          _
        // Predicated region
        $region25: #{tpu_custom_call.1} parent=11 // pred_check
          %p287 = pneg %p133
        $region26: #{tpu_custom_call.1} parent=11 // pred_check_branch
          %289 = sbr.rel (%p287) target = $region28
        $region27: #{tpu_custom_call.1} parent=11 // pred_region
          _
        $region28: #{tpu_custom_call.1} parent=11 // pred_fallthru
          _
        // Predicated region
        $region29: #{tpu_custom_call.1} parent=11 // pred_check
          %p290 = pneg %p154
        $region30: #{tpu_custom_call.1} parent=11 // pred_check_branch
          %292 = sbr.rel (%p290) target = $region32
        $region31: #{tpu_custom_call.1} parent=11 // pred_region
          %s294 = ssub.s32 1024, 1024
          %295 = vsyncadd [#allocation9], %s294
          %s296 = sshll.u32 [#allocation8], 4
          %s297 = int_to_ptr.vmem [resolvable:$true] %s296
          %302 = dma.hbm_to_vmem [thread:$0]  %s5, 1024, %s297, [#allocation9], 64, 64, 4
        $region32: #{tpu_custom_call.1} parent=11 // pred_fallthru
          _
        // Predicated region
        $region33: #{tpu_custom_call.1} parent=11 // pred_check
          %p303 = pneg %p175
        $region34: #{tpu_custom_call.1} parent=11 // pred_check_branch
          %305 = sbr.rel (%p303) target = $region36
        $region35: #{tpu_custom_call.1} parent=11 // pred_region
          _
        $region36: #{tpu_custom_call.1} parent=11 // pred_fallthru
          _
        // Predicated region
        $region37: #{tpu_custom_call.1} parent=11 // pred_check
          %p306 = pneg %p196
        $region38: #{tpu_custom_call.1} parent=11 // pred_check_branch
          %308 = sbr.rel (%p306) target = $region40
        $region39: #{tpu_custom_call.1} parent=11 // pred_region
          %s310 = ssub.s32 1024, 1024
          %311 = vsyncadd [#allocation9], %s310
          %s312 = sshll.u32 [#allocation10], 4
          %s313 = int_to_ptr.vmem [resolvable:$true] %s312
          %318 = dma.hbm_to_vmem [thread:$0]  %s7, 1024, %s313, [#allocation9], 64, 64, 4
        $region40: #{tpu_custom_call.1} parent=11 // pred_fallthru
          _
        // Predicated region
        $region41: #{tpu_custom_call.1} parent=11 // pred_check
          %p319 = pneg %p217
        $region42: #{tpu_custom_call.1} parent=11 // pred_check_branch
          %321 = sbr.rel (%p319) target = $region44
        $region43: #{tpu_custom_call.1} parent=11 // pred_region
          _
        $region44: #{tpu_custom_call.1} parent=11 // pred_fallthru
          _
      $region12: #{tpu_custom_call.1} parent=5 // pred_fallthru
        _
      %p322 = scmp.lt.s32.totalorder %s23, 2
      // Predicated region
      $region45: #{tpu_custom_call.1} parent=5 // pred_check
        %p323 = pneg %p322
      $region46: #{tpu_custom_call.1} parent=5 // pred_check_branch
        %325 = sbr.rel (%p323) target = $region48
      $region47: #{tpu_custom_call.1} parent=5 // pred_region
        // Predicated region
        $region49: #{tpu_custom_call.1} parent=47 // pred_check
          %p326 = pneg %p43
        $region50: #{tpu_custom_call.1} parent=47 // pred_check_branch
          %328 = sbr.rel (%p326) target = $region52
        $region51: #{tpu_custom_call.1} parent=47 // pred_region
          %s329 = sand.u32 %s33, 1
          %s330 = scalar_lea.sflag [#allocation3], %s329
          %s331 = sand.u32 %s33, 1
          %s332 = smul.addr %s331, 128
          %s333 = scalar_lea.vmem [#allocation2], %s332
          %s335 = ssub.s32 2048, 2048
          %336 = vsyncadd %s330, %s335
          %s337 = smul.addr %s23, 32
          %s338 = smul.addr %s337, 64
          %s339 = scalar_lea.hbm %s0, %s338
          %s340 = sshll.u32 %s333, 4
          %s341 = int_to_ptr.vmem [resolvable:$true] %s340
          %346 = dma.hbm_to_vmem [thread:$0]  %s339, 2048, %s341, %s330, 64, 64, 4
        $region52: #{tpu_custom_call.1} parent=47 // pred_fallthru
          _
      $region48: #{tpu_custom_call.1} parent=5 // pred_fallthru
        _
      %p347 = scmp.le.s32.totalorder 1, %s23
      %p348 = scmp.lt.s32.totalorder %s23, 3
      %p349 = pnand %p347, %p348
      %p350 = pneg %p349
      // Predicated region
      $region53: #{tpu_custom_call.1} parent=5 // pred_check
        _
      $region54: #{tpu_custom_call.1} parent=5 // pred_check_branch
        %352 = sbr.rel (%p349) target = $region56
      $region55: #{tpu_custom_call.1} parent=5 // pred_region
        %s353 = ssub.s32 %s23, 1
        %s354 = sand.u32 %s36, 1
        %s355 = scalar_lea.sflag [#allocation3], %s354
        %s356 = sand.u32 %s36, 1
        %s357 = smul.addr %s356, 128
        %s358 = scalar_lea.vmem [#allocation2], %s357
        // Predicated region
        $region57: #{tpu_custom_call.1} parent=55 // pred_check
          %p359 = pneg %p49
        $region58: #{tpu_custom_call.1} parent=55 // pred_check_branch
          %361 = sbr.rel (%p359) target = $region60
        $region59: #{tpu_custom_call.1} parent=55 // pred_region
          %362 = dma.done %s355, 2048
        $region60: #{tpu_custom_call.1} parent=55 // pred_fallthru
          _
        // Predicated region
        $region61: #{tpu_custom_call.1} parent=55 // pred_check
          %p363 = pneg %p70
        $region62: #{tpu_custom_call.1} parent=55 // pred_check_branch
          %365 = sbr.rel (%p363) target = $region64
        $region63: #{tpu_custom_call.1} parent=55 // pred_region
          %366 = dma.done [#allocation6], 1024
        $region64: #{tpu_custom_call.1} parent=55 // pred_fallthru
          _
        // Predicated region
        $region65: #{tpu_custom_call.1} parent=55 // pred_check
          %p367 = pneg %p112
        $region66: #{tpu_custom_call.1} parent=55 // pred_check_branch
          %369 = sbr.rel (%p367) target = $region68
        $region67: #{tpu_custom_call.1} parent=55 // pred_region
          %370 = dma.done [#allocation6], 9216
        $region68: #{tpu_custom_call.1} parent=55 // pred_fallthru
          _
        // Predicated region
        $region69: #{tpu_custom_call.1} parent=55 // pred_check
          %p371 = pneg %p154
        $region70: #{tpu_custom_call.1} parent=55 // pred_check_branch
          %373 = sbr.rel (%p371) target = $region72
        $region71: #{tpu_custom_call.1} parent=55 // pred_region
          %374 = dma.done [#allocation9], 1024
        $region72: #{tpu_custom_call.1} parent=55 // pred_fallthru
          _
        // Predicated region
        $region73: #{tpu_custom_call.1} parent=55 // pred_check
          %p375 = pneg %p196
        $region74: #{tpu_custom_call.1} parent=55 // pred_check_branch
          %377 = sbr.rel (%p375) target = $region76
        $region75: #{tpu_custom_call.1} parent=55 // pred_region
          %378 = dma.done [#allocation9], 1024
        $region76: #{tpu_custom_call.1} parent=55 // pred_fallthru
          _
        %s379 = sand.u32 %s36, 1
        %s380 = scalar_lea.sflag [#allocation3], %s379
        %s381 = sand.u32 %s36, 1
        %s382 = smul.addr %s381, 128
        %s383 = scalar_lea.vmem [#allocation2], %s382
        %p384 = pneg %p49
        %p385 = pneg %p46
        %p386 = pneg %p70
        %p387 = pneg %p67
        %p388 = pneg %p91
        %p389 = pneg %p88
        %p390 = pneg %p112
        %p391 = pneg %p109
        %p392 = pneg %p133
        %p393 = pneg %p130
        %p394 = pneg %p154
        %p395 = pneg %p151
        %p396 = pneg %p175
        %p397 = pneg %p172
        %p398 = pneg %p196
        %p399 = pneg %p193
        %p400 = pneg %p217
        %p401 = pneg %p214
        %p402 = pneg %p243
        %p403 = pneg %p240
        %s404 = sand.u32 %s230, 1
        %s405 = scalar_lea.sflag [#allocation4], %s404
        %s406 = sand.u32 %s230, 1
        %s407 = smul.addr %s406, 256
        %s408 = scalar_lea.vmem [#allocation11], %s407
        %v410 = vld [vmem:[%s358] sm:$0xf]
        %v411 = vld [vmem:[%s358 + $0x4] sm:$0xf]
        %v412 = vld [vmem:[%s358 + $0x8] sm:$0xf]
        %v413 = vld [vmem:[%s358 + $0xc] sm:$0xf]
        %v414 = vld [vmem:[%s358 + $0x10] sm:$0xf]
        %v415 = vld [vmem:[%s358 + $0x14] sm:$0xf]
        %v416 = vld [vmem:[%s358 + $0x18] sm:$0xf]
        %v417 = vld [vmem:[%s358 + $0x1c] sm:$0xf]
        %v418 = vld [vmem:[%s358 + $0x20] sm:$0xf]
        %v419 = vld [vmem:[%s358 + $0x24] sm:$0xf]
        %v420 = vld [vmem:[%s358 + $0x28] sm:$0xf]
        %v421 = vld [vmem:[%s358 + $0x2c] sm:$0xf]
        %v422 = vld [vmem:[%s358 + $0x30] sm:$0xf]
        %v423 = vld [vmem:[%s358 + $0x34] sm:$0xf]
        %v424 = vld [vmem:[%s358 + $0x38] sm:$0xf]
        %v425 = vld [vmem:[%s358 + $0x3c] sm:$0xf]
        %v426 = vld [vmem:[%s358 + $0x40] sm:$0xf]
        %v427 = vld [vmem:[%s358 + $0x44] sm:$0xf]
        %v428 = vld [vmem:[%s358 + $0x48] sm:$0xf]
        %v429 = vld [vmem:[%s358 + $0x4c] sm:$0xf]
        %v430 = vld [vmem:[%s358 + $0x50] sm:$0xf]
        %v431 = vld [vmem:[%s358 + $0x54] sm:$0xf]
        %v432 = vld [vmem:[%s358 + $0x58] sm:$0xf]
        %v433 = vld [vmem:[%s358 + $0x5c] sm:$0xf]
        %v434 = vld [vmem:[%s358 + $0x60] sm:$0xf]
        %v435 = vld [vmem:[%s358 + $0x64] sm:$0xf]
        %v436 = vld [vmem:[%s358 + $0x68] sm:$0xf]
        %v437 = vld [vmem:[%s358 + $0x6c] sm:$0xf]
        %v438 = vld [vmem:[%s358 + $0x70] sm:$0xf]
        %v439 = vld [vmem:[%s358 + $0x74] sm:$0xf]
        %v440 = vld [vmem:[%s358 + $0x78] sm:$0xf]
        %v441 = vld [vmem:[%s358 + $0x7c] sm:$0xf]
        %v442 = vld [vmem:[#allocation5] sm:$0xf]
        %v443 = vld [vmem:[#allocation5 + $0x4] sm:$0xf]
        %v444 = vld [vmem:[#allocation5 + $0x8] sm:$0xf]
        %v445 = vld [vmem:[#allocation5 + $0xc] sm:$0xf]
        %v446 = vld [vmem:[#allocation5 + $0x10] sm:$0xf]
        %v447 = vld [vmem:[#allocation5 + $0x14] sm:$0xf]
        %v448 = vld [vmem:[#allocation5 + $0x18] sm:$0xf]
        %v449 = vld [vmem:[#allocation5 + $0x1c] sm:$0xf]
        %v450 = vld [vmem:[#allocation5 + $0x20] sm:$0xf]
        %v451 = vld [vmem:[#allocation5 + $0x24] sm:$0xf]
        %v452 = vld [vmem:[#allocation5 + $0x28] sm:$0xf]
        %v453 = vld [vmem:[#allocation5 + $0x2c] sm:$0xf]
        %v454 = vld [vmem:[#allocation5 + $0x30] sm:$0xf]
        %v455 = vld [vmem:[#allocation5 + $0x34] sm:$0xf]
        %v456 = vld [vmem:[#allocation5 + $0x38] sm:$0xf]
        %v457 = vld [vmem:[#allocation5 + $0x3c] sm:$0xf]
        %v458 = vld [vmem:[%s2] sm:$0x1]
        %v460 = vlaneseq
        %v461 = vshrl.u32 %v460, 7
        %v462 = vsub.s32 0, %v461
        %v463 = vrot.slane %v458, %v462
        %v497 = vunpack.c.l.b16 %v410
        %v498 = vunpack.c.l.b16 %v411
        %v499 = vunpack.c.l.b16 %v412
        %v500 = vunpack.c.l.b16 %v413
        %v501 = vunpack.c.l.b16 %v414
        %v502 = vunpack.c.l.b16 %v415
        %v503 = vunpack.c.l.b16 %v416
        %v504 = vunpack.c.l.b16 %v417
        %v505 = vunpack.c.l.b16 %v418
        %v506 = vunpack.c.l.b16 %v419
        %v507 = vunpack.c.l.b16 %v420
        %v508 = vunpack.c.l.b16 %v421
        %v509 = vunpack.c.l.b16 %v422
        %v510 = vunpack.c.l.b16 %v423
        %v511 = vunpack.c.l.b16 %v424
        %v512 = vunpack.c.l.b16 %v425
        %v513 = vunpack.c.l.b16 %v426
        %v514 = vunpack.c.l.b16 %v427
        %v515 = vunpack.c.l.b16 %v428
        %v516 = vunpack.c.l.b16 %v429
        %v517 = vunpack.c.l.b16 %v430
        %v518 = vunpack.c.l.b16 %v431
        %v519 = vunpack.c.l.b16 %v432
        %v520 = vunpack.c.l.b16 %v433
        %v521 = vunpack.c.l.b16 %v434
        %v522 = vunpack.c.l.b16 %v435
        %v523 = vunpack.c.l.b16 %v436
        %v524 = vunpack.c.l.b16 %v437
        %v525 = vunpack.c.l.b16 %v438
        %v526 = vunpack.c.l.b16 %v439
        %v527 = vunpack.c.l.b16 %v440
        %v528 = vunpack.c.l.b16 %v441
        %v529 = vpack.c.b16 %v498, %v497
        %v530 = vpack.c.b16 %v500, %v499
        %v531 = vpack.c.b16 %v502, %v501
        %v532 = vpack.c.b16 %v504, %v503
        %v533 = vpack.c.b16 %v506, %v505
        %v534 = vpack.c.b16 %v508, %v507
        %v535 = vpack.c.b16 %v510, %v509
        %v536 = vpack.c.b16 %v512, %v511
        %v537 = vpack.c.b16 %v514, %v513
        %v538 = vpack.c.b16 %v516, %v515
        %v539 = vpack.c.b16 %v518, %v517
        %v540 = vpack.c.b16 %v520, %v519
        %v541 = vpack.c.b16 %v522, %v521
        %v542 = vpack.c.b16 %v524, %v523
        %v543 = vpack.c.b16 %v526, %v525
        %v544 = vpack.c.b16 %v528, %v527
        %v577 = vunpack.c.l.b16 %v442
        %v578 = vunpack.c.l.b16 %v443
        %v579 = vunpack.c.l.b16 %v444
        %v580 = vunpack.c.l.b16 %v445
        %v581 = vunpack.c.l.b16 %v446
        %v582 = vunpack.c.l.b16 %v447
        %v583 = vunpack.c.l.b16 %v448
        %v584 = vunpack.c.l.b16 %v449
        %v585 = vunpack.c.l.b16 %v450
        %v586 = vunpack.c.l.b16 %v451
        %v587 = vunpack.c.l.b16 %v452
        %v588 = vunpack.c.l.b16 %v453
        %v589 = vunpack.c.l.b16 %v454
        %v590 = vunpack.c.l.b16 %v455
        %v591 = vunpack.c.l.b16 %v456
        %v592 = vunpack.c.l.b16 %v457
        %v593 = vpack.c.b16 %v578, %v577
        %v594 = vpack.c.b16 %v580, %v579
        %v595 = vpack.c.b16 %v582, %v581
        %v596 = vpack.c.b16 %v584, %v583
        %v597 = vpack.c.b16 %v586, %v585
        %v598 = vpack.c.b16 %v588, %v587
        %v599 = vpack.c.b16 %v590, %v589
        %v600 = vpack.c.b16 %v592, %v591
        %609 = vmatprep.subr.bf16.mxu0 0
        %610 = vmatpush1.bf16.msra.mxu0 %v593
        %611 = vmatprep.subr.bf16.mxu0 0
        %612 = vmatpush1.bf16.msra.mxu0 %v594
        %613 = vmatprep.subr.bf16.mxu0 0
        %614 = vmatpush1.bf16.msra.mxu0 %v595
        %615 = vmatprep.subr.bf16.mxu0 0
        %616 = vmatpush1.bf16.msra.mxu0 %v596
        %617 = vmatprep.subr.bf16.mxu0 0
        %618 = vmatpush1.bf16.msra.mxu0 %v597
        %619 = vmatprep.subr.bf16.mxu0 0
        %620 = vmatpush1.bf16.msra.mxu0 %v598
        %621 = vmatprep.subr.bf16.mxu0 0
        %622 = vmatpush1.bf16.msra.mxu0 %v599
        %623 = vmatprep.subr.bf16.mxu0 0
        %624 = vmatpush1.bf16.msra.mxu0 %v600
        %625 = vmatprep.subr.bf16.mxu0 0
        %626 = vmatpush1.bf16.msra.mxu0 0
        %627 = vmatprep.subr.bf16.mxu0 0
        %628 = vmatpush1.bf16.msra.mxu0 0
        %629 = vmatprep.subr.bf16.mxu0 0
        %630 = vmatpush1.bf16.msra.mxu0 0
        %631 = vmatprep.subr.bf16.mxu0 0
        %632 = vmatpush1.bf16.msra.mxu0 0
        %633 = vmatprep.subr.bf16.mxu0 0
        %634 = vmatpush1.bf16.msra.mxu0 0
        %635 = vmatprep.subr.bf16.mxu0 0
        %636 = vmatpush1.bf16.msra.mxu0 0
        %637 = vmatprep.subr.bf16.mxu0 0
        %638 = vmatpush1.bf16.msra.mxu0 0
        %639 = vmatprep.subr.bf16.mxu0 0
        %640 = vmatpush1.bf16.msra.mxu0 0
        %641 = vmatprep.mubr.bf16.mxu0 0
        %642 = vmatmul.mubr.bf16.gmra.mrb[0].mxu0 %v529
        %v643 = vpop.f32.mrb[0].mxu0
        %v644 = vadd.f32 %v463, %v643
        %v645 = vpop.f32.mrb[0].mxu0
        %v646 = vpop.f32.mrb[0].mxu0
        %v647 = vadd.f32 %v463, %v646
        %v648 = vpop.f32.mrb[0].mxu0
        %649 = vmatprep.mubr.bf16.mxu0 0
        %650 = vmatmul.mubr.bf16.gmra.mrb[0].mxu0 %v530
        %v651 = vpop.f32.mrb[0].mxu0
        %v652 = vadd.f32 %v463, %v651
        %v653 = vpop.f32.mrb[0].mxu0
        %v654 = vpop.f32.mrb[0].mxu0
        %v655 = vadd.f32 %v463, %v654
        %v656 = vpop.f32.mrb[0].mxu0
        %657 = vmatprep.mubr.bf16.mxu0 0
        %658 = vmatmul.mubr.bf16.gmra.mrb[0].mxu0 %v531
        %v659 = vpop.f32.mrb[0].mxu0
        %v660 = vadd.f32 %v463, %v659
        %v661 = vpop.f32.mrb[0].mxu0
        %v662 = vpop.f32.mrb[0].mxu0
        %v663 = vadd.f32 %v463, %v662
        %v664 = vpop.f32.mrb[0].mxu0
        %665 = vmatprep.mubr.bf16.mxu0 0
        %666 = vmatmul.mubr.bf16.gmra.mrb[0].mxu0 %v532
        %v667 = vpop.f32.mrb[0].mxu0
        %v668 = vadd.f32 %v463, %v667
        %v669 = vpop.f32.mrb[0].mxu0
        %v670 = vpop.f32.mrb[0].mxu0
        %v671 = vadd.f32 %v463, %v670
        %v672 = vpop.f32.mrb[0].mxu0
        %673 = vmatprep.mubr.bf16.mxu0 0
        %674 = vmatmul.mubr.bf16.gmra.mrb[0].mxu0 %v533
        %v675 = vpop.f32.mrb[0].mxu0
        %v676 = vadd.f32 %v463, %v675
        %v677 = vpop.f32.mrb[0].mxu0
        %v678 = vpop.f32.mrb[0].mxu0
        %v679 = vadd.f32 %v463, %v678
        %v680 = vpop.f32.mrb[0].mxu0
        %681 = vmatprep.mubr.bf16.mxu0 0
        %682 = vmatmul.mubr.bf16.gmra.mrb[0].mxu0 %v534
        %v683 = vpop.f32.mrb[0].mxu0
        %v684 = vadd.f32 %v463, %v683
        %v685 = vpop.f32.mrb[0].mxu0
        %v686 = vpop.f32.mrb[0].mxu0
        %v687 = vadd.f32 %v463, %v686
        %v688 = vpop.f32.mrb[0].mxu0
        %689 = vmatprep.mubr.bf16.mxu0 0
        %690 = vmatmul.mubr.bf16.gmra.mrb[0].mxu0 %v535
        %v691 = vpop.f32.mrb[0].mxu0
        %v692 = vadd.f32 %v463, %v691
        %v693 = vpop.f32.mrb[0].mxu0
        %v694 = vpop.f32.mrb[0].mxu0
        %v695 = vadd.f32 %v463, %v694
        %v696 = vpop.f32.mrb[0].mxu0
        %697 = vmatprep.mubr.bf16.mxu0 0
        %698 = vmatmul.mubr.bf16.gmra.mrb[0].mxu0 %v536
        %v699 = vpop.f32.mrb[0].mxu0
        %v700 = vadd.f32 %v463, %v699
        %v701 = vpop.f32.mrb[0].mxu0
        %v702 = vpop.f32.mrb[0].mxu0
        %v703 = vadd.f32 %v463, %v702
        %v704 = vpop.f32.mrb[0].mxu0
        %705 = vmatprep.mubr.bf16.mxu0 0
        %706 = vmatmul.mubr.bf16.gmra.mrb[0].mxu0 %v537
        %v707 = vpop.f32.mrb[0].mxu0
        %v708 = vadd.f32 %v463, %v707
        %v709 = vpop.f32.mrb[0].mxu0
        %v710 = vpop.f32.mrb[0].mxu0
        %v711 = vadd.f32 %v463, %v710
        %v712 = vpop.f32.mrb[0].mxu0
        %713 = vmatprep.mubr.bf16.mxu0 0
        %714 = vmatmul.mubr.bf16.gmra.mrb[0].mxu0 %v538
        %v715 = vpop.f32.mrb[0].mxu0
        %v716 = vadd.f32 %v463, %v715
        %v717 = vpop.f32.mrb[0].mxu0
        %v718 = vpop.f32.mrb[0].mxu0
        %v719 = vadd.f32 %v463, %v718
        %v720 = vpop.f32.mrb[0].mxu0
        %721 = vmatprep.mubr.bf16.mxu0 0
        %722 = vmatmul.mubr.bf16.gmra.mrb[0].mxu0 %v539
        %v723 = vpop.f32.mrb[0].mxu0
        %v724 = vadd.f32 %v463, %v723
        %v725 = vpop.f32.mrb[0].mxu0
        %v726 = vpop.f32.mrb[0].mxu0
        %v727 = vadd.f32 %v463, %v726
        %v728 = vpop.f32.mrb[0].mxu0
        %729 = vmatprep.mubr.bf16.mxu0 0
        %730 = vmatmul.mubr.bf16.gmra.mrb[0].mxu0 %v540
        %v731 = vpop.f32.mrb[0].mxu0
        %v732 = vadd.f32 %v463, %v731
        %v733 = vpop.f32.mrb[0].mxu0
        %v734 = vpop.f32.mrb[0].mxu0
        %v735 = vadd.f32 %v463, %v734
        %v736 = vpop.f32.mrb[0].mxu0
        %737 = vmatprep.mubr.bf16.mxu0 0
        %738 = vmatmul.mubr.bf16.gmra.mrb[0].mxu0 %v541
        %v739 = vpop.f32.mrb[0].mxu0
        %v740 = vadd.f32 %v463, %v739
        %v741 = vpop.f32.mrb[0].mxu0
        %v742 = vpop.f32.mrb[0].mxu0
        %v743 = vadd.f32 %v463, %v742
        %v744 = vpop.f32.mrb[0].mxu0
        %745 = vmatprep.mubr.bf16.mxu0 0
        %746 = vmatmul.mubr.bf16.gmra.mrb[0].mxu0 %v542
        %v747 = vpop.f32.mrb[0].mxu0
        %v748 = vadd.f32 %v463, %v747
        %v749 = vpop.f32.mrb[0].mxu0
        %v750 = vpop.f32.mrb[0].mxu0
        %v751 = vadd.f32 %v463, %v750
        %v752 = vpop.f32.mrb[0].mxu0
        %753 = vmatprep.mubr.bf16.mxu0 0
        %754 = vmatmul.mubr.bf16.gmra.mrb[0].mxu0 %v543
        %v755 = vpop.f32.mrb[0].mxu0
        %v756 = vadd.f32 %v463, %v755
        %v757 = vpop.f32.mrb[0].mxu0
        %v758 = vpop.f32.mrb[0].mxu0
        %v759 = vadd.f32 %v463, %v758
        %v760 = vpop.f32.mrb[0].mxu0
        %761 = vmatprep.mubr.bf16.mxu0 0
        %762 = vmatmul.mubr.bf16.gmra.mrb[0].mxu0 %v544
        %v763 = vpop.f32.mrb[0].mxu0
        %v764 = vadd.f32 %v463, %v763
        %v765 = vpop.f32.mrb[0].mxu0
        %v766 = vpop.f32.mrb[0].mxu0
        %v767 = vadd.f32 %v463, %v766
        %v768 = vpop.f32.mrb[0].mxu0
        %769 = vdwg.mxu0
        %v770 = vmax.f32 %v644, 0.0
        %v771 = vmax.f32 %v647, 0.0
        %v772 = vmax.f32 %v652, 0.0
        %v773 = vmax.f32 %v655, 0.0
        %v774 = vmax.f32 %v660, 0.0
        %v775 = vmax.f32 %v663, 0.0
        %v776 = vmax.f32 %v668, 0.0
        %v777 = vmax.f32 %v671, 0.0
        %v778 = vmax.f32 %v676, 0.0
        %v779 = vmax.f32 %v679, 0.0
        %v780 = vmax.f32 %v684, 0.0
        %v781 = vmax.f32 %v687, 0.0
        %v782 = vmax.f32 %v692, 0.0
        %v783 = vmax.f32 %v695, 0.0
        %v784 = vmax.f32 %v700, 0.0
        %v785 = vmax.f32 %v703, 0.0
        %v786 = vmax.f32 %v708, 0.0
        %v787 = vmax.f32 %v711, 0.0
        %v788 = vmax.f32 %v716, 0.0
        %v789 = vmax.f32 %v719, 0.0
        %v790 = vmax.f32 %v724, 0.0
        %v791 = vmax.f32 %v727, 0.0
        %v792 = vmax.f32 %v732, 0.0
        %v793 = vmax.f32 %v735, 0.0
        %v794 = vmax.f32 %v740, 0.0
        %v795 = vmax.f32 %v743, 0.0
        %v796 = vmax.f32 %v748, 0.0
        %v797 = vmax.f32 %v751, 0.0
        %v798 = vmax.f32 %v756, 0.0
        %v799 = vmax.f32 %v759, 0.0
        %v800 = vmax.f32 %v764, 0.0
        %v801 = vmax.f32 %v767, 0.0
        %v802 = vpack.c.bf16 %v771, %v770
        %v803 = vpack.c.bf16 %v773, %v772
        %v804 = vpack.c.bf16 %v775, %v774
        %v805 = vpack.c.bf16 %v777, %v776
        %v806 = vpack.c.bf16 %v779, %v778
        %v807 = vpack.c.bf16 %v781, %v780
        %v808 = vpack.c.bf16 %v783, %v782
        %v809 = vpack.c.bf16 %v785, %v784
        %v810 = vpack.c.bf16 %v787, %v786
        %v811 = vpack.c.bf16 %v789, %v788
        %v812 = vpack.c.bf16 %v791, %v790
        %v813 = vpack.c.bf16 %v793, %v792
        %v814 = vpack.c.bf16 %v795, %v794
        %v815 = vpack.c.bf16 %v797, %v796
        %v816 = vpack.c.bf16 %v799, %v798
        %v817 = vpack.c.bf16 %v801, %v800
        %v819 = vshrl.u32 0, 16
        %v821 = vrot.slane %v819, 7
        %v822 = vshll.u32 0, 16
        %v824 = vor.u32 %v821, %v822
        %v826 = vshrl.u32 %v802, 16
        %v828 = vrot.slane %v826, 7
        %v829 = vshll.u32 %v802, 16
        %v831 = vor.u32 %v828, %v829
        %v833 = vshrl.u32 %v803, 16
        %v835 = vrot.slane %v833, 7
        %v836 = vshll.u32 %v803, 16
        %v838 = vor.u32 %v835, %v836
        %v840 = vshrl.u32 %v804, 16
        %v842 = vrot.slane %v840, 7
        %v843 = vshll.u32 %v804, 16
        %v845 = vor.u32 %v842, %v843
        %v847 = vshrl.u32 %v805, 16
        %v849 = vrot.slane %v847, 7
        %v850 = vshll.u32 %v805, 16
        %v852 = vor.u32 %v849, %v850
        %v854 = vshrl.u32 %v806, 16
        %v856 = vrot.slane %v854, 7
        %v857 = vshll.u32 %v806, 16
        %v859 = vor.u32 %v856, %v857
        %v861 = vshrl.u32 %v807, 16
        %v863 = vrot.slane %v861, 7
        %v864 = vshll.u32 %v807, 16
        %v866 = vor.u32 %v863, %v864
        %v868 = vshrl.u32 %v808, 16
        %v870 = vrot.slane %v868, 7
        %v871 = vshll.u32 %v808, 16
        %v873 = vor.u32 %v870, %v871
        %v875 = vshrl.u32 %v809, 16
        %v877 = vrot.slane %v875, 7
        %v878 = vshll.u32 %v809, 16
        %v880 = vor.u32 %v877, %v878
        %v882 = vshrl.u32 %v810, 16
        %v884 = vrot.slane %v882, 7
        %v885 = vshll.u32 %v810, 16
        %v887 = vor.u32 %v884, %v885
        %v889 = vshrl.u32 %v811, 16
        %v891 = vrot.slane %v889, 7
        %v892 = vshll.u32 %v811, 16
        %v894 = vor.u32 %v891, %v892
        %v896 = vshrl.u32 %v812, 16
        %v898 = vrot.slane %v896, 7
        %v899 = vshll.u32 %v812, 16
        %v901 = vor.u32 %v898, %v899
        %v903 = vshrl.u32 %v813, 16
        %v905 = vrot.slane %v903, 7
        %v906 = vshll.u32 %v813, 16
        %v908 = vor.u32 %v905, %v906
        %v910 = vshrl.u32 %v814, 16
        %v912 = vrot.slane %v910, 7
        %v913 = vshll.u32 %v814, 16
        %v915 = vor.u32 %v912, %v913
        %v917 = vshrl.u32 %v815, 16
        %v919 = vrot.slane %v917, 7
        %v920 = vshll.u32 %v815, 16
        %v922 = vor.u32 %v919, %v920
        %v924 = vshrl.u32 %v816, 16
        %v926 = vrot.slane %v924, 7
        %v927 = vshll.u32 %v816, 16
        %v929 = vor.u32 %v926, %v927
        %v931 = vshrl.u32 %v817, 16
        %v933 = vrot.slane %v931, 7
        %v934 = vshll.u32 %v817, 16
        %v936 = vor.u32 %v933, %v934
        %vm971 = vcmask 1040384
        %vm972 = vsmask.f32 256
        %vm973 = vmand %vm971, %vm972
        %v974 = vsel %vm973, 0, %v824
        %v975 = vsel %vm973, 0, %v831
        %v976 = vsel %vm973, 0, %v838
        %v977 = vsel %vm973, 0, %v845
        %v978 = vsel %vm973, 0, %v852
        %v979 = vsel %vm973, 0, %v859
        %v980 = vsel %vm973, 0, %v866
        %v981 = vsel %vm973, 0, %v873
        %v982 = vsel %vm973, 0, %v880
        %v983 = vsel %vm973, 0, %v887
        %v984 = vsel %vm973, 0, %v894
        %v985 = vsel %vm973, 0, %v901
        %v986 = vsel %vm973, 0, %v908
        %v987 = vsel %vm973, 0, %v915
        %v988 = vsel %vm973, 0, %v922
        %v989 = vsel %vm973, 0, %v929
        %v990 = vsel %vm973, 0, %v936
        %v991 = vsel %vm973, %v821, 0
        %v992 = vsel %vm973, %v828, 0
        %v993 = vsel %vm973, %v835, 0
        %v994 = vsel %vm973, %v842, 0
        %v995 = vsel %vm973, %v849, 0
        %v996 = vsel %vm973, %v856, 0
        %v997 = vsel %vm973, %v863, 0
        %v998 = vsel %vm973, %v870, 0
        %v999 = vsel %vm973, %v877, 0
        %v1000 = vsel %vm973, %v884, 0
        %v1001 = vsel %vm973, %v891, 0
        %v1002 = vsel %vm973, %v898, 0
        %v1003 = vsel %vm973, %v905, 0
        %v1004 = vsel %vm973, %v912, 0
        %v1005 = vsel %vm973, %v919, 0
        %v1006 = vsel %vm973, %v926, 0
        %v1007 = vsel %vm973, %v933, 0
        %v1008 = vld [vmem:[#allocation7] sm:$0xf]
        %v1009 = vld [vmem:[#allocation7 + $0x4] sm:$0xf]
        %v1010 = vld [vmem:[#allocation7 + $0x8] sm:$0xf]
        %v1011 = vld [vmem:[#allocation7 + $0xc] sm:$0xf]
        %v1012 = vld [vmem:[#allocation7 + $0x10] sm:$0xf]
        %v1013 = vld [vmem:[#allocation7 + $0x14] sm:$0xf]
        %v1014 = vld [vmem:[#allocation7 + $0x18] sm:$0xf]
        %v1015 = vld [vmem:[#allocation7 + $0x1c] sm:$0xf]
        %v1016 = vld [vmem:[#allocation7 + $0x20] sm:$0xf]
        %v1017 = vld [vmem:[#allocation7 + $0x24] sm:$0xf]
        %v1018 = vld [vmem:[#allocation7 + $0x28] sm:$0xf]
        %v1019 = vld [vmem:[#allocation7 + $0x2c] sm:$0xf]
        %v1020 = vld [vmem:[#allocation7 + $0x30] sm:$0xf]
        %v1021 = vld [vmem:[#allocation7 + $0x34] sm:$0xf]
        %v1022 = vld [vmem:[#allocation7 + $0x38] sm:$0xf]
        %v1023 = vld [vmem:[#allocation7 + $0x3c] sm:$0xf]
        %vm1024 = vsmask.f32 7424
        %v1026 = vshrl.u32 %v974, 16
        %v1028 = vshll.u32 %v974, 16
        %v1030 = vrot.slane %v1028, 1
        %v1031 = vor.u32 %v1026, %v1030
        %v1033 = vshll.u32 %v991, 16
        %v1035 = vrot.slane %v1033, 1
        %v1036 = vsel %vm1024, %v1031, %v1035
        %v1038 = vshrl.u32 %v975, 16
        %v1040 = vshll.u32 %v975, 16
        %v1042 = vrot.slane %v1040, 1
        %v1043 = vor.u32 %v1038, %v1042
        %v1045 = vshll.u32 %v992, 16
        %v1047 = vrot.slane %v1045, 1
        %v1048 = vsel %vm1024, %v1043, %v1047
        %v1050 = vshrl.u32 %v976, 16
        %v1052 = vshll.u32 %v976, 16
        %v1054 = vrot.slane %v1052, 1
        %v1055 = vor.u32 %v1050, %v1054
        %v1057 = vshll.u32 %v993, 16
        %v1059 = vrot.slane %v1057, 1
        %v1060 = vsel %vm1024, %v1055, %v1059
        %v1062 = vshrl.u32 %v977, 16
        %v1064 = vshll.u32 %v977, 16
        %v1066 = vrot.slane %v1064, 1
        %v1067 = vor.u32 %v1062, %v1066
        %v1069 = vshll.u32 %v994, 16
        %v1071 = vrot.slane %v1069, 1
        %v1072 = vsel %vm1024, %v1067, %v1071
        %v1074 = vshrl.u32 %v978, 16
        %v1076 = vshll.u32 %v978, 16
        %v1078 = vrot.slane %v1076, 1
        %v1079 = vor.u32 %v1074, %v1078
        %v1081 = vshll.u32 %v995, 16
        %v1083 = vrot.slane %v1081, 1
        %v1084 = vsel %vm1024, %v1079, %v1083
        %v1086 = vshrl.u32 %v979, 16
        %v1088 = vshll.u32 %v979, 16
        %v1090 = vrot.slane %v1088, 1
        %v1091 = vor.u32 %v1086, %v1090
        %v1093 = vshll.u32 %v996, 16
        %v1095 = vrot.slane %v1093, 1
        %v1096 = vsel %vm1024, %v1091, %v1095
        %v1098 = vshrl.u32 %v980, 16
        %v1100 = vshll.u32 %v980, 16
        %v1102 = vrot.slane %v1100, 1
        %v1103 = vor.u32 %v1098, %v1102
        %v1105 = vshll.u32 %v997, 16
        %v1107 = vrot.slane %v1105, 1
        %v1108 = vsel %vm1024, %v1103, %v1107
        %v1110 = vshrl.u32 %v981, 16
        %v1112 = vshll.u32 %v981, 16
        %v1114 = vrot.slane %v1112, 1
        %v1115 = vor.u32 %v1110, %v1114
        %v1117 = vshll.u32 %v998, 16
        %v1119 = vrot.slane %v1117, 1
        %v1120 = vsel %vm1024, %v1115, %v1119
        %v1122 = vshrl.u32 %v982, 16
        %v1124 = vshll.u32 %v982, 16
        %v1126 = vrot.slane %v1124, 1
        %v1127 = vor.u32 %v1122, %v1126
        %v1129 = vshll.u32 %v999, 16
        %v1131 = vrot.slane %v1129, 1
        %v1132 = vsel %vm1024, %v1127, %v1131
        %v1134 = vshrl.u32 %v983, 16
        %v1136 = vshll.u32 %v983, 16
        %v1138 = vrot.slane %v1136, 1
        %v1139 = vor.u32 %v1134, %v1138
        %v1141 = vshll.u32 %v1000, 16
        %v1143 = vrot.slane %v1141, 1
        %v1144 = vsel %vm1024, %v1139, %v1143
        %v1146 = vshrl.u32 %v984, 16
        %v1148 = vshll.u32 %v984, 16
        %v1150 = vrot.slane %v1148, 1
        %v1151 = vor.u32 %v1146, %v1150
        %v1153 = vshll.u32 %v1001, 16
        %v1155 = vrot.slane %v1153, 1
        %v1156 = vsel %vm1024, %v1151, %v1155
        %v1158 = vshrl.u32 %v985, 16
        %v1160 = vshll.u32 %v985, 16
        %v1162 = vrot.slane %v1160, 1
        %v1163 = vor.u32 %v1158, %v1162
        %v1165 = vshll.u32 %v1002, 16
        %v1167 = vrot.slane %v1165, 1
        %v1168 = vsel %vm1024, %v1163, %v1167
        %v1170 = vshrl.u32 %v986, 16
        %v1172 = vshll.u32 %v986, 16
        %v1174 = vrot.slane %v1172, 1
        %v1175 = vor.u32 %v1170, %v1174
        %v1177 = vshll.u32 %v1003, 16
        %v1179 = vrot.slane %v1177, 1
        %v1180 = vsel %vm1024, %v1175, %v1179
        %v1182 = vshrl.u32 %v987, 16
        %v1184 = vshll.u32 %v987, 16
        %v1186 = vrot.slane %v1184, 1
        %v1187 = vor.u32 %v1182, %v1186
        %v1189 = vshll.u32 %v1004, 16
        %v1191 = vrot.slane %v1189, 1
        %v1192 = vsel %vm1024, %v1187, %v1191
        %v1194 = vshrl.u32 %v988, 16
        %v1196 = vshll.u32 %v988, 16
        %v1198 = vrot.slane %v1196, 1
        %v1199 = vor.u32 %v1194, %v1198
        %v1201 = vshll.u32 %v1005, 16
        %v1203 = vrot.slane %v1201, 1
        %v1204 = vsel %vm1024, %v1199, %v1203
        %v1206 = vshrl.u32 %v989, 16
        %v1208 = vshll.u32 %v989, 16
        %v1210 = vrot.slane %v1208, 1
        %v1211 = vor.u32 %v1206, %v1210
        %v1213 = vshll.u32 %v1006, 16
        %v1215 = vrot.slane %v1213, 1
        %v1216 = vsel %vm1024, %v1211, %v1215
        %s1233 = scalar_lea.vmem [#allocation7], 64
        %v1234 = vld [vmem:[%s1233] sm:$0xf]
        %v1235 = vld [vmem:[%s1233 + $0x4] sm:$0xf]
        %v1236 = vld [vmem:[%s1233 + $0x8] sm:$0xf]
        %v1237 = vld [vmem:[%s1233 + $0xc] sm:$0xf]
        %v1238 = vld [vmem:[%s1233 + $0x10] sm:$0xf]
        %v1239 = vld [vmem:[%s1233 + $0x14] sm:$0xf]
        %v1240 = vld [vmem:[%s1233 + $0x18] sm:$0xf]
        %v1241 = vld [vmem:[%s1233 + $0x1c] sm:$0xf]
        %v1242 = vld [vmem:[%s1233 + $0x20] sm:$0xf]
        %v1243 = vld [vmem:[%s1233 + $0x24] sm:$0xf]
        %v1244 = vld [vmem:[%s1233 + $0x28] sm:$0xf]
        %v1245 = vld [vmem:[%s1233 + $0x2c] sm:$0xf]
        %v1246 = vld [vmem:[%s1233 + $0x30] sm:$0xf]
        %v1247 = vld [vmem:[%s1233 + $0x34] sm:$0xf]
        %v1248 = vld [vmem:[%s1233 + $0x38] sm:$0xf]
        %v1249 = vld [vmem:[%s1233 + $0x3c] sm:$0xf]
        %v1266 = vunpack.c.l.b16 %v1234
        %v1267 = vunpack.c.l.b16 %v1235
        %v1268 = vunpack.c.l.b16 %v1236
        %v1269 = vunpack.c.l.b16 %v1237
        %v1270 = vunpack.c.l.b16 %v1238
        %v1271 = vunpack.c.l.b16 %v1239
        %v1272 = vunpack.c.l.b16 %v1240
        %v1273 = vunpack.c.l.b16 %v1241
        %v1274 = vunpack.c.l.b16 %v1242
        %v1275 = vunpack.c.l.b16 %v1243
        %v1276 = vunpack.c.l.b16 %v1244
        %v1277 = vunpack.c.l.b16 %v1245
        %v1278 = vunpack.c.l.b16 %v1246
        %v1279 = vunpack.c.l.b16 %v1247
        %v1280 = vunpack.c.l.b16 %v1248
        %v1281 = vunpack.c.l.b16 %v1249
        %v1282 = vpack.c.b16 %v1267, %v1266
        %v1283 = vpack.c.b16 %v1269, %v1268
        %v1284 = vpack.c.b16 %v1271, %v1270
        %v1285 = vpack.c.b16 %v1273, %v1272
        %v1286 = vpack.c.b16 %v1275, %v1274
        %v1287 = vpack.c.b16 %v1277, %v1276
        %v1288 = vpack.c.b16 %v1279, %v1278
        %v1289 = vpack.c.b16 %v1281, %v1280
        %1298 = vmatprep.subr.bf16.mxu0 0
        %1299 = vmatpush1.bf16.msra.mxu0 %v1282
        %1300 = vmatprep.subr.bf16.mxu0 0
        %1301 = vmatpush1.bf16.msra.mxu0 %v1283
        %1302 = vmatprep.subr.bf16.mxu0 0
        %1303 = vmatpush1.bf16.msra.mxu0 %v1284
        %1304 = vmatprep.subr.bf16.mxu0 0
        %1305 = vmatpush1.bf16.msra.mxu0 %v1285
        %1306 = vmatprep.subr.bf16.mxu0 0
        %1307 = vmatpush1.bf16.msra.mxu0 %v1286
        %1308 = vmatprep.subr.bf16.mxu0 0
        %1309 = vmatpush1.bf16.msra.mxu0 %v1287
        %1310 = vmatprep.subr.bf16.mxu0 0
        %1311 = vmatpush1.bf16.msra.mxu0 %v1288
        %1312 = vmatprep.subr.bf16.mxu0 0
        %1313 = vmatpush1.bf16.msra.mxu0 %v1289
        %1314 = vmatprep.subr.bf16.mxu0 0
        %1315 = vmatpush1.bf16.msra.mxu0 0
        %1316 = vmatprep.subr.bf16.mxu0 0
        %1317 = vmatpush1.bf16.msra.mxu0 0
        %1318 = vmatprep.subr.bf16.mxu0 0
        %1319 = vmatpush1.bf16.msra.mxu0 0
        %1320 = vmatprep.subr.bf16.mxu0 0
        %1321 = vmatpush1.bf16.msra.mxu0 0
        %1322 = vmatprep.subr.bf16.mxu0 0
        %1323 = vmatpush1.bf16.msra.mxu0 0
        %1324 = vmatprep.subr.bf16.mxu0 0
        %1325 = vmatpush1.bf16.msra.mxu0 0
        %1326 = vmatprep.subr.bf16.mxu0 0
        %1327 = vmatpush1.bf16.msra.mxu0 0
        %1328 = vmatprep.subr.bf16.mxu0 0
        %1329 = vmatpush1.bf16.msra.mxu0 0
        %1330 = vmatprep.mubr.bf16.mxu0 0
        %1331 = vmatmul.mubr.bf16.gmra.mrb[0].mxu0 %v1036
        %v1332 = vpop.f32.mrb[0].mxu0
        %v1333 = vadd.f32 0.0, %v1332
        %v1334 = vpop.f32.mrb[0].mxu0
        %v1335 = vpop.f32.mrb[0].mxu0
        %v1336 = vadd.f32 0.0, %v1335
        %v1337 = vpop.f32.mrb[0].mxu0
        %1338 = vmatprep.mubr.bf16.mxu0 0
        %1339 = vmatmul.mubr.bf16.gmra.mrb[0].mxu0 %v1048
        %v1340 = vpop.f32.mrb[0].mxu0
        %v1341 = vadd.f32 0.0, %v1340
        %v1342 = vpop.f32.mrb[0].mxu0
        %v1343 = vpop.f32.mrb[0].mxu0
        %v1344 = vadd.f32 0.0, %v1343
        %v1345 = vpop.f32.mrb[0].mxu0
        %1346 = vmatprep.mubr.bf16.mxu0 0
        %1347 = vmatmul.mubr.bf16.gmra.mrb[0].mxu0 %v1060
        %v1348 = vpop.f32.mrb[0].mxu0
        %v1349 = vadd.f32 0.0, %v1348
        %v1350 = vpop.f32.mrb[0].mxu0
        %v1351 = vpop.f32.mrb[0].mxu0
        %v1352 = vadd.f32 0.0, %v1351
        %v1353 = vpop.f32.mrb[0].mxu0
        %1354 = vmatprep.mubr.bf16.mxu0 0
        %1355 = vmatmul.mubr.bf16.gmra.mrb[0].mxu0 %v1072
        %v1356 = vpop.f32.mrb[0].mxu0
        %v1357 = vadd.f32 0.0, %v1356
        %v1358 = vpop.f32.mrb[0].mxu0
        %v1359 = vpop.f32.mrb[0].mxu0
        %v1360 = vadd.f32 0.0, %v1359
        %v1361 = vpop.f32.mrb[0].mxu0
        %1362 = vmatprep.mubr.bf16.mxu0 0
        %1363 = vmatmul.mubr.bf16.gmra.mrb[0].mxu0 %v1084
        %v1364 = vpop.f32.mrb[0].mxu0
        %v1365 = vadd.f32 0.0, %v1364
        %v1366 = vpop.f32.mrb[0].mxu0
        %v1367 = vpop.f32.mrb[0].mxu0
        %v1368 = vadd.f32 0.0, %v1367
        %v1369 = vpop.f32.mrb[0].mxu0
        %1370 = vmatprep.mubr.bf16.mxu0 0
        %1371 = vmatmul.mubr.bf16.gmra.mrb[0].mxu0 %v1096
        %v1372 = vpop.f32.mrb[0].mxu0
        %v1373 = vadd.f32 0.0, %v1372
        %v1374 = vpop.f32.mrb[0].mxu0
        %v1375 = vpop.f32.mrb[0].mxu0
        %v1376 = vadd.f32 0.0, %v1375
        %v1377 = vpop.f32.mrb[0].mxu0
        %1378 = vmatprep.mubr.bf16.mxu0 0
        %1379 = vmatmul.mubr.bf16.gmra.mrb[0].mxu0 %v1108
        %v1380 = vpop.f32.mrb[0].mxu0
        %v1381 = vadd.f32 0.0, %v1380
        %v1382 = vpop.f32.mrb[0].mxu0
        %v1383 = vpop.f32.mrb[0].mxu0
        %v1384 = vadd.f32 0.0, %v1383
        %v1385 = vpop.f32.mrb[0].mxu0
        %1386 = vmatprep.mubr.bf16.mxu0 0
        %1387 = vmatmul.mubr.bf16.gmra.mrb[0].mxu0 %v1120
        %v1388 = vpop.f32.mrb[0].mxu0
        %v1389 = vadd.f32 0.0, %v1388
        %v1390 = vpop.f32.mrb[0].mxu0
        %v1391 = vpop.f32.mrb[0].mxu0
        %v1392 = vadd.f32 0.0, %v1391
        %v1393 = vpop.f32.mrb[0].mxu0
        %1394 = vmatprep.mubr.bf16.mxu0 0
        %1395 = vmatmul.mubr.bf16.gmra.mrb[0].mxu0 %v1132
        %v1396 = vpop.f32.mrb[0].mxu0
        %v1397 = vadd.f32 0.0, %v1396
        %v1398 = vpop.f32.mrb[0].mxu0
        %v1399 = vpop.f32.mrb[0].mxu0
        %v1400 = vadd.f32 0.0, %v1399
        %v1401 = vpop.f32.mrb[0].mxu0
        %1402 = vmatprep.mubr.bf16.mxu0 0
        %1403 = vmatmul.mubr.bf16.gmra.mrb[0].mxu0 %v1144
        %v1404 = vpop.f32.mrb[0].mxu0
        %v1405 = vadd.f32 0.0, %v1404
        %v1406 = vpop.f32.mrb[0].mxu0
        %v1407 = vpop.f32.mrb[0].mxu0
        %v1408 = vadd.f32 0.0, %v1407
        %v1409 = vpop.f32.mrb[0].mxu0
        %1410 = vmatprep.mubr.bf16.mxu0 0
        %1411 = vmatmul.mubr.bf16.gmra.mrb[0].mxu0 %v1156
        %v1412 = vpop.f32.mrb[0].mxu0
        %v1413 = vadd.f32 0.0, %v1412
        %v1414 = vpop.f32.mrb[0].mxu0
        %v1415 = vpop.f32.mrb[0].mxu0
        %v1416 = vadd.f32 0.0, %v1415
        %v1417 = vpop.f32.mrb[0].mxu0
        %1418 = vmatprep.mubr.bf16.mxu0 0
        %1419 = vmatmul.mubr.bf16.gmra.mrb[0].mxu0 %v1168
        %v1420 = vpop.f32.mrb[0].mxu0
        %v1421 = vadd.f32 0.0, %v1420
        %v1422 = vpop.f32.mrb[0].mxu0
        %v1423 = vpop.f32.mrb[0].mxu0
        %v1424 = vadd.f32 0.0, %v1423
        %v1425 = vpop.f32.mrb[0].mxu0
        %1426 = vmatprep.mubr.bf16.mxu0 0
        %1427 = vmatmul.mubr.bf16.gmra.mrb[0].mxu0 %v1180
        %v1428 = vpop.f32.mrb[0].mxu0
        %v1429 = vadd.f32 0.0, %v1428
        %v1430 = vpop.f32.mrb[0].mxu0
        %v1431 = vpop.f32.mrb[0].mxu0
        %v1432 = vadd.f32 0.0, %v1431
        %v1433 = vpop.f32.mrb[0].mxu0
        %1434 = vmatprep.mubr.bf16.mxu0 0
        %1435 = vmatmul.mubr.bf16.gmra.mrb[0].mxu0 %v1192
        %v1436 = vpop.f32.mrb[0].mxu0
        %v1437 = vadd.f32 0.0, %v1436
        %v1438 = vpop.f32.mrb[0].mxu0
        %v1439 = vpop.f32.mrb[0].mxu0
        %v1440 = vadd.f32 0.0, %v1439
        %v1441 = vpop.f32.mrb[0].mxu0
        %1442 = vmatprep.mubr.bf16.mxu0 0
        %1443 = vmatmul.mubr.bf16.gmra.mrb[0].mxu0 %v1204
        %v1444 = vpop.f32.mrb[0].mxu0
        %v1445 = vadd.f32 0.0, %v1444
        %v1446 = vpop.f32.mrb[0].mxu0
        %v1447 = vpop.f32.mrb[0].mxu0
        %v1448 = vadd.f32 0.0, %v1447
        %v1449 = vpop.f32.mrb[0].mxu0
        %1450 = vmatprep.mubr.bf16.mxu0 0
        %1451 = vmatmul.mubr.bf16.gmra.mrb[0].mxu0 %v1216
        %v1452 = vpop.f32.mrb[0].mxu0
        %v1453 = vadd.f32 0.0, %v1452
        %v1454 = vpop.f32.mrb[0].mxu0
        %v1455 = vpop.f32.mrb[0].mxu0
        %v1456 = vadd.f32 0.0, %v1455
        %v1457 = vpop.f32.mrb[0].mxu0
        %1458 = vdwg.mxu0
        %v1475 = vunpack.c.l.b16 %v1008
        %v1476 = vunpack.c.l.b16 %v1009
        %v1477 = vunpack.c.l.b16 %v1010
        %v1478 = vunpack.c.l.b16 %v1011
        %v1479 = vunpack.c.l.b16 %v1012
        %v1480 = vunpack.c.l.b16 %v1013
        %v1481 = vunpack.c.l.b16 %v1014
        %v1482 = vunpack.c.l.b16 %v1015
        %v1483 = vunpack.c.l.b16 %v1016
        %v1484 = vunpack.c.l.b16 %v1017
        %v1485 = vunpack.c.l.b16 %v1018
        %v1486 = vunpack.c.l.b16 %v1019
        %v1487 = vunpack.c.l.b16 %v1020
        %v1488 = vunpack.c.l.b16 %v1021
        %v1489 = vunpack.c.l.b16 %v1022
        %v1490 = vunpack.c.l.b16 %v1023
        %v1491 = vpack.c.b16 %v1476, %v1475
        %v1492 = vpack.c.b16 %v1478, %v1477
        %v1493 = vpack.c.b16 %v1480, %v1479
        %v1494 = vpack.c.b16 %v1482, %v1481
        %v1495 = vpack.c.b16 %v1484, %v1483
        %v1496 = vpack.c.b16 %v1486, %v1485
        %v1497 = vpack.c.b16 %v1488, %v1487
        %v1498 = vpack.c.b16 %v1490, %v1489
        %1507 = vmatprep.subr.bf16.mxu0 0
        %1508 = vmatpush1.bf16.msra.mxu0 %v1491
        %1509 = vmatprep.subr.bf16.mxu0 0
        %1510 = vmatpush1.bf16.msra.mxu0 %v1492
        %1511 = vmatprep.subr.bf16.mxu0 0
        %1512 = vmatpush1.bf16.msra.mxu0 %v1493
        %1513 = vmatprep.subr.bf16.mxu0 0
        %1514 = vmatpush1.bf16.msra.mxu0 %v1494
        %1515 = vmatprep.subr.bf16.mxu0 0
        %1516 = vmatpush1.bf16.msra.mxu0 %v1495
        %1517 = vmatprep.subr.bf16.mxu0 0
        %1518 = vmatpush1.bf16.msra.mxu0 %v1496
        %1519 = vmatprep.subr.bf16.mxu0 0
        %1520 = vmatpush1.bf16.msra.mxu0 %v1497
        %1521 = vmatprep.subr.bf16.mxu0 0
        %1522 = vmatpush1.bf16.msra.mxu0 %v1498
        %1523 = vmatprep.subr.bf16.mxu0 0
        %1524 = vmatpush1.bf16.msra.mxu0 0
        %1525 = vmatprep.subr.bf16.mxu0 0
        %1526 = vmatpush1.bf16.msra.mxu0 0
        %1527 = vmatprep.subr.bf16.mxu0 0
        %1528 = vmatpush1.bf16.msra.mxu0 0
        %1529 = vmatprep.subr.bf16.mxu0 0
        %1530 = vmatpush1.bf16.msra.mxu0 0
        %1531 = vmatprep.subr.bf16.mxu0 0
        %1532 = vmatpush1.bf16.msra.mxu0 0
        %1533 = vmatprep.subr.bf16.mxu0 0
        %1534 = vmatpush1.bf16.msra.mxu0 0
        %1535 = vmatprep.subr.bf16.mxu0 0
        %1536 = vmatpush1.bf16.msra.mxu0 0
        %1537 = vmatprep.subr.bf16.mxu0 0
        %1538 = vmatpush1.bf16.msra.mxu0 0
        %1539 = vmatprep.mubr.bf16.mxu0 0
        %1540 = vmatmul.mubr.bf16.gmra.mrb[0].mxu0 %v974
        %v1541 = vpop.f32.mrb[0].mxu0
        %v1542 = vadd.f32 %v1333, %v1541
        %v1543 = vpop.f32.mrb[0].mxu0
        %v1544 = vpop.f32.mrb[0].mxu0
        %v1545 = vadd.f32 %v1336, %v1544
        %v1546 = vpop.f32.mrb[0].mxu0
        %1547 = vmatprep.mubr.bf16.mxu0 0
        %1548 = vmatmul.mubr.bf16.gmra.mrb[0].mxu0 %v975
        %v1549 = vpop.f32.mrb[0].mxu0
        %v1550 = vadd.f32 %v1341, %v1549
        %v1551 = vpop.f32.mrb[0].mxu0
        %v1552 = vpop.f32.mrb[0].mxu0
        %v1553 = vadd.f32 %v1344, %v1552
        %v1554 = vpop.f32.mrb[0].mxu0
        %1555 = vmatprep.mubr.bf16.mxu0 0
        %1556 = vmatmul.mubr.bf16.gmra.mrb[0].mxu0 %v976
        %v1557 = vpop.f32.mrb[0].mxu0
        %v1558 = vadd.f32 %v1349, %v1557
        %v1559 = vpop.f32.mrb[0].mxu0
        %v1560 = vpop.f32.mrb[0].mxu0
        %v1561 = vadd.f32 %v1352, %v1560
        %v1562 = vpop.f32.mrb[0].mxu0
        %1563 = vmatprep.mubr.bf16.mxu0 0
        %1564 = vmatmul.mubr.bf16.gmra.mrb[0].mxu0 %v977
        %v1565 = vpop.f32.mrb[0].mxu0
        %v1566 = vadd.f32 %v1357, %v1565
        %v1567 = vpop.f32.mrb[0].mxu0
        %v1568 = vpop.f32.mrb[0].mxu0
        %v1569 = vadd.f32 %v1360, %v1568
        %v1570 = vpop.f32.mrb[0].mxu0
        %1571 = vmatprep.mubr.bf16.mxu0 0
        %1572 = vmatmul.mubr.bf16.gmra.mrb[0].mxu0 %v978
        %v1573 = vpop.f32.mrb[0].mxu0
        %v1574 = vadd.f32 %v1365, %v1573
        %v1575 = vpop.f32.mrb[0].mxu0
        %v1576 = vpop.f32.mrb[0].mxu0
        %v1577 = vadd.f32 %v1368, %v1576
        %v1578 = vpop.f32.mrb[0].mxu0
        %1579 = vmatprep.mubr.bf16.mxu0 0
        %1580 = vmatmul.mubr.bf16.gmra.mrb[0].mxu0 %v979
        %v1581 = vpop.f32.mrb[0].mxu0
        %v1582 = vadd.f32 %v1373, %v1581
        %v1583 = vpop.f32.mrb[0].mxu0
        %v1584 = vpop.f32.mrb[0].mxu0
        %v1585 = vadd.f32 %v1376, %v1584
        %v1586 = vpop.f32.mrb[0].mxu0
        %1587 = vmatprep.mubr.bf16.mxu0 0
        %1588 = vmatmul.mubr.bf16.gmra.mrb[0].mxu0 %v980
        %v1589 = vpop.f32.mrb[0].mxu0
        %v1590 = vadd.f32 %v1381, %v1589
        %v1591 = vpop.f32.mrb[0].mxu0
        %v1592 = vpop.f32.mrb[0].mxu0
        %v1593 = vadd.f32 %v1384, %v1592
        %v1594 = vpop.f32.mrb[0].mxu0
        %1595 = vmatprep.mubr.bf16.mxu0 0
        %1596 = vmatmul.mubr.bf16.gmra.mrb[0].mxu0 %v981
        %v1597 = vpop.f32.mrb[0].mxu0
        %v1598 = vadd.f32 %v1389, %v1597
        %v1599 = vpop.f32.mrb[0].mxu0
        %v1600 = vpop.f32.mrb[0].mxu0
        %v1601 = vadd.f32 %v1392, %v1600
        %v1602 = vpop.f32.mrb[0].mxu0
        %1603 = vmatprep.mubr.bf16.mxu0 0
        %1604 = vmatmul.mubr.bf16.gmra.mrb[0].mxu0 %v982
        %v1605 = vpop.f32.mrb[0].mxu0
        %v1606 = vadd.f32 %v1397, %v1605
        %v1607 = vpop.f32.mrb[0].mxu0
        %v1608 = vpop.f32.mrb[0].mxu0
        %v1609 = vadd.f32 %v1400, %v1608
        %v1610 = vpop.f32.mrb[0].mxu0
        %1611 = vmatprep.mubr.bf16.mxu0 0
        %1612 = vmatmul.mubr.bf16.gmra.mrb[0].mxu0 %v983
        %v1613 = vpop.f32.mrb[0].mxu0
        %v1614 = vadd.f32 %v1405, %v1613
        %v1615 = vpop.f32.mrb[0].mxu0
        %v1616 = vpop.f32.mrb[0].mxu0
        %v1617 = vadd.f32 %v1408, %v1616
        %v1618 = vpop.f32.mrb[0].mxu0
        %1619 = vmatprep.mubr.bf16.mxu0 0
        %1620 = vmatmul.mubr.bf16.gmra.mrb[0].mxu0 %v984
        %v1621 = vpop.f32.mrb[0].mxu0
        %v1622 = vadd.f32 %v1413, %v1621
        %v1623 = vpop.f32.mrb[0].mxu0
        %v1624 = vpop.f32.mrb[0].mxu0
        %v1625 = vadd.f32 %v1416, %v1624
        %v1626 = vpop.f32.mrb[0].mxu0
        %1627 = vmatprep.mubr.bf16.mxu0 0
        %1628 = vmatmul.mubr.bf16.gmra.mrb[0].mxu0 %v985
        %v1629 = vpop.f32.mrb[0].mxu0
        %v1630 = vadd.f32 %v1421, %v1629
        %v1631 = vpop.f32.mrb[0].mxu0
        %v1632 = vpop.f32.mrb[0].mxu0
        %v1633 = vadd.f32 %v1424, %v1632
        %v1634 = vpop.f32.mrb[0].mxu0
        %1635 = vmatprep.mubr.bf16.mxu0 0
        %1636 = vmatmul.mubr.bf16.gmra.mrb[0].mxu0 %v986
        %v1637 = vpop.f32.mrb[0].mxu0
        %v1638 = vadd.f32 %v1429, %v1637
        %v1639 = vpop.f32.mrb[0].mxu0
        %v1640 = vpop.f32.mrb[0].mxu0
        %v1641 = vadd.f32 %v1432, %v1640
        %v1642 = vpop.f32.mrb[0].mxu0
        %1643 = vmatprep.mubr.bf16.mxu0 0
        %1644 = vmatmul.mubr.bf16.gmra.mrb[0].mxu0 %v987
        %v1645 = vpop.f32.mrb[0].mxu0
        %v1646 = vadd.f32 %v1437, %v1645
        %v1647 = vpop.f32.mrb[0].mxu0
        %v1648 = vpop.f32.mrb[0].mxu0
        %v1649 = vadd.f32 %v1440, %v1648
        %v1650 = vpop.f32.mrb[0].mxu0
        %1651 = vmatprep.mubr.bf16.mxu0 0
        %1652 = vmatmul.mubr.bf16.gmra.mrb[0].mxu0 %v988
        %v1653 = vpop.f32.mrb[0].mxu0
        %v1654 = vadd.f32 %v1445, %v1653
        %v1655 = vpop.f32.mrb[0].mxu0
        %v1656 = vpop.f32.mrb[0].mxu0
        %v1657 = vadd.f32 %v1448, %v1656
        %v1658 = vpop.f32.mrb[0].mxu0
        %1659 = vmatprep.mubr.bf16.mxu0 0
        %1660 = vmatmul.mubr.bf16.gmra.mrb[0].mxu0 %v989
        %v1661 = vpop.f32.mrb[0].mxu0
        %v1662 = vadd.f32 %v1453, %v1661
        %v1663 = vpop.f32.mrb[0].mxu0
        %v1664 = vpop.f32.mrb[0].mxu0
        %v1665 = vadd.f32 %v1456, %v1664
        %v1666 = vpop.f32.mrb[0].mxu0
        %1667 = vdwg.mxu0
        %vm1700 = vcmask 1046528
        %v1701 = vrot.slane %v974, 1
        %v1702 = vrot.slane %v991, 1
        %v1703 = vsel %vm1700, %v1701, %v1702
        %v1704 = vrot.slane %v975, 1
        %v1705 = vrot.slane %v992, 1
        %v1706 = vsel %vm1700, %v1704, %v1705
        %v1707 = vrot.slane %v976, 1
        %v1708 = vrot.slane %v993, 1
        %v1709 = vsel %vm1700, %v1707, %v1708
        %v1710 = vrot.slane %v977, 1
        %v1711 = vrot.slane %v994, 1
        %v1712 = vsel %vm1700, %v1710, %v1711
        %v1713 = vrot.slane %v978, 1
        %v1714 = vrot.slane %v995, 1
        %v1715 = vsel %vm1700, %v1713, %v1714
        %v1716 = vrot.slane %v979, 1
        %v1717 = vrot.slane %v996, 1
        %v1718 = vsel %vm1700, %v1716, %v1717
        %v1719 = vrot.slane %v980, 1
        %v1720 = vrot.slane %v997, 1
        %v1721 = vsel %vm1700, %v1719, %v1720
        %v1722 = vrot.slane %v981, 1
        %v1723 = vrot.slane %v998, 1
        %v1724 = vsel %vm1700, %v1722, %v1723
        %v1725 = vrot.slane %v982, 1
        %v1726 = vrot.slane %v999, 1
        %v1727 = vsel %vm1700, %v1725, %v1726
        %v1728 = vrot.slane %v983, 1
        %v1729 = vrot.slane %v1000, 1
        %v1730 = vsel %vm1700, %v1728, %v1729
        %v1731 = vrot.slane %v984, 1
        %v1732 = vrot.slane %v1001, 1
        %v1733 = vsel %vm1700, %v1731, %v1732
        %v1734 = vrot.slane %v985, 1
        %v1735 = vrot.slane %v1002, 1
        %v1736 = vsel %vm1700, %v1734, %v1735
        %v1737 = vrot.slane %v986, 1
        %v1738 = vrot.slane %v1003, 1
        %v1739 = vsel %vm1700, %v1737, %v1738
        %v1740 = vrot.slane %v987, 1
        %v1741 = vrot.slane %v1004, 1
        %v1742 = vsel %vm1700, %v1740, %v1741
        %v1743 = vrot.slane %v988, 1
        %v1744 = vrot.slane %v1005, 1
        %v1745 = vsel %vm1700, %v1743, %v1744
        %v1746 = vrot.slane %v989, 1
        %v1747 = vrot.slane %v1006, 1
        %v1748 = vsel %vm1700, %v1746, %v1747
        %s1765 = scalar_lea.vmem [#allocation7], 128
        %v1766 = vld [vmem:[%s1765] sm:$0xf]
        %v1767 = vld [vmem:[%s1765 + $0x4] sm:$0xf]
        %v1768 = vld [vmem:[%s1765 + $0x8] sm:$0xf]
        %v1769 = vld [vmem:[%s1765 + $0xc] sm:$0xf]
        %v1770 = vld [vmem:[%s1765 + $0x10] sm:$0xf]
        %v1771 = vld [vmem:[%s1765 + $0x14] sm:$0xf]
        %v1772 = vld [vmem:[%s1765 + $0x18] sm:$0xf]
        %v1773 = vld [vmem:[%s1765 + $0x1c] sm:$0xf]
        %v1774 = vld [vmem:[%s1765 + $0x20] sm:$0xf]
        %v1775 = vld [vmem:[%s1765 + $0x24] sm:$0xf]
        %v1776 = vld [vmem:[%s1765 + $0x28] sm:$0xf]
        %v1777 = vld [vmem:[%s1765 + $0x2c] sm:$0xf]
        %v1778 = vld [vmem:[%s1765 + $0x30] sm:$0xf]
        %v1779 = vld [vmem:[%s1765 + $0x34] sm:$0xf]
        %v1780 = vld [vmem:[%s1765 + $0x38] sm:$0xf]
        %v1781 = vld [vmem:[%s1765 + $0x3c] sm:$0xf]
        %v1798 = vunpack.c.l.b16 %v1766
        %v1799 = vunpack.c.l.b16 %v1767
        %v1800 = vunpack.c.l.b16 %v1768
        %v1801 = vunpack.c.l.b16 %v1769
        %v1802 = vunpack.c.l.b16 %v1770
        %v1803 = vunpack.c.l.b16 %v1771
        %v1804 = vunpack.c.l.b16 %v1772
        %v1805 = vunpack.c.l.b16 %v1773
        %v1806 = vunpack.c.l.b16 %v1774
        %v1807 = vunpack.c.l.b16 %v1775
        %v1808 = vunpack.c.l.b16 %v1776
        %v1809 = vunpack.c.l.b16 %v1777
        %v1810 = vunpack.c.l.b16 %v1778
        %v1811 = vunpack.c.l.b16 %v1779
        %v1812 = vunpack.c.l.b16 %v1780
        %v1813 = vunpack.c.l.b16 %v1781
        %v1814 = vpack.c.b16 %v1799, %v1798
        %v1815 = vpack.c.b16 %v1801, %v1800
        %v1816 = vpack.c.b16 %v1803, %v1802
        %v1817 = vpack.c.b16 %v1805, %v1804
        %v1818 = vpack.c.b16 %v1807, %v1806
        %v1819 = vpack.c.b16 %v1809, %v1808
        %v1820 = vpack.c.b16 %v1811, %v1810
        %v1821 = vpack.c.b16 %v1813, %v1812
        %1830 = vmatprep.subr.bf16.mxu0 0
        %1831 = vmatpush1.bf16.msra.mxu0 %v1814
        %1832 = vmatprep.subr.bf16.mxu0 0
        %1833 = vmatpush1.bf16.msra.mxu0 %v1815
        %1834 = vmatprep.subr.bf16.mxu0 0
        %1835 = vmatpush1.bf16.msra.mxu0 %v1816
        %1836 = vmatprep.subr.bf16.mxu0 0
        %1837 = vmatpush1.bf16.msra.mxu0 %v1817
        %1838 = vmatprep.subr.bf16.mxu0 0
        %1839 = vmatpush1.bf16.msra.mxu0 %v1818
        %1840 = vmatprep.subr.bf16.mxu0 0
        %1841 = vmatpush1.bf16.msra.mxu0 %v1819
        %1842 = vmatprep.subr.bf16.mxu0 0
        %1843 = vmatpush1.bf16.msra.mxu0 %v1820
        %1844 = vmatprep.subr.bf16.mxu0 0
        %1845 = vmatpush1.bf16.msra.mxu0 %v1821
        %1846 = vmatprep.subr.bf16.mxu0 0
        %1847 = vmatpush1.bf16.msra.mxu0 0
        %1848 = vmatprep.subr.bf16.mxu0 0
        %1849 = vmatpush1.bf16.msra.mxu0 0
        %1850 = vmatprep.subr.bf16.mxu0 0
        %1851 = vmatpush1.bf16.msra.mxu0 0
        %1852 = vmatprep.subr.bf16.mxu0 0
        %1853 = vmatpush1.bf16.msra.mxu0 0
        %1854 = vmatprep.subr.bf16.mxu0 0
        %1855 = vmatpush1.bf16.msra.mxu0 0
        %1856 = vmatprep.subr.bf16.mxu0 0
        %1857 = vmatpush1.bf16.msra.mxu0 0
        %1858 = vmatprep.subr.bf16.mxu0 0
        %1859 = vmatpush1.bf16.msra.mxu0 0
        %1860 = vmatprep.subr.bf16.mxu0 0
        %1861 = vmatpush1.bf16.msra.mxu0 0
        %1862 = vmatprep.mubr.bf16.mxu0 0
        %1863 = vmatmul.mubr.bf16.gmra.mrb[0].mxu0 %v1703
        %v1864 = vpop.f32.mrb[0].mxu0
        %v1865 = vadd.f32 0.0, %v1864
        %v1866 = vpop.f32.mrb[0].mxu0
        %v1867 = vpop.f32.mrb[0].mxu0
        %v1868 = vadd.f32 0.0, %v1867
        %v1869 = vpop.f32.mrb[0].mxu0
        %1870 = vmatprep.mubr.bf16.mxu0 0
        %1871 = vmatmul.mubr.bf16.gmra.mrb[0].mxu0 %v1706
        %v1872 = vpop.f32.mrb[0].mxu0
        %v1873 = vadd.f32 0.0, %v1872
        %v1874 = vpop.f32.mrb[0].mxu0
        %v1875 = vpop.f32.mrb[0].mxu0
        %v1876 = vadd.f32 0.0, %v1875
        %v1877 = vpop.f32.mrb[0].mxu0
        %1878 = vmatprep.mubr.bf16.mxu0 0
        %1879 = vmatmul.mubr.bf16.gmra.mrb[0].mxu0 %v1709
        %v1880 = vpop.f32.mrb[0].mxu0
        %v1881 = vadd.f32 0.0, %v1880
        %v1882 = vpop.f32.mrb[0].mxu0
        %v1883 = vpop.f32.mrb[0].mxu0
        %v1884 = vadd.f32 0.0, %v1883
        %v1885 = vpop.f32.mrb[0].mxu0
        %1886 = vmatprep.mubr.bf16.mxu0 0
        %1887 = vmatmul.mubr.bf16.gmra.mrb[0].mxu0 %v1712
        %v1888 = vpop.f32.mrb[0].mxu0
        %v1889 = vadd.f32 0.0, %v1888
        %v1890 = vpop.f32.mrb[0].mxu0
        %v1891 = vpop.f32.mrb[0].mxu0
        %v1892 = vadd.f32 0.0, %v1891
        %v1893 = vpop.f32.mrb[0].mxu0
        %1894 = vmatprep.mubr.bf16.mxu0 0
        %1895 = vmatmul.mubr.bf16.gmra.mrb[0].mxu0 %v1715
        %v1896 = vpop.f32.mrb[0].mxu0
        %v1897 = vadd.f32 0.0, %v1896
        %v1898 = vpop.f32.mrb[0].mxu0
        %v1899 = vpop.f32.mrb[0].mxu0
        %v1900 = vadd.f32 0.0, %v1899
        %v1901 = vpop.f32.mrb[0].mxu0
        %1902 = vmatprep.mubr.bf16.mxu0 0
        %1903 = vmatmul.mubr.bf16.gmra.mrb[0].mxu0 %v1718
        %v1904 = vpop.f32.mrb[0].mxu0
        %v1905 = vadd.f32 0.0, %v1904
        %v1906 = vpop.f32.mrb[0].mxu0
        %v1907 = vpop.f32.mrb[0].mxu0
        %v1908 = vadd.f32 0.0, %v1907
        %v1909 = vpop.f32.mrb[0].mxu0
        %1910 = vmatprep.mubr.bf16.mxu0 0
        %1911 = vmatmul.mubr.bf16.gmra.mrb[0].mxu0 %v1721
        %v1912 = vpop.f32.mrb[0].mxu0
        %v1913 = vadd.f32 0.0, %v1912
        %v1914 = vpop.f32.mrb[0].mxu0
        %v1915 = vpop.f32.mrb[0].mxu0
        %v1916 = vadd.f32 0.0, %v1915
        %v1917 = vpop.f32.mrb[0].mxu0
        %1918 = vmatprep.mubr.bf16.mxu0 0
        %1919 = vmatmul.mubr.bf16.gmra.mrb[0].mxu0 %v1724
        %v1920 = vpop.f32.mrb[0].mxu0
        %v1921 = vadd.f32 0.0, %v1920
        %v1922 = vpop.f32.mrb[0].mxu0
        %v1923 = vpop.f32.mrb[0].mxu0
        %v1924 = vadd.f32 0.0, %v1923
        %v1925 = vpop.f32.mrb[0].mxu0
        %1926 = vmatprep.mubr.bf16.mxu0 0
        %1927 = vmatmul.mubr.bf16.gmra.mrb[0].mxu0 %v1727
        %v1928 = vpop.f32.mrb[0].mxu0
        %v1929 = vadd.f32 0.0, %v1928
        %v1930 = vpop.f32.mrb[0].mxu0
        %v1931 = vpop.f32.mrb[0].mxu0
        %v1932 = vadd.f32 0.0, %v1931
        %v1933 = vpop.f32.mrb[0].mxu0
        %1934 = vmatprep.mubr.bf16.mxu0 0
        %1935 = vmatmul.mubr.bf16.gmra.mrb[0].mxu0 %v1730
        %v1936 = vpop.f32.mrb[0].mxu0
        %v1937 = vadd.f32 0.0, %v1936
        %v1938 = vpop.f32.mrb[0].mxu0
        %v1939 = vpop.f32.mrb[0].mxu0
        %v1940 = vadd.f32 0.0, %v1939
        %v1941 = vpop.f32.mrb[0].mxu0
        %1942 = vmatprep.mubr.bf16.mxu0 0
        %1943 = vmatmul.mubr.bf16.gmra.mrb[0].mxu0 %v1733
        %v1944 = vpop.f32.mrb[0].mxu0
        %v1945 = vadd.f32 0.0, %v1944
        %v1946 = vpop.f32.mrb[0].mxu0
        %v1947 = vpop.f32.mrb[0].mxu0
        %v1948 = vadd.f32 0.0, %v1947
        %v1949 = vpop.f32.mrb[0].mxu0
        %1950 = vmatprep.mubr.bf16.mxu0 0
        %1951 = vmatmul.mubr.bf16.gmra.mrb[0].mxu0 %v1736
        %v1952 = vpop.f32.mrb[0].mxu0
        %v1953 = vadd.f32 0.0, %v1952
        %v1954 = vpop.f32.mrb[0].mxu0
        %v1955 = vpop.f32.mrb[0].mxu0
        %v1956 = vadd.f32 0.0, %v1955
        %v1957 = vpop.f32.mrb[0].mxu0
        %1958 = vmatprep.mubr.bf16.mxu0 0
        %1959 = vmatmul.mubr.bf16.gmra.mrb[0].mxu0 %v1739
        %v1960 = vpop.f32.mrb[0].mxu0
        %v1961 = vadd.f32 0.0, %v1960
        %v1962 = vpop.f32.mrb[0].mxu0
        %v1963 = vpop.f32.mrb[0].mxu0
        %v1964 = vadd.f32 0.0, %v1963
        %v1965 = vpop.f32.mrb[0].mxu0
        %1966 = vmatprep.mubr.bf16.mxu0 0
        %1967 = vmatmul.mubr.bf16.gmra.mrb[0].mxu0 %v1742
        %v1968 = vpop.f32.mrb[0].mxu0
        %v1969 = vadd.f32 0.0, %v1968
        %v1970 = vpop.f32.mrb[0].mxu0
        %v1971 = vpop.f32.mrb[0].mxu0
        %v1972 = vadd.f32 0.0, %v1971
        %v1973 = vpop.f32.mrb[0].mxu0
        %1974 = vmatprep.mubr.bf16.mxu0 0
        %1975 = vmatmul.mubr.bf16.gmra.mrb[0].mxu0 %v1745
        %v1976 = vpop.f32.mrb[0].mxu0
        %v1977 = vadd.f32 0.0, %v1976
        %v1978 = vpop.f32.mrb[0].mxu0
        %v1979 = vpop.f32.mrb[0].mxu0
        %v1980 = vadd.f32 0.0, %v1979
        %v1981 = vpop.f32.mrb[0].mxu0
        %1982 = vmatprep.mubr.bf16.mxu0 0
        %1983 = vmatmul.mubr.bf16.gmra.mrb[0].mxu0 %v1748
        %v1984 = vpop.f32.mrb[0].mxu0
        %v1985 = vadd.f32 0.0, %v1984
        %v1986 = vpop.f32.mrb[0].mxu0
        %v1987 = vpop.f32.mrb[0].mxu0
        %v1988 = vadd.f32 0.0, %v1987
        %v1989 = vpop.f32.mrb[0].mxu0
        %1990 = vdwg.mxu0
        %v1991 = vadd.f32 %v1542, %v1865
        %v1992 = vadd.f32 %v1545, %v1868
        %v1993 = vadd.f32 %v1550, %v1873
        %v1994 = vadd.f32 %v1553, %v1876
        %v1995 = vadd.f32 %v1558, %v1881
        %v1996 = vadd.f32 %v1561, %v1884
        %v1997 = vadd.f32 %v1566, %v1889
        %v1998 = vadd.f32 %v1569, %v1892
        %v1999 = vadd.f32 %v1574, %v1897
        %v2000 = vadd.f32 %v1577, %v1900
        %v2001 = vadd.f32 %v1582, %v1905
        %v2002 = vadd.f32 %v1585, %v1908
        %v2003 = vadd.f32 %v1590, %v1913
        %v2004 = vadd.f32 %v1593, %v1916
        %v2005 = vadd.f32 %v1598, %v1921
        %v2006 = vadd.f32 %v1601, %v1924
        %v2007 = vadd.f32 %v1606, %v1929
        %v2008 = vadd.f32 %v1609, %v1932
        %v2009 = vadd.f32 %v1614, %v1937
        %v2010 = vadd.f32 %v1617, %v1940
        %v2011 = vadd.f32 %v1622, %v1945
        %v2012 = vadd.f32 %v1625, %v1948
        %v2013 = vadd.f32 %v1630, %v1953
        %v2014 = vadd.f32 %v1633, %v1956
        %v2015 = vadd.f32 %v1638, %v1961
        %v2016 = vadd.f32 %v1641, %v1964
        %v2017 = vadd.f32 %v1646, %v1969
        %v2018 = vadd.f32 %v1649, %v1972
        %v2019 = vadd.f32 %v1654, %v1977
        %v2020 = vadd.f32 %v1657, %v1980
        %v2021 = vadd.f32 %v1662, %v1985
        %v2022 = vadd.f32 %v1665, %v1988
        %s2023 = scalar_lea.vmem [#allocation7], 192
        %v2024 = vld [vmem:[%s2023] sm:$0xf]
        %v2025 = vld [vmem:[%s2023 + $0x4] sm:$0xf]
        %v2026 = vld [vmem:[%s2023 + $0x8] sm:$0xf]
        %v2027 = vld [vmem:[%s2023 + $0xc] sm:$0xf]
        %v2028 = vld [vmem:[%s2023 + $0x10] sm:$0xf]
        %v2029 = vld [vmem:[%s2023 + $0x14] sm:$0xf]
        %v2030 = vld [vmem:[%s2023 + $0x18] sm:$0xf]
        %v2031 = vld [vmem:[%s2023 + $0x1c] sm:$0xf]
        %v2032 = vld [vmem:[%s2023 + $0x20] sm:$0xf]
        %v2033 = vld [vmem:[%s2023 + $0x24] sm:$0xf]
        %v2034 = vld [vmem:[%s2023 + $0x28] sm:$0xf]
        %v2035 = vld [vmem:[%s2023 + $0x2c] sm:$0xf]
        %v2036 = vld [vmem:[%s2023 + $0x30] sm:$0xf]
        %v2037 = vld [vmem:[%s2023 + $0x34] sm:$0xf]
        %v2038 = vld [vmem:[%s2023 + $0x38] sm:$0xf]
        %v2039 = vld [vmem:[%s2023 + $0x3c] sm:$0xf]
        %v2056 = vunpack.c.l.b16 %v2024
        %v2057 = vunpack.c.l.b16 %v2025
        %v2058 = vunpack.c.l.b16 %v2026
        %v2059 = vunpack.c.l.b16 %v2027
        %v2060 = vunpack.c.l.b16 %v2028
        %v2061 = vunpack.c.l.b16 %v2029
        %v2062 = vunpack.c.l.b16 %v2030
        %v2063 = vunpack.c.l.b16 %v2031
        %v2064 = vunpack.c.l.b16 %v2032
        %v2065 = vunpack.c.l.b16 %v2033
        %v2066 = vunpack.c.l.b16 %v2034
        %v2067 = vunpack.c.l.b16 %v2035
        %v2068 = vunpack.c.l.b16 %v2036
        %v2069 = vunpack.c.l.b16 %v2037
        %v2070 = vunpack.c.l.b16 %v2038
        %v2071 = vunpack.c.l.b16 %v2039
        %v2072 = vpack.c.b16 %v2057, %v2056
        %v2073 = vpack.c.b16 %v2059, %v2058
        %v2074 = vpack.c.b16 %v2061, %v2060
        %v2075 = vpack.c.b16 %v2063, %v2062
        %v2076 = vpack.c.b16 %v2065, %v2064
        %v2077 = vpack.c.b16 %v2067, %v2066
        %v2078 = vpack.c.b16 %v2069, %v2068
        %v2079 = vpack.c.b16 %v2071, %v2070
        %2088 = vmatprep.subr.bf16.mxu0 0
        %2089 = vmatpush1.bf16.msra.mxu0 %v2072
        %2090 = vmatprep.subr.bf16.mxu0 0
        %2091 = vmatpush1.bf16.msra.mxu0 %v2073
        %2092 = vmatprep.subr.bf16.mxu0 0
        %2093 = vmatpush1.bf16.msra.mxu0 %v2074
        %2094 = vmatprep.subr.bf16.mxu0 0
        %2095 = vmatpush1.bf16.msra.mxu0 %v2075
        %2096 = vmatprep.subr.bf16.mxu0 0
        %2097 = vmatpush1.bf16.msra.mxu0 %v2076
        %2098 = vmatprep.subr.bf16.mxu0 0
        %2099 = vmatpush1.bf16.msra.mxu0 %v2077
        %2100 = vmatprep.subr.bf16.mxu0 0
        %2101 = vmatpush1.bf16.msra.mxu0 %v2078
        %2102 = vmatprep.subr.bf16.mxu0 0
        %2103 = vmatpush1.bf16.msra.mxu0 %v2079
        %2104 = vmatprep.subr.bf16.mxu0 0
        %2105 = vmatpush1.bf16.msra.mxu0 0
        %2106 = vmatprep.subr.bf16.mxu0 0
        %2107 = vmatpush1.bf16.msra.mxu0 0
        %2108 = vmatprep.subr.bf16.mxu0 0
        %2109 = vmatpush1.bf16.msra.mxu0 0
        %2110 = vmatprep.subr.bf16.mxu0 0
        %2111 = vmatpush1.bf16.msra.mxu0 0
        %2112 = vmatprep.subr.bf16.mxu0 0
        %2113 = vmatpush1.bf16.msra.mxu0 0
        %2114 = vmatprep.subr.bf16.mxu0 0
        %2115 = vmatpush1.bf16.msra.mxu0 0
        %2116 = vmatprep.subr.bf16.mxu0 0
        %2117 = vmatpush1.bf16.msra.mxu0 0
        %2118 = vmatprep.subr.bf16.mxu0 0
        %2119 = vmatpush1.bf16.msra.mxu0 0
        %2120 = vmatprep.mubr.bf16.mxu0 0
        %2121 = vmatmul.mubr.bf16.gmra.mrb[0].mxu0 %v975
        %v2122 = vpop.f32.mrb[0].mxu0
        %v2123 = vadd.f32 0.0, %v2122
        %v2124 = vpop.f32.mrb[0].mxu0
        %v2125 = vpop.f32.mrb[0].mxu0
        %v2126 = vadd.f32 0.0, %v2125
        %v2127 = vpop.f32.mrb[0].mxu0
        %2128 = vmatprep.mubr.bf16.mxu0 0
        %2129 = vmatmul.mubr.bf16.gmra.mrb[0].mxu0 %v976
        %v2130 = vpop.f32.mrb[0].mxu0
        %v2131 = vadd.f32 0.0, %v2130
        %v2132 = vpop.f32.mrb[0].mxu0
        %v2133 = vpop.f32.mrb[0].mxu0
        %v2134 = vadd.f32 0.0, %v2133
        %v2135 = vpop.f32.mrb[0].mxu0
        %2136 = vmatprep.mubr.bf16.mxu0 0
        %2137 = vmatmul.mubr.bf16.gmra.mrb[0].mxu0 %v977
        %v2138 = vpop.f32.mrb[0].mxu0
        %v2139 = vadd.f32 0.0, %v2138
        %v2140 = vpop.f32.mrb[0].mxu0
        %v2141 = vpop.f32.mrb[0].mxu0
        %v2142 = vadd.f32 0.0, %v2141
        %v2143 = vpop.f32.mrb[0].mxu0
        %2144 = vmatprep.mubr.bf16.mxu0 0
        %2145 = vmatmul.mubr.bf16.gmra.mrb[0].mxu0 %v978
        %v2146 = vpop.f32.mrb[0].mxu0
        %v2147 = vadd.f32 0.0, %v2146
        %v2148 = vpop.f32.mrb[0].mxu0
        %v2149 = vpop.f32.mrb[0].mxu0
        %v2150 = vadd.f32 0.0, %v2149
        %v2151 = vpop.f32.mrb[0].mxu0
        %2152 = vmatprep.mubr.bf16.mxu0 0
        %2153 = vmatmul.mubr.bf16.gmra.mrb[0].mxu0 %v979
        %v2154 = vpop.f32.mrb[0].mxu0
        %v2155 = vadd.f32 0.0, %v2154
        %v2156 = vpop.f32.mrb[0].mxu0
        %v2157 = vpop.f32.mrb[0].mxu0
        %v2158 = vadd.f32 0.0, %v2157
        %v2159 = vpop.f32.mrb[0].mxu0
        %2160 = vmatprep.mubr.bf16.mxu0 0
        %2161 = vmatmul.mubr.bf16.gmra.mrb[0].mxu0 %v980
        %v2162 = vpop.f32.mrb[0].mxu0
        %v2163 = vadd.f32 0.0, %v2162
        %v2164 = vpop.f32.mrb[0].mxu0
        %v2165 = vpop.f32.mrb[0].mxu0
        %v2166 = vadd.f32 0.0, %v2165
        %v2167 = vpop.f32.mrb[0].mxu0
        %2168 = vmatprep.mubr.bf16.mxu0 0
        %2169 = vmatmul.mubr.bf16.gmra.mrb[0].mxu0 %v981
        %v2170 = vpop.f32.mrb[0].mxu0
        %v2171 = vadd.f32 0.0, %v2170
        %v2172 = vpop.f32.mrb[0].mxu0
        %v2173 = vpop.f32.mrb[0].mxu0
        %v2174 = vadd.f32 0.0, %v2173
        %v2175 = vpop.f32.mrb[0].mxu0
        %2176 = vmatprep.mubr.bf16.mxu0 0
        %2177 = vmatmul.mubr.bf16.gmra.mrb[0].mxu0 %v982
        %v2178 = vpop.f32.mrb[0].mxu0
        %v2179 = vadd.f32 0.0, %v2178
        %v2180 = vpop.f32.mrb[0].mxu0
        %v2181 = vpop.f32.mrb[0].mxu0
        %v2182 = vadd.f32 0.0, %v2181
        %v2183 = vpop.f32.mrb[0].mxu0
        %2184 = vmatprep.mubr.bf16.mxu0 0
        %2185 = vmatmul.mubr.bf16.gmra.mrb[0].mxu0 %v983
        %v2186 = vpop.f32.mrb[0].mxu0
        %v2187 = vadd.f32 0.0, %v2186
        %v2188 = vpop.f32.mrb[0].mxu0
        %v2189 = vpop.f32.mrb[0].mxu0
        %v2190 = vadd.f32 0.0, %v2189
        %v2191 = vpop.f32.mrb[0].mxu0
        %2192 = vmatprep.mubr.bf16.mxu0 0
        %2193 = vmatmul.mubr.bf16.gmra.mrb[0].mxu0 %v984
        %v2194 = vpop.f32.mrb[0].mxu0
        %v2195 = vadd.f32 0.0, %v2194
        %v2196 = vpop.f32.mrb[0].mxu0
        %v2197 = vpop.f32.mrb[0].mxu0
        %v2198 = vadd.f32 0.0, %v2197
        %v2199 = vpop.f32.mrb[0].mxu0
        %2200 = vmatprep.mubr.bf16.mxu0 0
        %2201 = vmatmul.mubr.bf16.gmra.mrb[0].mxu0 %v985
        %v2202 = vpop.f32.mrb[0].mxu0
        %v2203 = vadd.f32 0.0, %v2202
        %v2204 = vpop.f32.mrb[0].mxu0
        %v2205 = vpop.f32.mrb[0].mxu0
        %v2206 = vadd.f32 0.0, %v2205
        %v2207 = vpop.f32.mrb[0].mxu0
        %2208 = vmatprep.mubr.bf16.mxu0 0
        %2209 = vmatmul.mubr.bf16.gmra.mrb[0].mxu0 %v986
        %v2210 = vpop.f32.mrb[0].mxu0
        %v2211 = vadd.f32 0.0, %v2210
        %v2212 = vpop.f32.mrb[0].mxu0
        %v2213 = vpop.f32.mrb[0].mxu0
        %v2214 = vadd.f32 0.0, %v2213
        %v2215 = vpop.f32.mrb[0].mxu0
        %2216 = vmatprep.mubr.bf16.mxu0 0
        %2217 = vmatmul.mubr.bf16.gmra.mrb[0].mxu0 %v987
        %v2218 = vpop.f32.mrb[0].mxu0
        %v2219 = vadd.f32 0.0, %v2218
        %v2220 = vpop.f32.mrb[0].mxu0
        %v2221 = vpop.f32.mrb[0].mxu0
        %v2222 = vadd.f32 0.0, %v2221
        %v2223 = vpop.f32.mrb[0].mxu0
        %2224 = vmatprep.mubr.bf16.mxu0 0
        %2225 = vmatmul.mubr.bf16.gmra.mrb[0].mxu0 %v988
        %v2226 = vpop.f32.mrb[0].mxu0
        %v2227 = vadd.f32 0.0, %v2226
        %v2228 = vpop.f32.mrb[0].mxu0
        %v2229 = vpop.f32.mrb[0].mxu0
        %v2230 = vadd.f32 0.0, %v2229
        %v2231 = vpop.f32.mrb[0].mxu0
        %2232 = vmatprep.mubr.bf16.mxu0 0
        %2233 = vmatmul.mubr.bf16.gmra.mrb[0].mxu0 %v989
        %v2234 = vpop.f32.mrb[0].mxu0
        %v2235 = vadd.f32 0.0, %v2234
        %v2236 = vpop.f32.mrb[0].mxu0
        %v2237 = vpop.f32.mrb[0].mxu0
        %v2238 = vadd.f32 0.0, %v2237
        %v2239 = vpop.f32.mrb[0].mxu0
        %2240 = vmatprep.mubr.bf16.mxu0 0
        %2241 = vmatmul.mubr.bf16.gmra.mrb[0].mxu0 %v990
        %v2242 = vpop.f32.mrb[0].mxu0
        %v2243 = vadd.f32 0.0, %v2242
        %v2244 = vpop.f32.mrb[0].mxu0
        %v2245 = vpop.f32.mrb[0].mxu0
        %v2246 = vadd.f32 0.0, %v2245
        %v2247 = vpop.f32.mrb[0].mxu0
        %2248 = vdwg.mxu0
        %v2249 = vadd.f32 %v1991, %v2123
        %v2250 = vadd.f32 %v1992, %v2126
        %v2251 = vadd.f32 %v1993, %v2131
        %v2252 = vadd.f32 %v1994, %v2134
        %v2253 = vadd.f32 %v1995, %v2139
        %v2254 = vadd.f32 %v1996, %v2142
        %v2255 = vadd.f32 %v1997, %v2147
        %v2256 = vadd.f32 %v1998, %v2150
        %v2257 = vadd.f32 %v1999, %v2155
        %v2258 = vadd.f32 %v2000, %v2158
        %v2259 = vadd.f32 %v2001, %v2163
        %v2260 = vadd.f32 %v2002, %v2166
        %v2261 = vadd.f32 %v2003, %v2171
        %v2262 = vadd.f32 %v2004, %v2174
        %v2263 = vadd.f32 %v2005, %v2179
        %v2264 = vadd.f32 %v2006, %v2182
        %v2265 = vadd.f32 %v2007, %v2187
        %v2266 = vadd.f32 %v2008, %v2190
        %v2267 = vadd.f32 %v2009, %v2195
        %v2268 = vadd.f32 %v2010, %v2198
        %v2269 = vadd.f32 %v2011, %v2203
        %v2270 = vadd.f32 %v2012, %v2206
        %v2271 = vadd.f32 %v2013, %v2211
        %v2272 = vadd.f32 %v2014, %v2214
        %v2273 = vadd.f32 %v2015, %v2219
        %v2274 = vadd.f32 %v2016, %v2222
        %v2275 = vadd.f32 %v2017, %v2227
        %v2276 = vadd.f32 %v2018, %v2230
        %v2277 = vadd.f32 %v2019, %v2235
        %v2278 = vadd.f32 %v2020, %v2238
        %v2279 = vadd.f32 %v2021, %v2243
        %v2280 = vadd.f32 %v2022, %v2246
        %v2282 = vshrl.u32 %v990, 16
        %v2284 = vshll.u32 %v990, 16
        %v2286 = vrot.slane %v2284, 1
        %v2287 = vor.u32 %v2282, %v2286
        %v2289 = vshll.u32 %v1007, 16
        %v2291 = vrot.slane %v2289, 1
        %v2292 = vsel %vm1024, %v2287, %v2291
        %s2294 = scalar_lea.vmem [#allocation7], 256
        %v2295 = vld [vmem:[%s2294] sm:$0xf]
        %v2296 = vld [vmem:[%s2294 + $0x4] sm:$0xf]
        %v2297 = vld [vmem:[%s2294 + $0x8] sm:$0xf]
        %v2298 = vld [vmem:[%s2294 + $0xc] sm:$0xf]
        %v2299 = vld [vmem:[%s2294 + $0x10] sm:$0xf]
        %v2300 = vld [vmem:[%s2294 + $0x14] sm:$0xf]
        %v2301 = vld [vmem:[%s2294 + $0x18] sm:$0xf]
        %v2302 = vld [vmem:[%s2294 + $0x1c] sm:$0xf]
        %v2303 = vld [vmem:[%s2294 + $0x20] sm:$0xf]
        %v2304 = vld [vmem:[%s2294 + $0x24] sm:$0xf]
        %v2305 = vld [vmem:[%s2294 + $0x28] sm:$0xf]
        %v2306 = vld [vmem:[%s2294 + $0x2c] sm:$0xf]
        %v2307 = vld [vmem:[%s2294 + $0x30] sm:$0xf]
        %v2308 = vld [vmem:[%s2294 + $0x34] sm:$0xf]
        %v2309 = vld [vmem:[%s2294 + $0x38] sm:$0xf]
        %v2310 = vld [vmem:[%s2294 + $0x3c] sm:$0xf]
        %v2327 = vunpack.c.l.b16 %v2295
        %v2328 = vunpack.c.l.b16 %v2296
        %v2329 = vunpack.c.l.b16 %v2297
        %v2330 = vunpack.c.l.b16 %v2298
        %v2331 = vunpack.c.l.b16 %v2299
        %v2332 = vunpack.c.l.b16 %v2300
        %v2333 = vunpack.c.l.b16 %v2301
        %v2334 = vunpack.c.l.b16 %v2302
        %v2335 = vunpack.c.l.b16 %v2303
        %v2336 = vunpack.c.l.b16 %v2304
        %v2337 = vunpack.c.l.b16 %v2305
        %v2338 = vunpack.c.l.b16 %v2306
        %v2339 = vunpack.c.l.b16 %v2307
        %v2340 = vunpack.c.l.b16 %v2308
        %v2341 = vunpack.c.l.b16 %v2309
        %v2342 = vunpack.c.l.b16 %v2310
        %v2343 = vpack.c.b16 %v2328, %v2327
        %v2344 = vpack.c.b16 %v2330, %v2329
        %v2345 = vpack.c.b16 %v2332, %v2331
        %v2346 = vpack.c.b16 %v2334, %v2333
        %v2347 = vpack.c.b16 %v2336, %v2335
        %v2348 = vpack.c.b16 %v2338, %v2337
        %v2349 = vpack.c.b16 %v2340, %v2339
        %v2350 = vpack.c.b16 %v2342, %v2341
        %2359 = vmatprep.subr.bf16.mxu0 0
        %2360 = vmatpush1.bf16.msra.mxu0 %v2343
        %2361 = vmatprep.subr.bf16.mxu0 0
        %2362 = vmatpush1.bf16.msra.mxu0 %v2344
        %2363 = vmatprep.subr.bf16.mxu0 0
        %2364 = vmatpush1.bf16.msra.mxu0 %v2345
        %2365 = vmatprep.subr.bf16.mxu0 0
        %2366 = vmatpush1.bf16.msra.mxu0 %v2346
        %2367 = vmatprep.subr.bf16.mxu0 0
        %2368 = vmatpush1.bf16.msra.mxu0 %v2347
        %2369 = vmatprep.subr.bf16.mxu0 0
        %2370 = vmatpush1.bf16.msra.mxu0 %v2348
        %2371 = vmatprep.subr.bf16.mxu0 0
        %2372 = vmatpush1.bf16.msra.mxu0 %v2349
        %2373 = vmatprep.subr.bf16.mxu0 0
        %2374 = vmatpush1.bf16.msra.mxu0 %v2350
        %2375 = vmatprep.subr.bf16.mxu0 0
        %2376 = vmatpush1.bf16.msra.mxu0 0
        %2377 = vmatprep.subr.bf16.mxu0 0
        %2378 = vmatpush1.bf16.msra.mxu0 0
        %2379 = vmatprep.subr.bf16.mxu0 0
        %2380 = vmatpush1.bf16.msra.mxu0 0
        %2381 = vmatprep.subr.bf16.mxu0 0
        %2382 = vmatpush1.bf16.msra.mxu0 0
        %2383 = vmatprep.subr.bf16.mxu0 0
        %2384 = vmatpush1.bf16.msra.mxu0 0
        %2385 = vmatprep.subr.bf16.mxu0 0
        %2386 = vmatpush1.bf16.msra.mxu0 0
        %2387 = vmatprep.subr.bf16.mxu0 0
        %2388 = vmatpush1.bf16.msra.mxu0 0
        %2389 = vmatprep.subr.bf16.mxu0 0
        %2390 = vmatpush1.bf16.msra.mxu0 0
        %2391 = vmatprep.mubr.bf16.mxu0 0
        %2392 = vmatmul.mubr.bf16.gmra.mrb[0].mxu0 %v1048
        %v2393 = vpop.f32.mrb[0].mxu0
        %v2394 = vadd.f32 0.0, %v2393
        %v2395 = vpop.f32.mrb[0].mxu0
        %v2396 = vpop.f32.mrb[0].mxu0
        %v2397 = vadd.f32 0.0, %v2396
        %v2398 = vpop.f32.mrb[0].mxu0
        %2399 = vmatprep.mubr.bf16.mxu0 0
        %2400 = vmatmul.mubr.bf16.gmra.mrb[0].mxu0 %v1060
        %v2401 = vpop.f32.mrb[0].mxu0
        %v2402 = vadd.f32 0.0, %v2401
        %v2403 = vpop.f32.mrb[0].mxu0
        %v2404 = vpop.f32.mrb[0].mxu0
        %v2405 = vadd.f32 0.0, %v2404
        %v2406 = vpop.f32.mrb[0].mxu0
        %2407 = vmatprep.mubr.bf16.mxu0 0
        %2408 = vmatmul.mubr.bf16.gmra.mrb[0].mxu0 %v1072
        %v2409 = vpop.f32.mrb[0].mxu0
        %v2410 = vadd.f32 0.0, %v2409
        %v2411 = vpop.f32.mrb[0].mxu0
        %v2412 = vpop.f32.mrb[0].mxu0
        %v2413 = vadd.f32 0.0, %v2412
        %v2414 = vpop.f32.mrb[0].mxu0
        %2415 = vmatprep.mubr.bf16.mxu0 0
        %2416 = vmatmul.mubr.bf16.gmra.mrb[0].mxu0 %v1084
        %v2417 = vpop.f32.mrb[0].mxu0
        %v2418 = vadd.f32 0.0, %v2417
        %v2419 = vpop.f32.mrb[0].mxu0
        %v2420 = vpop.f32.mrb[0].mxu0
        %v2421 = vadd.f32 0.0, %v2420
        %v2422 = vpop.f32.mrb[0].mxu0
        %2423 = vmatprep.mubr.bf16.mxu0 0
        %2424 = vmatmul.mubr.bf16.gmra.mrb[0].mxu0 %v1096
        %v2425 = vpop.f32.mrb[0].mxu0
        %v2426 = vadd.f32 0.0, %v2425
        %v2427 = vpop.f32.mrb[0].mxu0
        %v2428 = vpop.f32.mrb[0].mxu0
        %v2429 = vadd.f32 0.0, %v2428
        %v2430 = vpop.f32.mrb[0].mxu0
        %2431 = vmatprep.mubr.bf16.mxu0 0
        %2432 = vmatmul.mubr.bf16.gmra.mrb[0].mxu0 %v1108
        %v2433 = vpop.f32.mrb[0].mxu0
        %v2434 = vadd.f32 0.0, %v2433
        %v2435 = vpop.f32.mrb[0].mxu0
        %v2436 = vpop.f32.mrb[0].mxu0
        %v2437 = vadd.f32 0.0, %v2436
        %v2438 = vpop.f32.mrb[0].mxu0
        %2439 = vmatprep.mubr.bf16.mxu0 0
        %2440 = vmatmul.mubr.bf16.gmra.mrb[0].mxu0 %v1120
        %v2441 = vpop.f32.mrb[0].mxu0
        %v2442 = vadd.f32 0.0, %v2441
        %v2443 = vpop.f32.mrb[0].mxu0
        %v2444 = vpop.f32.mrb[0].mxu0
        %v2445 = vadd.f32 0.0, %v2444
        %v2446 = vpop.f32.mrb[0].mxu0
        %2447 = vmatprep.mubr.bf16.mxu0 0
        %2448 = vmatmul.mubr.bf16.gmra.mrb[0].mxu0 %v1132
        %v2449 = vpop.f32.mrb[0].mxu0
        %v2450 = vadd.f32 0.0, %v2449
        %v2451 = vpop.f32.mrb[0].mxu0
        %v2452 = vpop.f32.mrb[0].mxu0
        %v2453 = vadd.f32 0.0, %v2452
        %v2454 = vpop.f32.mrb[0].mxu0
        %2455 = vmatprep.mubr.bf16.mxu0 0
        %2456 = vmatmul.mubr.bf16.gmra.mrb[0].mxu0 %v1144
        %v2457 = vpop.f32.mrb[0].mxu0
        %v2458 = vadd.f32 0.0, %v2457
        %v2459 = vpop.f32.mrb[0].mxu0
        %v2460 = vpop.f32.mrb[0].mxu0
        %v2461 = vadd.f32 0.0, %v2460
        %v2462 = vpop.f32.mrb[0].mxu0
        %2463 = vmatprep.mubr.bf16.mxu0 0
        %2464 = vmatmul.mubr.bf16.gmra.mrb[0].mxu0 %v1156
        %v2465 = vpop.f32.mrb[0].mxu0
        %v2466 = vadd.f32 0.0, %v2465
        %v2467 = vpop.f32.mrb[0].mxu0
        %v2468 = vpop.f32.mrb[0].mxu0
        %v2469 = vadd.f32 0.0, %v2468
        %v2470 = vpop.f32.mrb[0].mxu0
        %2471 = vmatprep.mubr.bf16.mxu0 0
        %2472 = vmatmul.mubr.bf16.gmra.mrb[0].mxu0 %v1168
        %v2473 = vpop.f32.mrb[0].mxu0
        %v2474 = vadd.f32 0.0, %v2473
        %v2475 = vpop.f32.mrb[0].mxu0
        %v2476 = vpop.f32.mrb[0].mxu0
        %v2477 = vadd.f32 0.0, %v2476
        %v2478 = vpop.f32.mrb[0].mxu0
        %2479 = vmatprep.mubr.bf16.mxu0 0
        %2480 = vmatmul.mubr.bf16.gmra.mrb[0].mxu0 %v1180
        %v2481 = vpop.f32.mrb[0].mxu0
        %v2482 = vadd.f32 0.0, %v2481
        %v2483 = vpop.f32.mrb[0].mxu0
        %v2484 = vpop.f32.mrb[0].mxu0
        %v2485 = vadd.f32 0.0, %v2484
        %v2486 = vpop.f32.mrb[0].mxu0
        %2487 = vmatprep.mubr.bf16.mxu0 0
        %2488 = vmatmul.mubr.bf16.gmra.mrb[0].mxu0 %v1192
        %v2489 = vpop.f32.mrb[0].mxu0
        %v2490 = vadd.f32 0.0, %v2489
        %v2491 = vpop.f32.mrb[0].mxu0
        %v2492 = vpop.f32.mrb[0].mxu0
        %v2493 = vadd.f32 0.0, %v2492
        %v2494 = vpop.f32.mrb[0].mxu0
        %2495 = vmatprep.mubr.bf16.mxu0 0
        %2496 = vmatmul.mubr.bf16.gmra.mrb[0].mxu0 %v1204
        %v2497 = vpop.f32.mrb[0].mxu0
        %v2498 = vadd.f32 0.0, %v2497
        %v2499 = vpop.f32.mrb[0].mxu0
        %v2500 = vpop.f32.mrb[0].mxu0
        %v2501 = vadd.f32 0.0, %v2500
        %v2502 = vpop.f32.mrb[0].mxu0
        %2503 = vmatprep.mubr.bf16.mxu0 0
        %2504 = vmatmul.mubr.bf16.gmra.mrb[0].mxu0 %v1216
        %v2505 = vpop.f32.mrb[0].mxu0
        %v2506 = vadd.f32 0.0, %v2505
        %v2507 = vpop.f32.mrb[0].mxu0
        %v2508 = vpop.f32.mrb[0].mxu0
        %v2509 = vadd.f32 0.0, %v2508
        %v2510 = vpop.f32.mrb[0].mxu0
        %2511 = vmatprep.mubr.bf16.mxu0 0
        %2512 = vmatmul.mubr.bf16.gmra.mrb[0].mxu0 %v2292
        %v2513 = vpop.f32.mrb[0].mxu0
        %v2514 = vadd.f32 0.0, %v2513
        %v2515 = vpop.f32.mrb[0].mxu0
        %v2516 = vpop.f32.mrb[0].mxu0
        %v2517 = vadd.f32 0.0, %v2516
        %v2518 = vpop.f32.mrb[0].mxu0
        %2519 = vdwg.mxu0
        %v2520 = vadd.f32 %v2249, %v2394
        %v2521 = vadd.f32 %v2250, %v2397
        %v2522 = vadd.f32 %v2251, %v2402
        %v2523 = vadd.f32 %v2252, %v2405
        %v2524 = vadd.f32 %v2253, %v2410
        %v2525 = vadd.f32 %v2254, %v2413
        %v2526 = vadd.f32 %v2255, %v2418
        %v2527 = vadd.f32 %v2256, %v2421
        %v2528 = vadd.f32 %v2257, %v2426
        %v2529 = vadd.f32 %v2258, %v2429
        %v2530 = vadd.f32 %v2259, %v2434
        %v2531 = vadd.f32 %v2260, %v2437
        %v2532 = vadd.f32 %v2261, %v2442
        %v2533 = vadd.f32 %v2262, %v2445
        %v2534 = vadd.f32 %v2263, %v2450
        %v2535 = vadd.f32 %v2264, %v2453
        %v2536 = vadd.f32 %v2265, %v2458
        %v2537 = vadd.f32 %v2266, %v2461
        %v2538 = vadd.f32 %v2267, %v2466
        %v2539 = vadd.f32 %v2268, %v2469
        %v2540 = vadd.f32 %v2269, %v2474
        %v2541 = vadd.f32 %v2270, %v2477
        %v2542 = vadd.f32 %v2271, %v2482
        %v2543 = vadd.f32 %v2272, %v2485
        %v2544 = vadd.f32 %v2273, %v2490
        %v2545 = vadd.f32 %v2274, %v2493
        %v2546 = vadd.f32 %v2275, %v2498
        %v2547 = vadd.f32 %v2276, %v2501
        %v2548 = vadd.f32 %v2277, %v2506
        %v2549 = vadd.f32 %v2278, %v2509
        %v2550 = vadd.f32 %v2279, %v2514
        %v2551 = vadd.f32 %v2280, %v2517
        %v2554 = vrot.slane %v990, 1
        %v2555 = vrot.slane %v1007, 1
        %v2556 = vsel %vm1700, %v2554, %v2555
        %s2558 = scalar_lea.vmem [#allocation7], 320
        %v2559 = vld [vmem:[%s2558] sm:$0xf]
        %v2560 = vld [vmem:[%s2558 + $0x4] sm:$0xf]
        %v2561 = vld [vmem:[%s2558 + $0x8] sm:$0xf]
        %v2562 = vld [vmem:[%s2558 + $0xc] sm:$0xf]
        %v2563 = vld [vmem:[%s2558 + $0x10] sm:$0xf]
        %v2564 = vld [vmem:[%s2558 + $0x14] sm:$0xf]
        %v2565 = vld [vmem:[%s2558 + $0x18] sm:$0xf]
        %v2566 = vld [vmem:[%s2558 + $0x1c] sm:$0xf]
        %v2567 = vld [vmem:[%s2558 + $0x20] sm:$0xf]
        %v2568 = vld [vmem:[%s2558 + $0x24] sm:$0xf]
        %v2569 = vld [vmem:[%s2558 + $0x28] sm:$0xf]
        %v2570 = vld [vmem:[%s2558 + $0x2c] sm:$0xf]
        %v2571 = vld [vmem:[%s2558 + $0x30] sm:$0xf]
        %v2572 = vld [vmem:[%s2558 + $0x34] sm:$0xf]
        %v2573 = vld [vmem:[%s2558 + $0x38] sm:$0xf]
        %v2574 = vld [vmem:[%s2558 + $0x3c] sm:$0xf]
        %v2591 = vunpack.c.l.b16 %v2559
        %v2592 = vunpack.c.l.b16 %v2560
        %v2593 = vunpack.c.l.b16 %v2561
        %v2594 = vunpack.c.l.b16 %v2562
        %v2595 = vunpack.c.l.b16 %v2563
        %v2596 = vunpack.c.l.b16 %v2564
        %v2597 = vunpack.c.l.b16 %v2565
        %v2598 = vunpack.c.l.b16 %v2566
        %v2599 = vunpack.c.l.b16 %v2567
        %v2600 = vunpack.c.l.b16 %v2568
        %v2601 = vunpack.c.l.b16 %v2569
        %v2602 = vunpack.c.l.b16 %v2570
        %v2603 = vunpack.c.l.b16 %v2571
        %v2604 = vunpack.c.l.b16 %v2572
        %v2605 = vunpack.c.l.b16 %v2573
        %v2606 = vunpack.c.l.b16 %v2574
        %v2607 = vpack.c.b16 %v2592, %v2591
        %v2608 = vpack.c.b16 %v2594, %v2593
        %v2609 = vpack.c.b16 %v2596, %v2595
        %v2610 = vpack.c.b16 %v2598, %v2597
        %v2611 = vpack.c.b16 %v2600, %v2599
        %v2612 = vpack.c.b16 %v2602, %v2601
        %v2613 = vpack.c.b16 %v2604, %v2603
        %v2614 = vpack.c.b16 %v2606, %v2605
        %2623 = vmatprep.subr.bf16.mxu0 0
        %2624 = vmatpush1.bf16.msra.mxu0 %v2607
        %2625 = vmatprep.subr.bf16.mxu0 0
        %2626 = vmatpush1.bf16.msra.mxu0 %v2608
        %2627 = vmatprep.subr.bf16.mxu0 0
        %2628 = vmatpush1.bf16.msra.mxu0 %v2609
        %2629 = vmatprep.subr.bf16.mxu0 0
        %2630 = vmatpush1.bf16.msra.mxu0 %v2610
        %2631 = vmatprep.subr.bf16.mxu0 0
        %2632 = vmatpush1.bf16.msra.mxu0 %v2611
        %2633 = vmatprep.subr.bf16.mxu0 0
        %2634 = vmatpush1.bf16.msra.mxu0 %v2612
        %2635 = vmatprep.subr.bf16.mxu0 0
        %2636 = vmatpush1.bf16.msra.mxu0 %v2613
        %2637 = vmatprep.subr.bf16.mxu0 0
        %2638 = vmatpush1.bf16.msra.mxu0 %v2614
        %2639 = vmatprep.subr.bf16.mxu0 0
        %2640 = vmatpush1.bf16.msra.mxu0 0
        %2641 = vmatprep.subr.bf16.mxu0 0
        %2642 = vmatpush1.bf16.msra.mxu0 0
        %2643 = vmatprep.subr.bf16.mxu0 0
        %2644 = vmatpush1.bf16.msra.mxu0 0
        %2645 = vmatprep.subr.bf16.mxu0 0
        %2646 = vmatpush1.bf16.msra.mxu0 0
        %2647 = vmatprep.subr.bf16.mxu0 0
        %2648 = vmatpush1.bf16.msra.mxu0 0
        %2649 = vmatprep.subr.bf16.mxu0 0
        %2650 = vmatpush1.bf16.msra.mxu0 0
        %2651 = vmatprep.subr.bf16.mxu0 0
        %2652 = vmatpush1.bf16.msra.mxu0 0
        %2653 = vmatprep.subr.bf16.mxu0 0
        %2654 = vmatpush1.bf16.msra.mxu0 0
        %2655 = vmatprep.mubr.bf16.mxu0 0
        %2656 = vmatmul.mubr.bf16.gmra.mrb[0].mxu0 %v1706
        %v2657 = vpop.f32.mrb[0].mxu0
        %v2658 = vadd.f32 0.0, %v2657
        %v2659 = vpop.f32.mrb[0].mxu0
        %v2660 = vpop.f32.mrb[0].mxu0
        %v2661 = vadd.f32 0.0, %v2660
        %v2662 = vpop.f32.mrb[0].mxu0
        %2663 = vmatprep.mubr.bf16.mxu0 0
        %2664 = vmatmul.mubr.bf16.gmra.mrb[0].mxu0 %v1709
        %v2665 = vpop.f32.mrb[0].mxu0
        %v2666 = vadd.f32 0.0, %v2665
        %v2667 = vpop.f32.mrb[0].mxu0
        %v2668 = vpop.f32.mrb[0].mxu0
        %v2669 = vadd.f32 0.0, %v2668
        %v2670 = vpop.f32.mrb[0].mxu0
        %2671 = vmatprep.mubr.bf16.mxu0 0
        %2672 = vmatmul.mubr.bf16.gmra.mrb[0].mxu0 %v1712
        %v2673 = vpop.f32.mrb[0].mxu0
        %v2674 = vadd.f32 0.0, %v2673
        %v2675 = vpop.f32.mrb[0].mxu0
        %v2676 = vpop.f32.mrb[0].mxu0
        %v2677 = vadd.f32 0.0, %v2676
        %v2678 = vpop.f32.mrb[0].mxu0
        %2679 = vmatprep.mubr.bf16.mxu0 0
        %2680 = vmatmul.mubr.bf16.gmra.mrb[0].mxu0 %v1715
        %v2681 = vpop.f32.mrb[0].mxu0
        %v2682 = vadd.f32 0.0, %v2681
        %v2683 = vpop.f32.mrb[0].mxu0
        %v2684 = vpop.f32.mrb[0].mxu0
        %v2685 = vadd.f32 0.0, %v2684
        %v2686 = vpop.f32.mrb[0].mxu0
        %2687 = vmatprep.mubr.bf16.mxu0 0
        %2688 = vmatmul.mubr.bf16.gmra.mrb[0].mxu0 %v1718
        %v2689 = vpop.f32.mrb[0].mxu0
        %v2690 = vadd.f32 0.0, %v2689
        %v2691 = vpop.f32.mrb[0].mxu0
        %v2692 = vpop.f32.mrb[0].mxu0
        %v2693 = vadd.f32 0.0, %v2692
        %v2694 = vpop.f32.mrb[0].mxu0
        %2695 = vmatprep.mubr.bf16.mxu0 0
        %2696 = vmatmul.mubr.bf16.gmra.mrb[0].mxu0 %v1721
        %v2697 = vpop.f32.mrb[0].mxu0
        %v2698 = vadd.f32 0.0, %v2697
        %v2699 = vpop.f32.mrb[0].mxu0
        %v2700 = vpop.f32.mrb[0].mxu0
        %v2701 = vadd.f32 0.0, %v2700
        %v2702 = vpop.f32.mrb[0].mxu0
        %2703 = vmatprep.mubr.bf16.mxu0 0
        %2704 = vmatmul.mubr.bf16.gmra.mrb[0].mxu0 %v1724
        %v2705 = vpop.f32.mrb[0].mxu0
        %v2706 = vadd.f32 0.0, %v2705
        %v2707 = vpop.f32.mrb[0].mxu0
        %v2708 = vpop.f32.mrb[0].mxu0
        %v2709 = vadd.f32 0.0, %v2708
        %v2710 = vpop.f32.mrb[0].mxu0
        %2711 = vmatprep.mubr.bf16.mxu0 0
        %2712 = vmatmul.mubr.bf16.gmra.mrb[0].mxu0 %v1727
        %v2713 = vpop.f32.mrb[0].mxu0
        %v2714 = vadd.f32 0.0, %v2713
        %v2715 = vpop.f32.mrb[0].mxu0
        %v2716 = vpop.f32.mrb[0].mxu0
        %v2717 = vadd.f32 0.0, %v2716
        %v2718 = vpop.f32.mrb[0].mxu0
        %2719 = vmatprep.mubr.bf16.mxu0 0
        %2720 = vmatmul.mubr.bf16.gmra.mrb[0].mxu0 %v1730
        %v2721 = vpop.f32.mrb[0].mxu0
        %v2722 = vadd.f32 0.0, %v2721
        %v2723 = vpop.f32.mrb[0].mxu0
        %v2724 = vpop.f32.mrb[0].mxu0
        %v2725 = vadd.f32 0.0, %v2724
        %v2726 = vpop.f32.mrb[0].mxu0
        %2727 = vmatprep.mubr.bf16.mxu0 0
        %2728 = vmatmul.mubr.bf16.gmra.mrb[0].mxu0 %v1733
        %v2729 = vpop.f32.mrb[0].mxu0
        %v2730 = vadd.f32 0.0, %v2729
        %v2731 = vpop.f32.mrb[0].mxu0
        %v2732 = vpop.f32.mrb[0].mxu0
        %v2733 = vadd.f32 0.0, %v2732
        %v2734 = vpop.f32.mrb[0].mxu0
        %2735 = vmatprep.mubr.bf16.mxu0 0
        %2736 = vmatmul.mubr.bf16.gmra.mrb[0].mxu0 %v1736
        %v2737 = vpop.f32.mrb[0].mxu0
        %v2738 = vadd.f32 0.0, %v2737
        %v2739 = vpop.f32.mrb[0].mxu0
        %v2740 = vpop.f32.mrb[0].mxu0
        %v2741 = vadd.f32 0.0, %v2740
        %v2742 = vpop.f32.mrb[0].mxu0
        %2743 = vmatprep.mubr.bf16.mxu0 0
        %2744 = vmatmul.mubr.bf16.gmra.mrb[0].mxu0 %v1739
        %v2745 = vpop.f32.mrb[0].mxu0
        %v2746 = vadd.f32 0.0, %v2745
        %v2747 = vpop.f32.mrb[0].mxu0
        %v2748 = vpop.f32.mrb[0].mxu0
        %v2749 = vadd.f32 0.0, %v2748
        %v2750 = vpop.f32.mrb[0].mxu0
        %2751 = vmatprep.mubr.bf16.mxu0 0
        %2752 = vmatmul.mubr.bf16.gmra.mrb[0].mxu0 %v1742
        %v2753 = vpop.f32.mrb[0].mxu0
        %v2754 = vadd.f32 0.0, %v2753
        %v2755 = vpop.f32.mrb[0].mxu0
        %v2756 = vpop.f32.mrb[0].mxu0
        %v2757 = vadd.f32 0.0, %v2756
        %v2758 = vpop.f32.mrb[0].mxu0
        %2759 = vmatprep.mubr.bf16.mxu0 0
        %2760 = vmatmul.mubr.bf16.gmra.mrb[0].mxu0 %v1745
        %v2761 = vpop.f32.mrb[0].mxu0
        %v2762 = vadd.f32 0.0, %v2761
        %v2763 = vpop.f32.mrb[0].mxu0
        %v2764 = vpop.f32.mrb[0].mxu0
        %v2765 = vadd.f32 0.0, %v2764
        %v2766 = vpop.f32.mrb[0].mxu0
        %2767 = vmatprep.mubr.bf16.mxu0 0
        %2768 = vmatmul.mubr.bf16.gmra.mrb[0].mxu0 %v1748
        %v2769 = vpop.f32.mrb[0].mxu0
        %v2770 = vadd.f32 0.0, %v2769
        %v2771 = vpop.f32.mrb[0].mxu0
        %v2772 = vpop.f32.mrb[0].mxu0
        %v2773 = vadd.f32 0.0, %v2772
        %v2774 = vpop.f32.mrb[0].mxu0
        %2775 = vmatprep.mubr.bf16.mxu0 0
        %2776 = vmatmul.mubr.bf16.gmra.mrb[0].mxu0 %v2556
        %v2777 = vpop.f32.mrb[0].mxu0
        %v2778 = vadd.f32 0.0, %v2777
        %v2779 = vpop.f32.mrb[0].mxu0
        %v2780 = vpop.f32.mrb[0].mxu0
        %v2781 = vadd.f32 0.0, %v2780
        %v2782 = vpop.f32.mrb[0].mxu0
        %2783 = vdwg.mxu0
        %v2784 = vadd.f32 %v2520, %v2658
        %v2785 = vadd.f32 %v2521, %v2661
        %v2786 = vadd.f32 %v2522, %v2666
        %v2787 = vadd.f32 %v2523, %v2669
        %v2788 = vadd.f32 %v2524, %v2674
        %v2789 = vadd.f32 %v2525, %v2677
        %v2790 = vadd.f32 %v2526, %v2682
        %v2791 = vadd.f32 %v2527, %v2685
        %v2792 = vadd.f32 %v2528, %v2690
        %v2793 = vadd.f32 %v2529, %v2693
        %v2794 = vadd.f32 %v2530, %v2698
        %v2795 = vadd.f32 %v2531, %v2701
        %v2796 = vadd.f32 %v2532, %v2706
        %v2797 = vadd.f32 %v2533, %v2709
        %v2798 = vadd.f32 %v2534, %v2714
        %v2799 = vadd.f32 %v2535, %v2717
        %v2800 = vadd.f32 %v2536, %v2722
        %v2801 = vadd.f32 %v2537, %v2725
        %v2802 = vadd.f32 %v2538, %v2730
        %v2803 = vadd.f32 %v2539, %v2733
        %v2804 = vadd.f32 %v2540, %v2738
        %v2805 = vadd.f32 %v2541, %v2741
        %v2806 = vadd.f32 %v2542, %v2746
        %v2807 = vadd.f32 %v2543, %v2749
        %v2808 = vadd.f32 %v2544, %v2754
        %v2809 = vadd.f32 %v2545, %v2757
        %v2810 = vadd.f32 %v2546, %v2762
        %v2811 = vadd.f32 %v2547, %v2765
        %v2812 = vadd.f32 %v2548, %v2770
        %v2813 = vadd.f32 %v2549, %v2773
        %v2814 = vadd.f32 %v2550, %v2778
        %v2815 = vadd.f32 %v2551, %v2781
        %s2816 = scalar_lea.vmem [#allocation7], 384
        %v2817 = vld [vmem:[%s2816] sm:$0xf]
        %v2818 = vld [vmem:[%s2816 + $0x4] sm:$0xf]
        %v2819 = vld [vmem:[%s2816 + $0x8] sm:$0xf]
        %v2820 = vld [vmem:[%s2816 + $0xc] sm:$0xf]
        %v2821 = vld [vmem:[%s2816 + $0x10] sm:$0xf]
        %v2822 = vld [vmem:[%s2816 + $0x14] sm:$0xf]
        %v2823 = vld [vmem:[%s2816 + $0x18] sm:$0xf]
        %v2824 = vld [vmem:[%s2816 + $0x1c] sm:$0xf]
        %v2825 = vld [vmem:[%s2816 + $0x20] sm:$0xf]
        %v2826 = vld [vmem:[%s2816 + $0x24] sm:$0xf]
        %v2827 = vld [vmem:[%s2816 + $0x28] sm:$0xf]
        %v2828 = vld [vmem:[%s2816 + $0x2c] sm:$0xf]
        %v2829 = vld [vmem:[%s2816 + $0x30] sm:$0xf]
        %v2830 = vld [vmem:[%s2816 + $0x34] sm:$0xf]
        %v2831 = vld [vmem:[%s2816 + $0x38] sm:$0xf]
        %v2832 = vld [vmem:[%s2816 + $0x3c] sm:$0xf]
        %v2849 = vunpack.c.l.b16 %v2817
        %v2850 = vunpack.c.l.b16 %v2818
        %v2851 = vunpack.c.l.b16 %v2819
        %v2852 = vunpack.c.l.b16 %v2820
        %v2853 = vunpack.c.l.b16 %v2821
        %v2854 = vunpack.c.l.b16 %v2822
        %v2855 = vunpack.c.l.b16 %v2823
        %v2856 = vunpack.c.l.b16 %v2824
        %v2857 = vunpack.c.l.b16 %v2825
        %v2858 = vunpack.c.l.b16 %v2826
        %v2859 = vunpack.c.l.b16 %v2827
        %v2860 = vunpack.c.l.b16 %v2828
        %v2861 = vunpack.c.l.b16 %v2829
        %v2862 = vunpack.c.l.b16 %v2830
        %v2863 = vunpack.c.l.b16 %v2831
        %v2864 = vunpack.c.l.b16 %v2832
        %v2865 = vpack.c.b16 %v2850, %v2849
        %v2866 = vpack.c.b16 %v2852, %v2851
        %v2867 = vpack.c.b16 %v2854, %v2853
        %v2868 = vpack.c.b16 %v2856, %v2855
        %v2869 = vpack.c.b16 %v2858, %v2857
        %v2870 = vpack.c.b16 %v2860, %v2859
        %v2871 = vpack.c.b16 %v2862, %v2861
        %v2872 = vpack.c.b16 %v2864, %v2863
        %2881 = vmatprep.subr.bf16.mxu0 0
        %2882 = vmatpush1.bf16.msra.mxu0 %v2865
        %2883 = vmatprep.subr.bf16.mxu0 0
        %2884 = vmatpush1.bf16.msra.mxu0 %v2866
        %2885 = vmatprep.subr.bf16.mxu0 0
        %2886 = vmatpush1.bf16.msra.mxu0 %v2867
        %2887 = vmatprep.subr.bf16.mxu0 0
        %2888 = vmatpush1.bf16.msra.mxu0 %v2868
        %2889 = vmatprep.subr.bf16.mxu0 0
        %2890 = vmatpush1.bf16.msra.mxu0 %v2869
        %2891 = vmatprep.subr.bf16.mxu0 0
        %2892 = vmatpush1.bf16.msra.mxu0 %v2870
        %2893 = vmatprep.subr.bf16.mxu0 0
        %2894 = vmatpush1.bf16.msra.mxu0 %v2871
        %2895 = vmatprep.subr.bf16.mxu0 0
        %2896 = vmatpush1.bf16.msra.mxu0 %v2872
        %2897 = vmatprep.subr.bf16.mxu0 0
        %2898 = vmatpush1.bf16.msra.mxu0 0
        %2899 = vmatprep.subr.bf16.mxu0 0
        %2900 = vmatpush1.bf16.msra.mxu0 0
        %2901 = vmatprep.subr.bf16.mxu0 0
        %2902 = vmatpush1.bf16.msra.mxu0 0
        %2903 = vmatprep.subr.bf16.mxu0 0
        %2904 = vmatpush1.bf16.msra.mxu0 0
        %2905 = vmatprep.subr.bf16.mxu0 0
        %2906 = vmatpush1.bf16.msra.mxu0 0
        %2907 = vmatprep.subr.bf16.mxu0 0
        %2908 = vmatpush1.bf16.msra.mxu0 0
        %2909 = vmatprep.subr.bf16.mxu0 0
        %2910 = vmatpush1.bf16.msra.mxu0 0
        %2911 = vmatprep.subr.bf16.mxu0 0
        %2912 = vmatpush1.bf16.msra.mxu0 0
        %2913 = vmatprep.mubr.bf16.mxu0 0
        %2914 = vmatmul.mubr.bf16.gmra.mrb[0].mxu0 %v976
        %v2915 = vpop.f32.mrb[0].mxu0
        %v2916 = vadd.f32 0.0, %v2915
        %v2917 = vpop.f32.mrb[0].mxu0
        %v2918 = vpop.f32.mrb[0].mxu0
        %v2919 = vadd.f32 0.0, %v2918
        %v2920 = vpop.f32.mrb[0].mxu0
        %2921 = vmatprep.mubr.bf16.mxu0 0
        %2922 = vmatmul.mubr.bf16.gmra.mrb[0].mxu0 %v977
        %v2923 = vpop.f32.mrb[0].mxu0
        %v2924 = vadd.f32 0.0, %v2923
        %v2925 = vpop.f32.mrb[0].mxu0
        %v2926 = vpop.f32.mrb[0].mxu0
        %v2927 = vadd.f32 0.0, %v2926
        %v2928 = vpop.f32.mrb[0].mxu0
        %2929 = vmatprep.mubr.bf16.mxu0 0
        %2930 = vmatmul.mubr.bf16.gmra.mrb[0].mxu0 %v978
        %v2931 = vpop.f32.mrb[0].mxu0
        %v2932 = vadd.f32 0.0, %v2931
        %v2933 = vpop.f32.mrb[0].mxu0
        %v2934 = vpop.f32.mrb[0].mxu0
        %v2935 = vadd.f32 0.0, %v2934
        %v2936 = vpop.f32.mrb[0].mxu0
        %2937 = vmatprep.mubr.bf16.mxu0 0
        %2938 = vmatmul.mubr.bf16.gmra.mrb[0].mxu0 %v979
        %v2939 = vpop.f32.mrb[0].mxu0
        %v2940 = vadd.f32 0.0, %v2939
        %v2941 = vpop.f32.mrb[0].mxu0
        %v2942 = vpop.f32.mrb[0].mxu0
        %v2943 = vadd.f32 0.0, %v2942
        %v2944 = vpop.f32.mrb[0].mxu0
        %2945 = vmatprep.mubr.bf16.mxu0 0
        %2946 = vmatmul.mubr.bf16.gmra.mrb[0].mxu0 %v980
        %v2947 = vpop.f32.mrb[0].mxu0
        %v2948 = vadd.f32 0.0, %v2947
        %v2949 = vpop.f32.mrb[0].mxu0
        %v2950 = vpop.f32.mrb[0].mxu0
        %v2951 = vadd.f32 0.0, %v2950
        %v2952 = vpop.f32.mrb[0].mxu0
        %2953 = vmatprep.mubr.bf16.mxu0 0
        %2954 = vmatmul.mubr.bf16.gmra.mrb[0].mxu0 %v981
        %v2955 = vpop.f32.mrb[0].mxu0
        %v2956 = vadd.f32 0.0, %v2955
        %v2957 = vpop.f32.mrb[0].mxu0
        %v2958 = vpop.f32.mrb[0].mxu0
        %v2959 = vadd.f32 0.0, %v2958
        %v2960 = vpop.f32.mrb[0].mxu0
        %2961 = vmatprep.mubr.bf16.mxu0 0
        %2962 = vmatmul.mubr.bf16.gmra.mrb[0].mxu0 %v982
        %v2963 = vpop.f32.mrb[0].mxu0
        %v2964 = vadd.f32 0.0, %v2963
        %v2965 = vpop.f32.mrb[0].mxu0
        %v2966 = vpop.f32.mrb[0].mxu0
        %v2967 = vadd.f32 0.0, %v2966
        %v2968 = vpop.f32.mrb[0].mxu0
        %2969 = vmatprep.mubr.bf16.mxu0 0
        %2970 = vmatmul.mubr.bf16.gmra.mrb[0].mxu0 %v983
        %v2971 = vpop.f32.mrb[0].mxu0
        %v2972 = vadd.f32 0.0, %v2971
        %v2973 = vpop.f32.mrb[0].mxu0
        %v2974 = vpop.f32.mrb[0].mxu0
        %v2975 = vadd.f32 0.0, %v2974
        %v2976 = vpop.f32.mrb[0].mxu0
        %2977 = vmatprep.mubr.bf16.mxu0 0
        %2978 = vmatmul.mubr.bf16.gmra.mrb[0].mxu0 %v984
        %v2979 = vpop.f32.mrb[0].mxu0
        %v2980 = vadd.f32 0.0, %v2979
        %v2981 = vpop.f32.mrb[0].mxu0
        %v2982 = vpop.f32.mrb[0].mxu0
        %v2983 = vadd.f32 0.0, %v2982
        %v2984 = vpop.f32.mrb[0].mxu0
        %2985 = vmatprep.mubr.bf16.mxu0 0
        %2986 = vmatmul.mubr.bf16.gmra.mrb[0].mxu0 %v985
        %v2987 = vpop.f32.mrb[0].mxu0
        %v2988 = vadd.f32 0.0, %v2987
        %v2989 = vpop.f32.mrb[0].mxu0
        %v2990 = vpop.f32.mrb[0].mxu0
        %v2991 = vadd.f32 0.0, %v2990
        %v2992 = vpop.f32.mrb[0].mxu0
        %2993 = vmatprep.mubr.bf16.mxu0 0
        %2994 = vmatmul.mubr.bf16.gmra.mrb[0].mxu0 %v986
        %v2995 = vpop.f32.mrb[0].mxu0
        %v2996 = vadd.f32 0.0, %v2995
        %v2997 = vpop.f32.mrb[0].mxu0
        %v2998 = vpop.f32.mrb[0].mxu0
        %v2999 = vadd.f32 0.0, %v2998
        %v3000 = vpop.f32.mrb[0].mxu0
        %3001 = vmatprep.mubr.bf16.mxu0 0
        %3002 = vmatmul.mubr.bf16.gmra.mrb[0].mxu0 %v987
        %v3003 = vpop.f32.mrb[0].mxu0
        %v3004 = vadd.f32 0.0, %v3003
        %v3005 = vpop.f32.mrb[0].mxu0
        %v3006 = vpop.f32.mrb[0].mxu0
        %v3007 = vadd.f32 0.0, %v3006
        %v3008 = vpop.f32.mrb[0].mxu0
        %3009 = vmatprep.mubr.bf16.mxu0 0
        %3010 = vmatmul.mubr.bf16.gmra.mrb[0].mxu0 %v988
        %v3011 = vpop.f32.mrb[0].mxu0
        %v3012 = vadd.f32 0.0, %v3011
        %v3013 = vpop.f32.mrb[0].mxu0
        %v3014 = vpop.f32.mrb[0].mxu0
        %v3015 = vadd.f32 0.0, %v3014
        %v3016 = vpop.f32.mrb[0].mxu0
        %3017 = vmatprep.mubr.bf16.mxu0 0
        %3018 = vmatmul.mubr.bf16.gmra.mrb[0].mxu0 %v989
        %v3019 = vpop.f32.mrb[0].mxu0
        %v3020 = vadd.f32 0.0, %v3019
        %v3021 = vpop.f32.mrb[0].mxu0
        %v3022 = vpop.f32.mrb[0].mxu0
        %v3023 = vadd.f32 0.0, %v3022
        %v3024 = vpop.f32.mrb[0].mxu0
        %3025 = vmatprep.mubr.bf16.mxu0 0
        %3026 = vmatmul.mubr.bf16.gmra.mrb[0].mxu0 %v990
        %v3027 = vpop.f32.mrb[0].mxu0
        %v3028 = vadd.f32 0.0, %v3027
        %v3029 = vpop.f32.mrb[0].mxu0
        %v3030 = vpop.f32.mrb[0].mxu0
        %v3031 = vadd.f32 0.0, %v3030
        %v3032 = vpop.f32.mrb[0].mxu0
        %3033 = vmatprep.mubr.bf16.mxu0 0
        %3034 = vmatmul.mubr.bf16.gmra.mrb[0].mxu0 %v974
        %v3035 = vpop.f32.mrb[0].mxu0
        %v3036 = vadd.f32 0.0, %v3035
        %v3037 = vpop.f32.mrb[0].mxu0
        %v3038 = vpop.f32.mrb[0].mxu0
        %v3039 = vadd.f32 0.0, %v3038
        %v3040 = vpop.f32.mrb[0].mxu0
        %3041 = vdwg.mxu0
        %v3042 = vadd.f32 %v2784, %v2916
        %v3043 = vadd.f32 %v2785, %v2919
        %v3044 = vadd.f32 %v2786, %v2924
        %v3045 = vadd.f32 %v2787, %v2927
        %v3046 = vadd.f32 %v2788, %v2932
        %v3047 = vadd.f32 %v2789, %v2935
        %v3048 = vadd.f32 %v2790, %v2940
        %v3049 = vadd.f32 %v2791, %v2943
        %v3050 = vadd.f32 %v2792, %v2948
        %v3051 = vadd.f32 %v2793, %v2951
        %v3052 = vadd.f32 %v2794, %v2956
        %v3053 = vadd.f32 %v2795, %v2959
        %v3054 = vadd.f32 %v2796, %v2964
        %v3055 = vadd.f32 %v2797, %v2967
        %v3056 = vadd.f32 %v2798, %v2972
        %v3057 = vadd.f32 %v2799, %v2975
        %v3058 = vadd.f32 %v2800, %v2980
        %v3059 = vadd.f32 %v2801, %v2983
        %v3060 = vadd.f32 %v2802, %v2988
        %v3061 = vadd.f32 %v2803, %v2991
        %v3062 = vadd.f32 %v2804, %v2996
        %v3063 = vadd.f32 %v2805, %v2999
        %v3064 = vadd.f32 %v2806, %v3004
        %v3065 = vadd.f32 %v2807, %v3007
        %v3066 = vadd.f32 %v2808, %v3012
        %v3067 = vadd.f32 %v2809, %v3015
        %v3068 = vadd.f32 %v2810, %v3020
        %v3069 = vadd.f32 %v2811, %v3023
        %v3070 = vadd.f32 %v2812, %v3028
        %v3071 = vadd.f32 %v2813, %v3031
        %v3072 = vadd.f32 %v2814, %v3036
        %v3073 = vadd.f32 %v2815, %v3039
        %s3074 = scalar_lea.vmem [#allocation7], 448
        %v3075 = vld [vmem:[%s3074] sm:$0xf]
        %v3076 = vld [vmem:[%s3074 + $0x4] sm:$0xf]
        %v3077 = vld [vmem:[%s3074 + $0x8] sm:$0xf]
        %v3078 = vld [vmem:[%s3074 + $0xc] sm:$0xf]
        %v3079 = vld [vmem:[%s3074 + $0x10] sm:$0xf]
        %v3080 = vld [vmem:[%s3074 + $0x14] sm:$0xf]
        %v3081 = vld [vmem:[%s3074 + $0x18] sm:$0xf]
        %v3082 = vld [vmem:[%s3074 + $0x1c] sm:$0xf]
        %v3083 = vld [vmem:[%s3074 + $0x20] sm:$0xf]
        %v3084 = vld [vmem:[%s3074 + $0x24] sm:$0xf]
        %v3085 = vld [vmem:[%s3074 + $0x28] sm:$0xf]
        %v3086 = vld [vmem:[%s3074 + $0x2c] sm:$0xf]
        %v3087 = vld [vmem:[%s3074 + $0x30] sm:$0xf]
        %v3088 = vld [vmem:[%s3074 + $0x34] sm:$0xf]
        %v3089 = vld [vmem:[%s3074 + $0x38] sm:$0xf]
        %v3090 = vld [vmem:[%s3074 + $0x3c] sm:$0xf]
        %v3107 = vunpack.c.l.b16 %v3075
        %v3108 = vunpack.c.l.b16 %v3076
        %v3109 = vunpack.c.l.b16 %v3077
        %v3110 = vunpack.c.l.b16 %v3078
        %v3111 = vunpack.c.l.b16 %v3079
        %v3112 = vunpack.c.l.b16 %v3080
        %v3113 = vunpack.c.l.b16 %v3081
        %v3114 = vunpack.c.l.b16 %v3082
        %v3115 = vunpack.c.l.b16 %v3083
        %v3116 = vunpack.c.l.b16 %v3084
        %v3117 = vunpack.c.l.b16 %v3085
        %v3118 = vunpack.c.l.b16 %v3086
        %v3119 = vunpack.c.l.b16 %v3087
        %v3120 = vunpack.c.l.b16 %v3088
        %v3121 = vunpack.c.l.b16 %v3089
        %v3122 = vunpack.c.l.b16 %v3090
        %v3123 = vpack.c.b16 %v3108, %v3107
        %v3124 = vpack.c.b16 %v3110, %v3109
        %v3125 = vpack.c.b16 %v3112, %v3111
        %v3126 = vpack.c.b16 %v3114, %v3113
        %v3127 = vpack.c.b16 %v3116, %v3115
        %v3128 = vpack.c.b16 %v3118, %v3117
        %v3129 = vpack.c.b16 %v3120, %v3119
        %v3130 = vpack.c.b16 %v3122, %v3121
        %3139 = vmatprep.subr.bf16.mxu0 0
        %3140 = vmatpush1.bf16.msra.mxu0 %v3123
        %3141 = vmatprep.subr.bf16.mxu0 0
        %3142 = vmatpush1.bf16.msra.mxu0 %v3124
        %3143 = vmatprep.subr.bf16.mxu0 0
        %3144 = vmatpush1.bf16.msra.mxu0 %v3125
        %3145 = vmatprep.subr.bf16.mxu0 0
        %3146 = vmatpush1.bf16.msra.mxu0 %v3126
        %3147 = vmatprep.subr.bf16.mxu0 0
        %3148 = vmatpush1.bf16.msra.mxu0 %v3127
        %3149 = vmatprep.subr.bf16.mxu0 0
        %3150 = vmatpush1.bf16.msra.mxu0 %v3128
        %3151 = vmatprep.subr.bf16.mxu0 0
        %3152 = vmatpush1.bf16.msra.mxu0 %v3129
        %3153 = vmatprep.subr.bf16.mxu0 0
        %3154 = vmatpush1.bf16.msra.mxu0 %v3130
        %3155 = vmatprep.subr.bf16.mxu0 0
        %3156 = vmatpush1.bf16.msra.mxu0 0
        %3157 = vmatprep.subr.bf16.mxu0 0
        %3158 = vmatpush1.bf16.msra.mxu0 0
        %3159 = vmatprep.subr.bf16.mxu0 0
        %3160 = vmatpush1.bf16.msra.mxu0 0
        %3161 = vmatprep.subr.bf16.mxu0 0
        %3162 = vmatpush1.bf16.msra.mxu0 0
        %3163 = vmatprep.subr.bf16.mxu0 0
        %3164 = vmatpush1.bf16.msra.mxu0 0
        %3165 = vmatprep.subr.bf16.mxu0 0
        %3166 = vmatpush1.bf16.msra.mxu0 0
        %3167 = vmatprep.subr.bf16.mxu0 0
        %3168 = vmatpush1.bf16.msra.mxu0 0
        %3169 = vmatprep.subr.bf16.mxu0 0
        %3170 = vmatpush1.bf16.msra.mxu0 0
        %3171 = vmatprep.mubr.bf16.mxu0 0
        %3172 = vmatmul.mubr.bf16.gmra.mrb[0].mxu0 %v1060
        %v3173 = vpop.f32.mrb[0].mxu0
        %v3174 = vadd.f32 0.0, %v3173
        %v3175 = vpop.f32.mrb[0].mxu0
        %v3176 = vpop.f32.mrb[0].mxu0
        %v3177 = vadd.f32 0.0, %v3176
        %v3178 = vpop.f32.mrb[0].mxu0
        %3179 = vmatprep.mubr.bf16.mxu0 0
        %3180 = vmatmul.mubr.bf16.gmra.mrb[0].mxu0 %v1072
        %v3181 = vpop.f32.mrb[0].mxu0
        %v3182 = vadd.f32 0.0, %v3181
        %v3183 = vpop.f32.mrb[0].mxu0
        %v3184 = vpop.f32.mrb[0].mxu0
        %v3185 = vadd.f32 0.0, %v3184
        %v3186 = vpop.f32.mrb[0].mxu0
        %3187 = vmatprep.mubr.bf16.mxu0 0
        %3188 = vmatmul.mubr.bf16.gmra.mrb[0].mxu0 %v1084
        %v3189 = vpop.f32.mrb[0].mxu0
        %v3190 = vadd.f32 0.0, %v3189
        %v3191 = vpop.f32.mrb[0].mxu0
        %v3192 = vpop.f32.mrb[0].mxu0
        %v3193 = vadd.f32 0.0, %v3192
        %v3194 = vpop.f32.mrb[0].mxu0
        %3195 = vmatprep.mubr.bf16.mxu0 0
        %3196 = vmatmul.mubr.bf16.gmra.mrb[0].mxu0 %v1096
        %v3197 = vpop.f32.mrb[0].mxu0
        %v3198 = vadd.f32 0.0, %v3197
        %v3199 = vpop.f32.mrb[0].mxu0
        %v3200 = vpop.f32.mrb[0].mxu0
        %v3201 = vadd.f32 0.0, %v3200
        %v3202 = vpop.f32.mrb[0].mxu0
        %3203 = vmatprep.mubr.bf16.mxu0 0
        %3204 = vmatmul.mubr.bf16.gmra.mrb[0].mxu0 %v1108
        %v3205 = vpop.f32.mrb[0].mxu0
        %v3206 = vadd.f32 0.0, %v3205
        %v3207 = vpop.f32.mrb[0].mxu0
        %v3208 = vpop.f32.mrb[0].mxu0
        %v3209 = vadd.f32 0.0, %v3208
        %v3210 = vpop.f32.mrb[0].mxu0
        %3211 = vmatprep.mubr.bf16.mxu0 0
        %3212 = vmatmul.mubr.bf16.gmra.mrb[0].mxu0 %v1120
        %v3213 = vpop.f32.mrb[0].mxu0
        %v3214 = vadd.f32 0.0, %v3213
        %v3215 = vpop.f32.mrb[0].mxu0
        %v3216 = vpop.f32.mrb[0].mxu0
        %v3217 = vadd.f32 0.0, %v3216
        %v3218 = vpop.f32.mrb[0].mxu0
        %3219 = vmatprep.mubr.bf16.mxu0 0
        %3220 = vmatmul.mubr.bf16.gmra.mrb[0].mxu0 %v1132
        %v3221 = vpop.f32.mrb[0].mxu0
        %v3222 = vadd.f32 0.0, %v3221
        %v3223 = vpop.f32.mrb[0].mxu0
        %v3224 = vpop.f32.mrb[0].mxu0
        %v3225 = vadd.f32 0.0, %v3224
        %v3226 = vpop.f32.mrb[0].mxu0
        %3227 = vmatprep.mubr.bf16.mxu0 0
        %3228 = vmatmul.mubr.bf16.gmra.mrb[0].mxu0 %v1144
        %v3229 = vpop.f32.mrb[0].mxu0
        %v3230 = vadd.f32 0.0, %v3229
        %v3231 = vpop.f32.mrb[0].mxu0
        %v3232 = vpop.f32.mrb[0].mxu0
        %v3233 = vadd.f32 0.0, %v3232
        %v3234 = vpop.f32.mrb[0].mxu0
        %3235 = vmatprep.mubr.bf16.mxu0 0
        %3236 = vmatmul.mubr.bf16.gmra.mrb[0].mxu0 %v1156
        %v3237 = vpop.f32.mrb[0].mxu0
        %v3238 = vadd.f32 0.0, %v3237
        %v3239 = vpop.f32.mrb[0].mxu0
        %v3240 = vpop.f32.mrb[0].mxu0
        %v3241 = vadd.f32 0.0, %v3240
        %v3242 = vpop.f32.mrb[0].mxu0
        %3243 = vmatprep.mubr.bf16.mxu0 0
        %3244 = vmatmul.mubr.bf16.gmra.mrb[0].mxu0 %v1168
        %v3245 = vpop.f32.mrb[0].mxu0
        %v3246 = vadd.f32 0.0, %v3245
        %v3247 = vpop.f32.mrb[0].mxu0
        %v3248 = vpop.f32.mrb[0].mxu0
        %v3249 = vadd.f32 0.0, %v3248
        %v3250 = vpop.f32.mrb[0].mxu0
        %3251 = vmatprep.mubr.bf16.mxu0 0
        %3252 = vmatmul.mubr.bf16.gmra.mrb[0].mxu0 %v1180
        %v3253 = vpop.f32.mrb[0].mxu0
        %v3254 = vadd.f32 0.0, %v3253
        %v3255 = vpop.f32.mrb[0].mxu0
        %v3256 = vpop.f32.mrb[0].mxu0
        %v3257 = vadd.f32 0.0, %v3256
        %v3258 = vpop.f32.mrb[0].mxu0
        %3259 = vmatprep.mubr.bf16.mxu0 0
        %3260 = vmatmul.mubr.bf16.gmra.mrb[0].mxu0 %v1192
        %v3261 = vpop.f32.mrb[0].mxu0
        %v3262 = vadd.f32 0.0, %v3261
        %v3263 = vpop.f32.mrb[0].mxu0
        %v3264 = vpop.f32.mrb[0].mxu0
        %v3265 = vadd.f32 0.0, %v3264
        %v3266 = vpop.f32.mrb[0].mxu0
        %3267 = vmatprep.mubr.bf16.mxu0 0
        %3268 = vmatmul.mubr.bf16.gmra.mrb[0].mxu0 %v1204
        %v3269 = vpop.f32.mrb[0].mxu0
        %v3270 = vadd.f32 0.0, %v3269
        %v3271 = vpop.f32.mrb[0].mxu0
        %v3272 = vpop.f32.mrb[0].mxu0
        %v3273 = vadd.f32 0.0, %v3272
        %v3274 = vpop.f32.mrb[0].mxu0
        %3275 = vmatprep.mubr.bf16.mxu0 0
        %3276 = vmatmul.mubr.bf16.gmra.mrb[0].mxu0 %v1216
        %v3277 = vpop.f32.mrb[0].mxu0
        %v3278 = vadd.f32 0.0, %v3277
        %v3279 = vpop.f32.mrb[0].mxu0
        %v3280 = vpop.f32.mrb[0].mxu0
        %v3281 = vadd.f32 0.0, %v3280
        %v3282 = vpop.f32.mrb[0].mxu0
        %3283 = vmatprep.mubr.bf16.mxu0 0
        %3284 = vmatmul.mubr.bf16.gmra.mrb[0].mxu0 %v2292
        %v3285 = vpop.f32.mrb[0].mxu0
        %v3286 = vadd.f32 0.0, %v3285
        %v3287 = vpop.f32.mrb[0].mxu0
        %v3288 = vpop.f32.mrb[0].mxu0
        %v3289 = vadd.f32 0.0, %v3288
        %v3290 = vpop.f32.mrb[0].mxu0
        %3291 = vmatprep.mubr.bf16.mxu0 0
        %3292 = vmatmul.mubr.bf16.gmra.mrb[0].mxu0 %v1036
        %v3293 = vpop.f32.mrb[0].mxu0
        %v3294 = vadd.f32 0.0, %v3293
        %v3295 = vpop.f32.mrb[0].mxu0
        %v3296 = vpop.f32.mrb[0].mxu0
        %v3297 = vadd.f32 0.0, %v3296
        %v3298 = vpop.f32.mrb[0].mxu0
        %3299 = vdwg.mxu0
        %v3300 = vadd.f32 %v3042, %v3174
        %v3301 = vadd.f32 %v3043, %v3177
        %v3302 = vadd.f32 %v3044, %v3182
        %v3303 = vadd.f32 %v3045, %v3185
        %v3304 = vadd.f32 %v3046, %v3190
        %v3305 = vadd.f32 %v3047, %v3193
        %v3306 = vadd.f32 %v3048, %v3198
        %v3307 = vadd.f32 %v3049, %v3201
        %v3308 = vadd.f32 %v3050, %v3206
        %v3309 = vadd.f32 %v3051, %v3209
        %v3310 = vadd.f32 %v3052, %v3214
        %v3311 = vadd.f32 %v3053, %v3217
        %v3312 = vadd.f32 %v3054, %v3222
        %v3313 = vadd.f32 %v3055, %v3225
        %v3314 = vadd.f32 %v3056, %v3230
        %v3315 = vadd.f32 %v3057, %v3233
        %v3316 = vadd.f32 %v3058, %v3238
        %v3317 = vadd.f32 %v3059, %v3241
        %v3318 = vadd.f32 %v3060, %v3246
        %v3319 = vadd.f32 %v3061, %v3249
        %v3320 = vadd.f32 %v3062, %v3254
        %v3321 = vadd.f32 %v3063, %v3257
        %v3322 = vadd.f32 %v3064, %v3262
        %v3323 = vadd.f32 %v3065, %v3265
        %v3324 = vadd.f32 %v3066, %v3270
        %v3325 = vadd.f32 %v3067, %v3273
        %v3326 = vadd.f32 %v3068, %v3278
        %v3327 = vadd.f32 %v3069, %v3281
        %v3328 = vadd.f32 %v3070, %v3286
        %v3329 = vadd.f32 %v3071, %v3289
        %v3330 = vadd.f32 %v3072, %v3294
        %v3331 = vadd.f32 %v3073, %v3297
        %s3332 = scalar_lea.vmem [#allocation7], 512
        %v3333 = vld [vmem:[%s3332] sm:$0xf]
        %v3334 = vld [vmem:[%s3332 + $0x4] sm:$0xf]
        %v3335 = vld [vmem:[%s3332 + $0x8] sm:$0xf]
        %v3336 = vld [vmem:[%s3332 + $0xc] sm:$0xf]
        %v3337 = vld [vmem:[%s3332 + $0x10] sm:$0xf]
        %v3338 = vld [vmem:[%s3332 + $0x14] sm:$0xf]
        %v3339 = vld [vmem:[%s3332 + $0x18] sm:$0xf]
        %v3340 = vld [vmem:[%s3332 + $0x1c] sm:$0xf]
        %v3341 = vld [vmem:[%s3332 + $0x20] sm:$0xf]
        %v3342 = vld [vmem:[%s3332 + $0x24] sm:$0xf]
        %v3343 = vld [vmem:[%s3332 + $0x28] sm:$0xf]
        %v3344 = vld [vmem:[%s3332 + $0x2c] sm:$0xf]
        %v3345 = vld [vmem:[%s3332 + $0x30] sm:$0xf]
        %v3346 = vld [vmem:[%s3332 + $0x34] sm:$0xf]
        %v3347 = vld [vmem:[%s3332 + $0x38] sm:$0xf]
        %v3348 = vld [vmem:[%s3332 + $0x3c] sm:$0xf]
        %v3365 = vunpack.c.l.b16 %v3333
        %v3366 = vunpack.c.l.b16 %v3334
        %v3367 = vunpack.c.l.b16 %v3335
        %v3368 = vunpack.c.l.b16 %v3336
        %v3369 = vunpack.c.l.b16 %v3337
        %v3370 = vunpack.c.l.b16 %v3338
        %v3371 = vunpack.c.l.b16 %v3339
        %v3372 = vunpack.c.l.b16 %v3340
        %v3373 = vunpack.c.l.b16 %v3341
        %v3374 = vunpack.c.l.b16 %v3342
        %v3375 = vunpack.c.l.b16 %v3343
        %v3376 = vunpack.c.l.b16 %v3344
        %v3377 = vunpack.c.l.b16 %v3345
        %v3378 = vunpack.c.l.b16 %v3346
        %v3379 = vunpack.c.l.b16 %v3347
        %v3380 = vunpack.c.l.b16 %v3348
        %v3381 = vpack.c.b16 %v3366, %v3365
        %v3382 = vpack.c.b16 %v3368, %v3367
        %v3383 = vpack.c.b16 %v3370, %v3369
        %v3384 = vpack.c.b16 %v3372, %v3371
        %v3385 = vpack.c.b16 %v3374, %v3373
        %v3386 = vpack.c.b16 %v3376, %v3375
        %v3387 = vpack.c.b16 %v3378, %v3377
        %v3388 = vpack.c.b16 %v3380, %v3379
        %3397 = vmatprep.subr.bf16.mxu0 0
        %3398 = vmatpush1.bf16.msra.mxu0 %v3381
        %3399 = vmatprep.subr.bf16.mxu0 0
        %3400 = vmatpush1.bf16.msra.mxu0 %v3382
        %3401 = vmatprep.subr.bf16.mxu0 0
        %3402 = vmatpush1.bf16.msra.mxu0 %v3383
        %3403 = vmatprep.subr.bf16.mxu0 0
        %3404 = vmatpush1.bf16.msra.mxu0 %v3384
        %3405 = vmatprep.subr.bf16.mxu0 0
        %3406 = vmatpush1.bf16.msra.mxu0 %v3385
        %3407 = vmatprep.subr.bf16.mxu0 0
        %3408 = vmatpush1.bf16.msra.mxu0 %v3386
        %3409 = vmatprep.subr.bf16.mxu0 0
        %3410 = vmatpush1.bf16.msra.mxu0 %v3387
        %3411 = vmatprep.subr.bf16.mxu0 0
        %3412 = vmatpush1.bf16.msra.mxu0 %v3388
        %3413 = vmatprep.subr.bf16.mxu0 0
        %3414 = vmatpush1.bf16.msra.mxu0 0
        %3415 = vmatprep.subr.bf16.mxu0 0
        %3416 = vmatpush1.bf16.msra.mxu0 0
        %3417 = vmatprep.subr.bf16.mxu0 0
        %3418 = vmatpush1.bf16.msra.mxu0 0
        %3419 = vmatprep.subr.bf16.mxu0 0
        %3420 = vmatpush1.bf16.msra.mxu0 0
        %3421 = vmatprep.subr.bf16.mxu0 0
        %3422 = vmatpush1.bf16.msra.mxu0 0
        %3423 = vmatprep.subr.bf16.mxu0 0
        %3424 = vmatpush1.bf16.msra.mxu0 0
        %3425 = vmatprep.subr.bf16.mxu0 0
        %3426 = vmatpush1.bf16.msra.mxu0 0
        %3427 = vmatprep.subr.bf16.mxu0 0
        %3428 = vmatpush1.bf16.msra.mxu0 0
        %3429 = vmatprep.mubr.bf16.mxu0 0
        %3430 = vmatmul.mubr.bf16.gmra.mrb[0].mxu0 %v1709
        %v3431 = vpop.f32.mrb[0].mxu0
        %v3432 = vadd.f32 0.0, %v3431
        %v3433 = vpop.f32.mrb[0].mxu0
        %v3434 = vpop.f32.mrb[0].mxu0
        %v3435 = vadd.f32 0.0, %v3434
        %v3436 = vpop.f32.mrb[0].mxu0
        %3437 = vmatprep.mubr.bf16.mxu0 0
        %3438 = vmatmul.mubr.bf16.gmra.mrb[0].mxu0 %v1712
        %v3439 = vpop.f32.mrb[0].mxu0
        %v3440 = vadd.f32 0.0, %v3439
        %v3441 = vpop.f32.mrb[0].mxu0
        %v3442 = vpop.f32.mrb[0].mxu0
        %v3443 = vadd.f32 0.0, %v3442
        %v3444 = vpop.f32.mrb[0].mxu0
        %3445 = vmatprep.mubr.bf16.mxu0 0
        %3446 = vmatmul.mubr.bf16.gmra.mrb[0].mxu0 %v1715
        %v3447 = vpop.f32.mrb[0].mxu0
        %v3448 = vadd.f32 0.0, %v3447
        %v3449 = vpop.f32.mrb[0].mxu0
        %v3450 = vpop.f32.mrb[0].mxu0
        %v3451 = vadd.f32 0.0, %v3450
        %v3452 = vpop.f32.mrb[0].mxu0
        %3453 = vmatprep.mubr.bf16.mxu0 0
        %3454 = vmatmul.mubr.bf16.gmra.mrb[0].mxu0 %v1718
        %v3455 = vpop.f32.mrb[0].mxu0
        %v3456 = vadd.f32 0.0, %v3455
        %v3457 = vpop.f32.mrb[0].mxu0
        %v3458 = vpop.f32.mrb[0].mxu0
        %v3459 = vadd.f32 0.0, %v3458
        %v3460 = vpop.f32.mrb[0].mxu0
        %3461 = vmatprep.mubr.bf16.mxu0 0
        %3462 = vmatmul.mubr.bf16.gmra.mrb[0].mxu0 %v1721
        %v3463 = vpop.f32.mrb[0].mxu0
        %v3464 = vadd.f32 0.0, %v3463
        %v3465 = vpop.f32.mrb[0].mxu0
        %v3466 = vpop.f32.mrb[0].mxu0
        %v3467 = vadd.f32 0.0, %v3466
        %v3468 = vpop.f32.mrb[0].mxu0
        %3469 = vmatprep.mubr.bf16.mxu0 0
        %3470 = vmatmul.mubr.bf16.gmra.mrb[0].mxu0 %v1724
        %v3471 = vpop.f32.mrb[0].mxu0
        %v3472 = vadd.f32 0.0, %v3471
        %v3473 = vpop.f32.mrb[0].mxu0
        %v3474 = vpop.f32.mrb[0].mxu0
        %v3475 = vadd.f32 0.0, %v3474
        %v3476 = vpop.f32.mrb[0].mxu0
        %3477 = vmatprep.mubr.bf16.mxu0 0
        %3478 = vmatmul.mubr.bf16.gmra.mrb[0].mxu0 %v1727
        %v3479 = vpop.f32.mrb[0].mxu0
        %v3480 = vadd.f32 0.0, %v3479
        %v3481 = vpop.f32.mrb[0].mxu0
        %v3482 = vpop.f32.mrb[0].mxu0
        %v3483 = vadd.f32 0.0, %v3482
        %v3484 = vpop.f32.mrb[0].mxu0
        %3485 = vmatprep.mubr.bf16.mxu0 0
        %3486 = vmatmul.mubr.bf16.gmra.mrb[0].mxu0 %v1730
        %v3487 = vpop.f32.mrb[0].mxu0
        %v3488 = vadd.f32 0.0, %v3487
        %v3489 = vpop.f32.mrb[0].mxu0
        %v3490 = vpop.f32.mrb[0].mxu0
        %v3491 = vadd.f32 0.0, %v3490
        %v3492 = vpop.f32.mrb[0].mxu0
        %3493 = vmatprep.mubr.bf16.mxu0 0
        %3494 = vmatmul.mubr.bf16.gmra.mrb[0].mxu0 %v1733
        %v3495 = vpop.f32.mrb[0].mxu0
        %v3496 = vadd.f32 0.0, %v3495
        %v3497 = vpop.f32.mrb[0].mxu0
        %v3498 = vpop.f32.mrb[0].mxu0
        %v3499 = vadd.f32 0.0, %v3498
        %v3500 = vpop.f32.mrb[0].mxu0
        %3501 = vmatprep.mubr.bf16.mxu0 0
        %3502 = vmatmul.mubr.bf16.gmra.mrb[0].mxu0 %v1736
        %v3503 = vpop.f32.mrb[0].mxu0
        %v3504 = vadd.f32 0.0, %v3503
        %v3505 = vpop.f32.mrb[0].mxu0
        %v3506 = vpop.f32.mrb[0].mxu0
        %v3507 = vadd.f32 0.0, %v3506
        %v3508 = vpop.f32.mrb[0].mxu0
        %3509 = vmatprep.mubr.bf16.mxu0 0
        %3510 = vmatmul.mubr.bf16.gmra.mrb[0].mxu0 %v1739
        %v3511 = vpop.f32.mrb[0].mxu0
        %v3512 = vadd.f32 0.0, %v3511
        %v3513 = vpop.f32.mrb[0].mxu0
        %v3514 = vpop.f32.mrb[0].mxu0
        %v3515 = vadd.f32 0.0, %v3514
        %v3516 = vpop.f32.mrb[0].mxu0
        %3517 = vmatprep.mubr.bf16.mxu0 0
        %3518 = vmatmul.mubr.bf16.gmra.mrb[0].mxu0 %v1742
        %v3519 = vpop.f32.mrb[0].mxu0
        %v3520 = vadd.f32 0.0, %v3519
        %v3521 = vpop.f32.mrb[0].mxu0
        %v3522 = vpop.f32.mrb[0].mxu0
        %v3523 = vadd.f32 0.0, %v3522
        %v3524 = vpop.f32.mrb[0].mxu0
        %3525 = vmatprep.mubr.bf16.mxu0 0
        %3526 = vmatmul.mubr.bf16.gmra.mrb[0].mxu0 %v1745
        %v3527 = vpop.f32.mrb[0].mxu0
        %v3528 = vadd.f32 0.0, %v3527
        %v3529 = vpop.f32.mrb[0].mxu0
        %v3530 = vpop.f32.mrb[0].mxu0
        %v3531 = vadd.f32 0.0, %v3530
        %v3532 = vpop.f32.mrb[0].mxu0
        %3533 = vmatprep.mubr.bf16.mxu0 0
        %3534 = vmatmul.mubr.bf16.gmra.mrb[0].mxu0 %v1748
        %v3535 = vpop.f32.mrb[0].mxu0
        %v3536 = vadd.f32 0.0, %v3535
        %v3537 = vpop.f32.mrb[0].mxu0
        %v3538 = vpop.f32.mrb[0].mxu0
        %v3539 = vadd.f32 0.0, %v3538
        %v3540 = vpop.f32.mrb[0].mxu0
        %3541 = vmatprep.mubr.bf16.mxu0 0
        %3542 = vmatmul.mubr.bf16.gmra.mrb[0].mxu0 %v2556
        %v3543 = vpop.f32.mrb[0].mxu0
        %v3544 = vadd.f32 0.0, %v3543
        %v3545 = vpop.f32.mrb[0].mxu0
        %v3546 = vpop.f32.mrb[0].mxu0
        %v3547 = vadd.f32 0.0, %v3546
        %v3548 = vpop.f32.mrb[0].mxu0
        %3549 = vmatprep.mubr.bf16.mxu0 0
        %3550 = vmatmul.mubr.bf16.gmra.mrb[0].mxu0 %v1703
        %v3551 = vpop.f32.mrb[0].mxu0
        %v3552 = vadd.f32 0.0, %v3551
        %v3553 = vpop.f32.mrb[0].mxu0
        %v3554 = vpop.f32.mrb[0].mxu0
        %v3555 = vadd.f32 0.0, %v3554
        %v3556 = vpop.f32.mrb[0].mxu0
        %3557 = vdwg.mxu0
        %v3558 = vadd.f32 %v3300, %v3432
        %v3559 = vadd.f32 %v3301, %v3435
        %v3560 = vadd.f32 %v3302, %v3440
        %v3561 = vadd.f32 %v3303, %v3443
        %v3562 = vadd.f32 %v3304, %v3448
        %v3563 = vadd.f32 %v3305, %v3451
        %v3564 = vadd.f32 %v3306, %v3456
        %v3565 = vadd.f32 %v3307, %v3459
        %v3566 = vadd.f32 %v3308, %v3464
        %v3567 = vadd.f32 %v3309, %v3467
        %v3568 = vadd.f32 %v3310, %v3472
        %v3569 = vadd.f32 %v3311, %v3475
        %v3570 = vadd.f32 %v3312, %v3480
        %v3571 = vadd.f32 %v3313, %v3483
        %v3572 = vadd.f32 %v3314, %v3488
        %v3573 = vadd.f32 %v3315, %v3491
        %v3574 = vadd.f32 %v3316, %v3496
        %v3575 = vadd.f32 %v3317, %v3499
        %v3576 = vadd.f32 %v3318, %v3504
        %v3577 = vadd.f32 %v3319, %v3507
        %v3578 = vadd.f32 %v3320, %v3512
        %v3579 = vadd.f32 %v3321, %v3515
        %v3580 = vadd.f32 %v3322, %v3520
        %v3581 = vadd.f32 %v3323, %v3523
        %v3582 = vadd.f32 %v3324, %v3528
        %v3583 = vadd.f32 %v3325, %v3531
        %v3584 = vadd.f32 %v3326, %v3536
        %v3585 = vadd.f32 %v3327, %v3539
        %v3586 = vadd.f32 %v3328, %v3544
        %v3587 = vadd.f32 %v3329, %v3547
        %v3588 = vadd.f32 %v3330, %v3552
        %v3589 = vadd.f32 %v3331, %v3555
        %v3590 = vld [vmem:[%s4] sm:$0x1]
        %v3592 = vlaneseq
        %v3593 = vshrl.u32 %v3592, 7
        %v3594 = vsub.s32 0, %v3593
        %v3595 = vrot.slane %v3590, %v3594
        %v3597 = vadd.f32 %v3558, %v3595
        %v3598 = vadd.f32 %v3559, %v3595
        %v3599 = vadd.f32 %v3560, %v3595
        %v3600 = vadd.f32 %v3561, %v3595
        %v3601 = vadd.f32 %v3562, %v3595
        %v3602 = vadd.f32 %v3563, %v3595
        %v3603 = vadd.f32 %v3564, %v3595
        %v3604 = vadd.f32 %v3565, %v3595
        %v3605 = vadd.f32 %v3566, %v3595
        %v3606 = vadd.f32 %v3567, %v3595
        %v3607 = vadd.f32 %v3568, %v3595
        %v3608 = vadd.f32 %v3569, %v3595
        %v3609 = vadd.f32 %v3570, %v3595
        %v3610 = vadd.f32 %v3571, %v3595
        %v3611 = vadd.f32 %v3572, %v3595
        %v3612 = vadd.f32 %v3573, %v3595
        %v3613 = vadd.f32 %v3574, %v3595
        %v3614 = vadd.f32 %v3575, %v3595
        %v3615 = vadd.f32 %v3576, %v3595
        %v3616 = vadd.f32 %v3577, %v3595
        %v3617 = vadd.f32 %v3578, %v3595
        %v3618 = vadd.f32 %v3579, %v3595
        %v3619 = vadd.f32 %v3580, %v3595
        %v3620 = vadd.f32 %v3581, %v3595
        %v3621 = vadd.f32 %v3582, %v3595
        %v3622 = vadd.f32 %v3583, %v3595
        %v3623 = vadd.f32 %v3584, %v3595
        %v3624 = vadd.f32 %v3585, %v3595
        %v3625 = vadd.f32 %v3586, %v3595
        %v3626 = vadd.f32 %v3587, %v3595
        %v3627 = vadd.f32 %v3588, %v3595
        %v3628 = vadd.f32 %v3589, %v3595
        %v3629 = vmax.f32 %v3597, 0.0
        %v3630 = vmax.f32 %v3598, 0.0
        %v3631 = vmax.f32 %v3599, 0.0
        %v3632 = vmax.f32 %v3600, 0.0
        %v3633 = vmax.f32 %v3601, 0.0
        %v3634 = vmax.f32 %v3602, 0.0
        %v3635 = vmax.f32 %v3603, 0.0
        %v3636 = vmax.f32 %v3604, 0.0
        %v3637 = vmax.f32 %v3605, 0.0
        %v3638 = vmax.f32 %v3606, 0.0
        %v3639 = vmax.f32 %v3607, 0.0
        %v3640 = vmax.f32 %v3608, 0.0
        %v3641 = vmax.f32 %v3609, 0.0
        %v3642 = vmax.f32 %v3610, 0.0
        %v3643 = vmax.f32 %v3611, 0.0
        %v3644 = vmax.f32 %v3612, 0.0
        %v3645 = vmax.f32 %v3613, 0.0
        %v3646 = vmax.f32 %v3614, 0.0
        %v3647 = vmax.f32 %v3615, 0.0
        %v3648 = vmax.f32 %v3616, 0.0
        %v3649 = vmax.f32 %v3617, 0.0
        %v3650 = vmax.f32 %v3618, 0.0
        %v3651 = vmax.f32 %v3619, 0.0
        %v3652 = vmax.f32 %v3620, 0.0
        %v3653 = vmax.f32 %v3621, 0.0
        %v3654 = vmax.f32 %v3622, 0.0
        %v3655 = vmax.f32 %v3623, 0.0
        %v3656 = vmax.f32 %v3624, 0.0
        %v3657 = vmax.f32 %v3625, 0.0
        %v3658 = vmax.f32 %v3626, 0.0
        %v3659 = vmax.f32 %v3627, 0.0
        %v3660 = vmax.f32 %v3628, 0.0
        %v3661 = vpack.c.bf16 %v3630, %v3629
        %v3662 = vpack.c.bf16 %v3632, %v3631
        %v3663 = vpack.c.bf16 %v3634, %v3633
        %v3664 = vpack.c.bf16 %v3636, %v3635
        %v3665 = vpack.c.bf16 %v3638, %v3637
        %v3666 = vpack.c.bf16 %v3640, %v3639
        %v3667 = vpack.c.bf16 %v3642, %v3641
        %v3668 = vpack.c.bf16 %v3644, %v3643
        %v3669 = vpack.c.bf16 %v3646, %v3645
        %v3670 = vpack.c.bf16 %v3648, %v3647
        %v3671 = vpack.c.bf16 %v3650, %v3649
        %v3672 = vpack.c.bf16 %v3652, %v3651
        %v3673 = vpack.c.bf16 %v3654, %v3653
        %v3674 = vpack.c.bf16 %v3656, %v3655
        %v3675 = vpack.c.bf16 %v3658, %v3657
        %v3676 = vpack.c.bf16 %v3660, %v3659
        %v3677 = vld [vmem:[#allocation8] sm:$0xf]
        %v3678 = vld [vmem:[#allocation8 + $0x4] sm:$0xf]
        %v3679 = vld [vmem:[#allocation8 + $0x8] sm:$0xf]
        %v3680 = vld [vmem:[#allocation8 + $0xc] sm:$0xf]
        %v3681 = vld [vmem:[#allocation8 + $0x10] sm:$0xf]
        %v3682 = vld [vmem:[#allocation8 + $0x14] sm:$0xf]
        %v3683 = vld [vmem:[#allocation8 + $0x18] sm:$0xf]
        %v3684 = vld [vmem:[#allocation8 + $0x1c] sm:$0xf]
        %v3685 = vld [vmem:[#allocation8 + $0x20] sm:$0xf]
        %v3686 = vld [vmem:[#allocation8 + $0x24] sm:$0xf]
        %v3687 = vld [vmem:[#allocation8 + $0x28] sm:$0xf]
        %v3688 = vld [vmem:[#allocation8 + $0x2c] sm:$0xf]
        %v3689 = vld [vmem:[#allocation8 + $0x30] sm:$0xf]
        %v3690 = vld [vmem:[#allocation8 + $0x34] sm:$0xf]
        %v3691 = vld [vmem:[#allocation8 + $0x38] sm:$0xf]
        %v3692 = vld [vmem:[#allocation8 + $0x3c] sm:$0xf]
        %v3693 = vld [vmem:[%s6] sm:$0x1]
        %v3695 = vlaneseq
        %v3696 = vshrl.u32 %v3695, 7
        %v3697 = vsub.s32 0, %v3696
        %v3698 = vrot.slane %v3693, %v3697
        %v3716 = vunpack.c.l.b16 %v3677
        %v3717 = vunpack.c.l.b16 %v3678
        %v3718 = vunpack.c.l.b16 %v3679
        %v3719 = vunpack.c.l.b16 %v3680
        %v3720 = vunpack.c.l.b16 %v3681
        %v3721 = vunpack.c.l.b16 %v3682
        %v3722 = vunpack.c.l.b16 %v3683
        %v3723 = vunpack.c.l.b16 %v3684
        %v3724 = vunpack.c.l.b16 %v3685
        %v3725 = vunpack.c.l.b16 %v3686
        %v3726 = vunpack.c.l.b16 %v3687
        %v3727 = vunpack.c.l.b16 %v3688
        %v3728 = vunpack.c.l.b16 %v3689
        %v3729 = vunpack.c.l.b16 %v3690
        %v3730 = vunpack.c.l.b16 %v3691
        %v3731 = vunpack.c.l.b16 %v3692
        %v3732 = vpack.c.b16 %v3717, %v3716
        %v3733 = vpack.c.b16 %v3719, %v3718
        %v3734 = vpack.c.b16 %v3721, %v3720
        %v3735 = vpack.c.b16 %v3723, %v3722
        %v3736 = vpack.c.b16 %v3725, %v3724
        %v3737 = vpack.c.b16 %v3727, %v3726
        %v3738 = vpack.c.b16 %v3729, %v3728
        %v3739 = vpack.c.b16 %v3731, %v3730
        %3748 = vmatprep.subr.bf16.mxu0 0
        %3749 = vmatpush1.bf16.msra.mxu0 %v3732
        %3750 = vmatprep.subr.bf16.mxu0 0
        %3751 = vmatpush1.bf16.msra.mxu0 %v3733
        %3752 = vmatprep.subr.bf16.mxu0 0
        %3753 = vmatpush1.bf16.msra.mxu0 %v3734
        %3754 = vmatprep.subr.bf16.mxu0 0
        %3755 = vmatpush1.bf16.msra.mxu0 %v3735
        %3756 = vmatprep.subr.bf16.mxu0 0
        %3757 = vmatpush1.bf16.msra.mxu0 %v3736
        %3758 = vmatprep.subr.bf16.mxu0 0
        %3759 = vmatpush1.bf16.msra.mxu0 %v3737
        %3760 = vmatprep.subr.bf16.mxu0 0
        %3761 = vmatpush1.bf16.msra.mxu0 %v3738
        %3762 = vmatprep.subr.bf16.mxu0 0
        %3763 = vmatpush1.bf16.msra.mxu0 %v3739
        %3764 = vmatprep.subr.bf16.mxu0 0
        %3765 = vmatpush1.bf16.msra.mxu0 0
        %3766 = vmatprep.subr.bf16.mxu0 0
        %3767 = vmatpush1.bf16.msra.mxu0 0
        %3768 = vmatprep.subr.bf16.mxu0 0
        %3769 = vmatpush1.bf16.msra.mxu0 0
        %3770 = vmatprep.subr.bf16.mxu0 0
        %3771 = vmatpush1.bf16.msra.mxu0 0
        %3772 = vmatprep.subr.bf16.mxu0 0
        %3773 = vmatpush1.bf16.msra.mxu0 0
        %3774 = vmatprep.subr.bf16.mxu0 0
        %3775 = vmatpush1.bf16.msra.mxu0 0
        %3776 = vmatprep.subr.bf16.mxu0 0
        %3777 = vmatpush1.bf16.msra.mxu0 0
        %3778 = vmatprep.subr.bf16.mxu0 0
        %3779 = vmatpush1.bf16.msra.mxu0 0
        %3780 = vmatprep.mubr.bf16.mxu0 0
        %3781 = vmatmul.mubr.bf16.gmra.mrb[0].mxu0 %v3661
        %v3782 = vpop.f32.mrb[0].mxu0
        %v3783 = vadd.f32 %v3698, %v3782
        %v3784 = vpop.f32.mrb[0].mxu0
        %v3785 = vpop.f32.mrb[0].mxu0
        %v3786 = vadd.f32 %v3698, %v3785
        %v3787 = vpop.f32.mrb[0].mxu0
        %3788 = vmatprep.mubr.bf16.mxu0 0
        %3789 = vmatmul.mubr.bf16.gmra.mrb[0].mxu0 %v3662
        %v3790 = vpop.f32.mrb[0].mxu0
        %v3791 = vadd.f32 %v3698, %v3790
        %v3792 = vpop.f32.mrb[0].mxu0
        %v3793 = vpop.f32.mrb[0].mxu0
        %v3794 = vadd.f32 %v3698, %v3793
        %v3795 = vpop.f32.mrb[0].mxu0
        %3796 = vmatprep.mubr.bf16.mxu0 0
        %3797 = vmatmul.mubr.bf16.gmra.mrb[0].mxu0 %v3663
        %v3798 = vpop.f32.mrb[0].mxu0
        %v3799 = vadd.f32 %v3698, %v3798
        %v3800 = vpop.f32.mrb[0].mxu0
        %v3801 = vpop.f32.mrb[0].mxu0
        %v3802 = vadd.f32 %v3698, %v3801
        %v3803 = vpop.f32.mrb[0].mxu0
        %3804 = vmatprep.mubr.bf16.mxu0 0
        %3805 = vmatmul.mubr.bf16.gmra.mrb[0].mxu0 %v3664
        %v3806 = vpop.f32.mrb[0].mxu0
        %v3807 = vadd.f32 %v3698, %v3806
        %v3808 = vpop.f32.mrb[0].mxu0
        %v3809 = vpop.f32.mrb[0].mxu0
        %v3810 = vadd.f32 %v3698, %v3809
        %v3811 = vpop.f32.mrb[0].mxu0
        %3812 = vmatprep.mubr.bf16.mxu0 0
        %3813 = vmatmul.mubr.bf16.gmra.mrb[0].mxu0 %v3665
        %v3814 = vpop.f32.mrb[0].mxu0
        %v3815 = vadd.f32 %v3698, %v3814
        %v3816 = vpop.f32.mrb[0].mxu0
        %v3817 = vpop.f32.mrb[0].mxu0
        %v3818 = vadd.f32 %v3698, %v3817
        %v3819 = vpop.f32.mrb[0].mxu0
        %3820 = vmatprep.mubr.bf16.mxu0 0
        %3821 = vmatmul.mubr.bf16.gmra.mrb[0].mxu0 %v3666
        %v3822 = vpop.f32.mrb[0].mxu0
        %v3823 = vadd.f32 %v3698, %v3822
        %v3824 = vpop.f32.mrb[0].mxu0
        %v3825 = vpop.f32.mrb[0].mxu0
        %v3826 = vadd.f32 %v3698, %v3825
        %v3827 = vpop.f32.mrb[0].mxu0
        %3828 = vmatprep.mubr.bf16.mxu0 0
        %3829 = vmatmul.mubr.bf16.gmra.mrb[0].mxu0 %v3667
        %v3830 = vpop.f32.mrb[0].mxu0
        %v3831 = vadd.f32 %v3698, %v3830
        %v3832 = vpop.f32.mrb[0].mxu0
        %v3833 = vpop.f32.mrb[0].mxu0
        %v3834 = vadd.f32 %v3698, %v3833
        %v3835 = vpop.f32.mrb[0].mxu0
        %3836 = vmatprep.mubr.bf16.mxu0 0
        %3837 = vmatmul.mubr.bf16.gmra.mrb[0].mxu0 %v3668
        %v3838 = vpop.f32.mrb[0].mxu0
        %v3839 = vadd.f32 %v3698, %v3838
        %v3840 = vpop.f32.mrb[0].mxu0
        %v3841 = vpop.f32.mrb[0].mxu0
        %v3842 = vadd.f32 %v3698, %v3841
        %v3843 = vpop.f32.mrb[0].mxu0
        %3844 = vmatprep.mubr.bf16.mxu0 0
        %3845 = vmatmul.mubr.bf16.gmra.mrb[0].mxu0 %v3669
        %v3846 = vpop.f32.mrb[0].mxu0
        %v3847 = vadd.f32 %v3698, %v3846
        %v3848 = vpop.f32.mrb[0].mxu0
        %v3849 = vpop.f32.mrb[0].mxu0
        %v3850 = vadd.f32 %v3698, %v3849
        %v3851 = vpop.f32.mrb[0].mxu0
        %3852 = vmatprep.mubr.bf16.mxu0 0
        %3853 = vmatmul.mubr.bf16.gmra.mrb[0].mxu0 %v3670
        %v3854 = vpop.f32.mrb[0].mxu0
        %v3855 = vadd.f32 %v3698, %v3854
        %v3856 = vpop.f32.mrb[0].mxu0
        %v3857 = vpop.f32.mrb[0].mxu0
        %v3858 = vadd.f32 %v3698, %v3857
        %v3859 = vpop.f32.mrb[0].mxu0
        %3860 = vmatprep.mubr.bf16.mxu0 0
        %3861 = vmatmul.mubr.bf16.gmra.mrb[0].mxu0 %v3671
        %v3862 = vpop.f32.mrb[0].mxu0
        %v3863 = vadd.f32 %v3698, %v3862
        %v3864 = vpop.f32.mrb[0].mxu0
        %v3865 = vpop.f32.mrb[0].mxu0
        %v3866 = vadd.f32 %v3698, %v3865
        %v3867 = vpop.f32.mrb[0].mxu0
        %3868 = vmatprep.mubr.bf16.mxu0 0
        %3869 = vmatmul.mubr.bf16.gmra.mrb[0].mxu0 %v3672
        %v3870 = vpop.f32.mrb[0].mxu0
        %v3871 = vadd.f32 %v3698, %v3870
        %v3872 = vpop.f32.mrb[0].mxu0
        %v3873 = vpop.f32.mrb[0].mxu0
        %v3874 = vadd.f32 %v3698, %v3873
        %v3875 = vpop.f32.mrb[0].mxu0
        %3876 = vmatprep.mubr.bf16.mxu0 0
        %3877 = vmatmul.mubr.bf16.gmra.mrb[0].mxu0 %v3673
        %v3878 = vpop.f32.mrb[0].mxu0
        %v3879 = vadd.f32 %v3698, %v3878
        %v3880 = vpop.f32.mrb[0].mxu0
        %v3881 = vpop.f32.mrb[0].mxu0
        %v3882 = vadd.f32 %v3698, %v3881
        %v3883 = vpop.f32.mrb[0].mxu0
        %3884 = vmatprep.mubr.bf16.mxu0 0
        %3885 = vmatmul.mubr.bf16.gmra.mrb[0].mxu0 %v3674
        %v3886 = vpop.f32.mrb[0].mxu0
        %v3887 = vadd.f32 %v3698, %v3886
        %v3888 = vpop.f32.mrb[0].mxu0
        %v3889 = vpop.f32.mrb[0].mxu0
        %v3890 = vadd.f32 %v3698, %v3889
        %v3891 = vpop.f32.mrb[0].mxu0
        %3892 = vmatprep.mubr.bf16.mxu0 0
        %3893 = vmatmul.mubr.bf16.gmra.mrb[0].mxu0 %v3675
        %v3894 = vpop.f32.mrb[0].mxu0
        %v3895 = vadd.f32 %v3698, %v3894
        %v3896 = vpop.f32.mrb[0].mxu0
        %v3897 = vpop.f32.mrb[0].mxu0
        %v3898 = vadd.f32 %v3698, %v3897
        %v3899 = vpop.f32.mrb[0].mxu0
        %3900 = vmatprep.mubr.bf16.mxu0 0
        %3901 = vmatmul.mubr.bf16.gmra.mrb[0].mxu0 %v3676
        %v3902 = vpop.f32.mrb[0].mxu0
        %v3903 = vadd.f32 %v3698, %v3902
        %v3904 = vpop.f32.mrb[0].mxu0
        %v3905 = vpop.f32.mrb[0].mxu0
        %v3906 = vadd.f32 %v3698, %v3905
        %v3907 = vpop.f32.mrb[0].mxu0
        %3908 = vdwg.mxu0
        %v3909 = vld [vmem:[#allocation10] sm:$0xf]
        %v3910 = vld [vmem:[#allocation10 + $0x4] sm:$0xf]
        %v3911 = vld [vmem:[#allocation10 + $0x8] sm:$0xf]
        %v3912 = vld [vmem:[#allocation10 + $0xc] sm:$0xf]
        %v3913 = vld [vmem:[#allocation10 + $0x10] sm:$0xf]
        %v3914 = vld [vmem:[#allocation10 + $0x14] sm:$0xf]
        %v3915 = vld [vmem:[#allocation10 + $0x18] sm:$0xf]
        %v3916 = vld [vmem:[#allocation10 + $0x1c] sm:$0xf]
        %v3917 = vld [vmem:[#allocation10 + $0x20] sm:$0xf]
        %v3918 = vld [vmem:[#allocation10 + $0x24] sm:$0xf]
        %v3919 = vld [vmem:[#allocation10 + $0x28] sm:$0xf]
        %v3920 = vld [vmem:[#allocation10 + $0x2c] sm:$0xf]
        %v3921 = vld [vmem:[#allocation10 + $0x30] sm:$0xf]
        %v3922 = vld [vmem:[#allocation10 + $0x34] sm:$0xf]
        %v3923 = vld [vmem:[#allocation10 + $0x38] sm:$0xf]
        %v3924 = vld [vmem:[#allocation10 + $0x3c] sm:$0xf]
        %v3925 = vld [vmem:[%s8] sm:$0x1]
        %v3927 = vlaneseq
        %v3928 = vshrl.u32 %v3927, 7
        %v3929 = vsub.s32 0, %v3928
        %v3930 = vrot.slane %v3925, %v3929
        %v3948 = vunpack.c.l.b16 %v3909
        %v3949 = vunpack.c.l.b16 %v3910
        %v3950 = vunpack.c.l.b16 %v3911
        %v3951 = vunpack.c.l.b16 %v3912
        %v3952 = vunpack.c.l.b16 %v3913
        %v3953 = vunpack.c.l.b16 %v3914
        %v3954 = vunpack.c.l.b16 %v3915
        %v3955 = vunpack.c.l.b16 %v3916
        %v3956 = vunpack.c.l.b16 %v3917
        %v3957 = vunpack.c.l.b16 %v3918
        %v3958 = vunpack.c.l.b16 %v3919
        %v3959 = vunpack.c.l.b16 %v3920
        %v3960 = vunpack.c.l.b16 %v3921
        %v3961 = vunpack.c.l.b16 %v3922
        %v3962 = vunpack.c.l.b16 %v3923
        %v3963 = vunpack.c.l.b16 %v3924
        %v3964 = vpack.c.b16 %v3949, %v3948
        %v3965 = vpack.c.b16 %v3951, %v3950
        %v3966 = vpack.c.b16 %v3953, %v3952
        %v3967 = vpack.c.b16 %v3955, %v3954
        %v3968 = vpack.c.b16 %v3957, %v3956
        %v3969 = vpack.c.b16 %v3959, %v3958
        %v3970 = vpack.c.b16 %v3961, %v3960
        %v3971 = vpack.c.b16 %v3963, %v3962
        %3980 = vmatprep.subr.bf16.mxu0 0
        %3981 = vmatpush1.bf16.msra.mxu0 %v3964
        %3982 = vmatprep.subr.bf16.mxu0 0
        %3983 = vmatpush1.bf16.msra.mxu0 %v3965
        %3984 = vmatprep.subr.bf16.mxu0 0
        %3985 = vmatpush1.bf16.msra.mxu0 %v3966
        %3986 = vmatprep.subr.bf16.mxu0 0
        %3987 = vmatpush1.bf16.msra.mxu0 %v3967
        %3988 = vmatprep.subr.bf16.mxu0 0
        %3989 = vmatpush1.bf16.msra.mxu0 %v3968
        %3990 = vmatprep.subr.bf16.mxu0 0
        %3991 = vmatpush1.bf16.msra.mxu0 %v3969
        %3992 = vmatprep.subr.bf16.mxu0 0
        %3993 = vmatpush1.bf16.msra.mxu0 %v3970
        %3994 = vmatprep.subr.bf16.mxu0 0
        %3995 = vmatpush1.bf16.msra.mxu0 %v3971
        %3996 = vmatprep.subr.bf16.mxu0 0
        %3997 = vmatpush1.bf16.msra.mxu0 0
        %3998 = vmatprep.subr.bf16.mxu0 0
        %3999 = vmatpush1.bf16.msra.mxu0 0
        %4000 = vmatprep.subr.bf16.mxu0 0
        %4001 = vmatpush1.bf16.msra.mxu0 0
        %4002 = vmatprep.subr.bf16.mxu0 0
        %4003 = vmatpush1.bf16.msra.mxu0 0
        %4004 = vmatprep.subr.bf16.mxu0 0
        %4005 = vmatpush1.bf16.msra.mxu0 0
        %4006 = vmatprep.subr.bf16.mxu0 0
        %4007 = vmatpush1.bf16.msra.mxu0 0
        %4008 = vmatprep.subr.bf16.mxu0 0
        %4009 = vmatpush1.bf16.msra.mxu0 0
        %4010 = vmatprep.subr.bf16.mxu0 0
        %4011 = vmatpush1.bf16.msra.mxu0 0
        %4012 = vmatprep.mubr.bf16.mxu0 0
        %4013 = vmatmul.mubr.bf16.gmra.mrb[0].mxu0 %v529
        %v4014 = vpop.f32.mrb[0].mxu0
        %v4015 = vadd.f32 %v3930, %v4014
        %v4016 = vpop.f32.mrb[0].mxu0
        %v4017 = vpop.f32.mrb[0].mxu0
        %v4018 = vadd.f32 %v3930, %v4017
        %v4019 = vpop.f32.mrb[0].mxu0
        %4020 = vmatprep.mubr.bf16.mxu0 0
        %4021 = vmatmul.mubr.bf16.gmra.mrb[0].mxu0 %v530
        %v4022 = vpop.f32.mrb[0].mxu0
        %v4023 = vadd.f32 %v3930, %v4022
        %v4024 = vpop.f32.mrb[0].mxu0
        %v4025 = vpop.f32.mrb[0].mxu0
        %v4026 = vadd.f32 %v3930, %v4025
        %v4027 = vpop.f32.mrb[0].mxu0
        %4028 = vmatprep.mubr.bf16.mxu0 0
        %4029 = vmatmul.mubr.bf16.gmra.mrb[0].mxu0 %v531
        %v4030 = vpop.f32.mrb[0].mxu0
        %v4031 = vadd.f32 %v3930, %v4030
        %v4032 = vpop.f32.mrb[0].mxu0
        %v4033 = vpop.f32.mrb[0].mxu0
        %v4034 = vadd.f32 %v3930, %v4033
        %v4035 = vpop.f32.mrb[0].mxu0
        %4036 = vmatprep.mubr.bf16.mxu0 0
        %4037 = vmatmul.mubr.bf16.gmra.mrb[0].mxu0 %v532
        %v4038 = vpop.f32.mrb[0].mxu0
        %v4039 = vadd.f32 %v3930, %v4038
        %v4040 = vpop.f32.mrb[0].mxu0
        %v4041 = vpop.f32.mrb[0].mxu0
        %v4042 = vadd.f32 %v3930, %v4041
        %v4043 = vpop.f32.mrb[0].mxu0
        %4044 = vmatprep.mubr.bf16.mxu0 0
        %4045 = vmatmul.mubr.bf16.gmra.mrb[0].mxu0 %v533
        %v4046 = vpop.f32.mrb[0].mxu0
        %v4047 = vadd.f32 %v3930, %v4046
        %v4048 = vpop.f32.mrb[0].mxu0
        %v4049 = vpop.f32.mrb[0].mxu0
        %v4050 = vadd.f32 %v3930, %v4049
        %v4051 = vpop.f32.mrb[0].mxu0
        %4052 = vmatprep.mubr.bf16.mxu0 0
        %4053 = vmatmul.mubr.bf16.gmra.mrb[0].mxu0 %v534
        %v4054 = vpop.f32.mrb[0].mxu0
        %v4055 = vadd.f32 %v3930, %v4054
        %v4056 = vpop.f32.mrb[0].mxu0
        %v4057 = vpop.f32.mrb[0].mxu0
        %v4058 = vadd.f32 %v3930, %v4057
        %v4059 = vpop.f32.mrb[0].mxu0
        %4060 = vmatprep.mubr.bf16.mxu0 0
        %4061 = vmatmul.mubr.bf16.gmra.mrb[0].mxu0 %v535
        %v4062 = vpop.f32.mrb[0].mxu0
        %v4063 = vadd.f32 %v3930, %v4062
        %v4064 = vpop.f32.mrb[0].mxu0
        %v4065 = vpop.f32.mrb[0].mxu0
        %v4066 = vadd.f32 %v3930, %v4065
        %v4067 = vpop.f32.mrb[0].mxu0
        %4068 = vmatprep.mubr.bf16.mxu0 0
        %4069 = vmatmul.mubr.bf16.gmra.mrb[0].mxu0 %v536
        %v4070 = vpop.f32.mrb[0].mxu0
        %v4071 = vadd.f32 %v3930, %v4070
        %v4072 = vpop.f32.mrb[0].mxu0
        %v4073 = vpop.f32.mrb[0].mxu0
        %v4074 = vadd.f32 %v3930, %v4073
        %v4075 = vpop.f32.mrb[0].mxu0
        %4076 = vmatprep.mubr.bf16.mxu0 0
        %4077 = vmatmul.mubr.bf16.gmra.mrb[0].mxu0 %v537
        %v4078 = vpop.f32.mrb[0].mxu0
        %v4079 = vadd.f32 %v3930, %v4078
        %v4080 = vpop.f32.mrb[0].mxu0
        %v4081 = vpop.f32.mrb[0].mxu0
        %v4082 = vadd.f32 %v3930, %v4081
        %v4083 = vpop.f32.mrb[0].mxu0
        %4084 = vmatprep.mubr.bf16.mxu0 0
        %4085 = vmatmul.mubr.bf16.gmra.mrb[0].mxu0 %v538
        %v4086 = vpop.f32.mrb[0].mxu0
        %v4087 = vadd.f32 %v3930, %v4086
        %v4088 = vpop.f32.mrb[0].mxu0
        %v4089 = vpop.f32.mrb[0].mxu0
        %v4090 = vadd.f32 %v3930, %v4089
        %v4091 = vpop.f32.mrb[0].mxu0
        %4092 = vmatprep.mubr.bf16.mxu0 0
        %4093 = vmatmul.mubr.bf16.gmra.mrb[0].mxu0 %v539
        %v4094 = vpop.f32.mrb[0].mxu0
        %v4095 = vadd.f32 %v3930, %v4094
        %v4096 = vpop.f32.mrb[0].mxu0
        %v4097 = vpop.f32.mrb[0].mxu0
        %v4098 = vadd.f32 %v3930, %v4097
        %v4099 = vpop.f32.mrb[0].mxu0
        %4100 = vmatprep.mubr.bf16.mxu0 0
        %4101 = vmatmul.mubr.bf16.gmra.mrb[0].mxu0 %v540
        %v4102 = vpop.f32.mrb[0].mxu0
        %v4103 = vadd.f32 %v3930, %v4102
        %v4104 = vpop.f32.mrb[0].mxu0
        %v4105 = vpop.f32.mrb[0].mxu0
        %v4106 = vadd.f32 %v3930, %v4105
        %v4107 = vpop.f32.mrb[0].mxu0
        %4108 = vmatprep.mubr.bf16.mxu0 0
        %4109 = vmatmul.mubr.bf16.gmra.mrb[0].mxu0 %v541
        %v4110 = vpop.f32.mrb[0].mxu0
        %v4111 = vadd.f32 %v3930, %v4110
        %v4112 = vpop.f32.mrb[0].mxu0
        %v4113 = vpop.f32.mrb[0].mxu0
        %v4114 = vadd.f32 %v3930, %v4113
        %v4115 = vpop.f32.mrb[0].mxu0
        %4116 = vmatprep.mubr.bf16.mxu0 0
        %4117 = vmatmul.mubr.bf16.gmra.mrb[0].mxu0 %v542
        %v4118 = vpop.f32.mrb[0].mxu0
        %v4119 = vadd.f32 %v3930, %v4118
        %v4120 = vpop.f32.mrb[0].mxu0
        %v4121 = vpop.f32.mrb[0].mxu0
        %v4122 = vadd.f32 %v3930, %v4121
        %v4123 = vpop.f32.mrb[0].mxu0
        %4124 = vmatprep.mubr.bf16.mxu0 0
        %4125 = vmatmul.mubr.bf16.gmra.mrb[0].mxu0 %v543
        %v4126 = vpop.f32.mrb[0].mxu0
        %v4127 = vadd.f32 %v3930, %v4126
        %v4128 = vpop.f32.mrb[0].mxu0
        %v4129 = vpop.f32.mrb[0].mxu0
        %v4130 = vadd.f32 %v3930, %v4129
        %v4131 = vpop.f32.mrb[0].mxu0
        %4132 = vmatprep.mubr.bf16.mxu0 0
        %4133 = vmatmul.mubr.bf16.gmra.mrb[0].mxu0 %v544
        %v4134 = vpop.f32.mrb[0].mxu0
        %v4135 = vadd.f32 %v3930, %v4134
        %v4136 = vpop.f32.mrb[0].mxu0
        %v4137 = vpop.f32.mrb[0].mxu0
        %v4138 = vadd.f32 %v3930, %v4137
        %v4139 = vpop.f32.mrb[0].mxu0
        %4140 = vdwg.mxu0
        %v4141 = vadd.f32 %v3783, %v4015
        %v4142 = vadd.f32 %v3786, %v4018
        %v4143 = vadd.f32 %v3791, %v4023
        %v4144 = vadd.f32 %v3794, %v4026
        %v4145 = vadd.f32 %v3799, %v4031
        %v4146 = vadd.f32 %v3802, %v4034
        %v4147 = vadd.f32 %v3807, %v4039
        %v4148 = vadd.f32 %v3810, %v4042
        %v4149 = vadd.f32 %v3815, %v4047
        %v4150 = vadd.f32 %v3818, %v4050
        %v4151 = vadd.f32 %v3823, %v4055
        %v4152 = vadd.f32 %v3826, %v4058
        %v4153 = vadd.f32 %v3831, %v4063
        %v4154 = vadd.f32 %v3834, %v4066
        %v4155 = vadd.f32 %v3839, %v4071
        %v4156 = vadd.f32 %v3842, %v4074
        %v4157 = vadd.f32 %v3847, %v4079
        %v4158 = vadd.f32 %v3850, %v4082
        %v4159 = vadd.f32 %v3855, %v4087
        %v4160 = vadd.f32 %v3858, %v4090
        %v4161 = vadd.f32 %v3863, %v4095
        %v4162 = vadd.f32 %v3866, %v4098
        %v4163 = vadd.f32 %v3871, %v4103
        %v4164 = vadd.f32 %v3874, %v4106
        %v4165 = vadd.f32 %v3879, %v4111
        %v4166 = vadd.f32 %v3882, %v4114
        %v4167 = vadd.f32 %v3887, %v4119
        %v4168 = vadd.f32 %v3890, %v4122
        %v4169 = vadd.f32 %v3895, %v4127
        %v4170 = vadd.f32 %v3898, %v4130
        %v4171 = vadd.f32 %v3903, %v4135
        %v4172 = vadd.f32 %v3906, %v4138
        %v4173 = vmax.f32 %v4141, 0.0
        %v4174 = vmax.f32 %v4142, 0.0
        %v4175 = vmax.f32 %v4143, 0.0
        %v4176 = vmax.f32 %v4144, 0.0
        %v4177 = vmax.f32 %v4145, 0.0
        %v4178 = vmax.f32 %v4146, 0.0
        %v4179 = vmax.f32 %v4147, 0.0
        %v4180 = vmax.f32 %v4148, 0.0
        %v4181 = vmax.f32 %v4149, 0.0
        %v4182 = vmax.f32 %v4150, 0.0
        %v4183 = vmax.f32 %v4151, 0.0
        %v4184 = vmax.f32 %v4152, 0.0
        %v4185 = vmax.f32 %v4153, 0.0
        %v4186 = vmax.f32 %v4154, 0.0
        %v4187 = vmax.f32 %v4155, 0.0
        %v4188 = vmax.f32 %v4156, 0.0
        %v4189 = vmax.f32 %v4157, 0.0
        %v4190 = vmax.f32 %v4158, 0.0
        %v4191 = vmax.f32 %v4159, 0.0
        %v4192 = vmax.f32 %v4160, 0.0
        %v4193 = vmax.f32 %v4161, 0.0
        %v4194 = vmax.f32 %v4162, 0.0
        %v4195 = vmax.f32 %v4163, 0.0
        %v4196 = vmax.f32 %v4164, 0.0
        %v4197 = vmax.f32 %v4165, 0.0
        %v4198 = vmax.f32 %v4166, 0.0
        %v4199 = vmax.f32 %v4167, 0.0
        %v4200 = vmax.f32 %v4168, 0.0
        %v4201 = vmax.f32 %v4169, 0.0
        %v4202 = vmax.f32 %v4170, 0.0
        %v4203 = vmax.f32 %v4171, 0.0
        %v4204 = vmax.f32 %v4172, 0.0
        %4205 = vst [vmem:[%s408] sm:$0xff] %v4173
        %4206 = vst [vmem:[%s408 + $0x8] sm:$0xff] %v4174
        %4207 = vst [vmem:[%s408 + $0x10] sm:$0xff] %v4175
        %4208 = vst [vmem:[%s408 + $0x18] sm:$0xff] %v4176
        %4209 = vst [vmem:[%s408 + $0x20] sm:$0xff] %v4177
        %4210 = vst [vmem:[%s408 + $0x28] sm:$0xff] %v4178
        %4211 = vst [vmem:[%s408 + $0x30] sm:$0xff] %v4179
        %4212 = vst [vmem:[%s408 + $0x38] sm:$0xff] %v4180
        %4213 = vst [vmem:[%s408 + $0x40] sm:$0xff] %v4181
        %4214 = vst [vmem:[%s408 + $0x48] sm:$0xff] %v4182
        %4215 = vst [vmem:[%s408 + $0x50] sm:$0xff] %v4183
        %4216 = vst [vmem:[%s408 + $0x58] sm:$0xff] %v4184
        %4217 = vst [vmem:[%s408 + $0x60] sm:$0xff] %v4185
        %4218 = vst [vmem:[%s408 + $0x68] sm:$0xff] %v4186
        %4219 = vst [vmem:[%s408 + $0x70] sm:$0xff] %v4187
        %4220 = vst [vmem:[%s408 + $0x78] sm:$0xff] %v4188
        %4221 = vst [vmem:[%s408 + $0x80] sm:$0xff] %v4189
        %4222 = vst [vmem:[%s408 + $0x88] sm:$0xff] %v4190
        %4223 = vst [vmem:[%s408 + $0x90] sm:$0xff] %v4191
        %4224 = vst [vmem:[%s408 + $0x98] sm:$0xff] %v4192
        %4225 = vst [vmem:[%s408 + $0xa0] sm:$0xff] %v4193
        %4226 = vst [vmem:[%s408 + $0xa8] sm:$0xff] %v4194
        %4227 = vst [vmem:[%s408 + $0xb0] sm:$0xff] %v4195
        %4228 = vst [vmem:[%s408 + $0xb8] sm:$0xff] %v4196
        %4229 = vst [vmem:[%s408 + $0xc0] sm:$0xff] %v4197
        %4230 = vst [vmem:[%s408 + $0xc8] sm:$0xff] %v4198
        %4231 = vst [vmem:[%s408 + $0xd0] sm:$0xff] %v4199
        %4232 = vst [vmem:[%s408 + $0xd8] sm:$0xff] %v4200
        %4233 = vst [vmem:[%s408 + $0xe0] sm:$0xff] %v4201
        %4234 = vst [vmem:[%s408 + $0xe8] sm:$0xff] %v4202
        %4235 = vst [vmem:[%s408 + $0xf0] sm:$0xff] %v4203
        %4236 = vst [vmem:[%s408 + $0xf8] sm:$0xff] %v4204
        %s4237 = sand.u32 %s230, 1
        %s4238 = scalar_lea.sflag [#allocation4], %s4237
        %s4239 = sand.u32 %s230, 1
        %s4240 = smul.addr %s4239, 256
        %s4241 = scalar_lea.vmem [#allocation11], %s4240
        // Predicated region
        $region77: #{tpu_custom_call.1} parent=55 // pred_check
          %p4242 = pneg %p240
        $region78: #{tpu_custom_call.1} parent=55 // pred_check_branch
          %4244 = sbr.rel (%p4242) target = $region80
        $region79: #{tpu_custom_call.1} parent=55 // pred_region
          %s4246 = ssub.s32 4096, 4096
          %4247 = vsyncadd %s4238, %s4246
          %s4248 = smul.addr %s28, 32
          %s4249 = smul.addr %s4248, 128
          %s4250 = scalar_lea.hbm %s9, %s4249
          %s4251 = sshll.u32 %s4241, 4
          %s4252 = int_to_ptr.vmem [resolvable:$true] %s4251
          %4257 = dma.vmem_to_hbm [thread:$0]  %s4252, 4096, %s4250, %s4238, 128, 128, 8
        $region80: #{tpu_custom_call.1} parent=55 // pred_fallthru
          _
      $region56: #{tpu_custom_call.1} parent=5 // pred_fallthru
        _
      %p4258 = scmp.le.s32.totalorder 2, %s23
      // Predicated region
      $region81: #{tpu_custom_call.1} parent=5 // pred_check
        %p4259 = pneg %p4258
      $region82: #{tpu_custom_call.1} parent=5 // pred_check_branch
        %4261 = sbr.rel (%p4259) target = $region84
      $region83: #{tpu_custom_call.1} parent=5 // pred_region
        %s4262 = ssub.s32 %s23, 2
        // Predicated region
        $region85: #{tpu_custom_call.1} parent=83 // pred_check
          %p4263 = pneg %p246
        $region86: #{tpu_custom_call.1} parent=83 // pred_check_branch
          %4265 = sbr.rel (%p4263) target = $region88
        $region87: #{tpu_custom_call.1} parent=83 // pred_region
          %s4266 = sand.u32 %s231, 1
          %s4267 = scalar_lea.sflag [#allocation4], %s4266
          %s4268 = sand.u32 %s231, 1
          %s4269 = smul.addr %s4268, 256
          %s4270 = scalar_lea.vmem [#allocation11], %s4269
          %4271 = dma.done %s4267, 4096
        $region88: #{tpu_custom_call.1} parent=83 // pred_fallthru
          _
      $region84: #{tpu_custom_call.1} parent=5 // pred_fallthru
        _
    $region6: #{tpu_custom_call.1} parent=1 // loop_footer
      %s27 = sadd.s32 1, %s23
    $region7: #{tpu_custom_call.1} parent=1 // loop_footer_branch
      %22 = sbr.rel target = $region3
    $region8: #{tpu_custom_call.1} parent=1 // loop_exit
      _
    %4272 = vsyncpa [#allocation3], 1
    %s4273 = scalar_lea.sflag [#allocation3], 1
    %4274 = vsyncpa %s4273, 1
    %4275 = vsyncpa [#allocation6], 1
    %4276 = vsyncpa [#allocation9], 1
    %4277 = vsyncpa [#allocation4], 1
    %s4278 = scalar_lea.sflag [#allocation4], 1
    %4279 = vsyncpa %s4278, 1

</llo_original>
